<compile_context>
chip_gen: v5e
topology: v5e:2x2
jax: 0.10.0
libtpu: 0.0.40
codegen_flags: <defaults>
</compile_context>

<pallas_src>
import functools
import math

import jax
import jax.numpy as jnp
from jax.experimental import pallas as pl
from jax.experimental.pallas import tpu as pltpu


# --------------------------------------------------------------------------
# Packed-parameter layout (static offsets shared by the packer and the kernel)
# --------------------------------------------------------------------------
# Per-layer small-matrix slab (D, 5*128) f32 — one 128-lane segment per matrix
# (segment starts are 128-aligned so in-kernel ref slices start on a lane tile).
_SEG_SA_WQKV = 0      # (D, 3D)  self-attn in-proj (Q columns pre-scaled)
_SEG_SA_WO = 128      # (D, D)   self-attn out-proj
_SEG_CA_WQ = 256      # (D, D)   cross-attn Q proj (pre-scaled; zeros in encoder)
_SEG_CA_WKV = 384     # (D, 2D)  cross-attn K|V proj (zeros in encoder)
_SEG_CA_WO = 512      # (D, D)   cross-attn out-proj (zeros in encoder)
_WSLAB_LANES = 640

# Per-layer vector slab (16, 128) f32 — one row per bias / LayerNorm vector.
_ROW_SA_BQKV = 0
_ROW_SA_BO = 1
_ROW_LN1_G, _ROW_LN1_B = 2, 3
_ROW_CA_BQ = 4
_ROW_CA_BKV = 5
_ROW_CA_BO = 6
_ROW_LN2_G, _ROW_LN2_B = 7, 8
_ROW_FF_B2 = 9
_ROW_LN3_G, _ROW_LN3_B = 10, 11
_VSLAB_ROWS = 16

# Constant vector slab (8, 128) f32 (fetched once; index_map is constant).
_CROW_EMB_B = 0
_CROW_ENC_G, _CROW_ENC_B = 1, 2
_CROW_DEC_G, _CROW_DEC_B = 3, 4
_CROW_FC_B = 5
_CSLAB_ROWS = 8


# --------------------------------------------------------------------------
# In-kernel helpers (traced inside the Pallas kernel)
# --------------------------------------------------------------------------

def _layer_norm(x, g, b, eps):
    """PyTorch LayerNorm over the last axis (biased variance)."""
    mean = jnp.mean(x, axis=-1, keepdims=True)
    var = jnp.mean((x - mean) ** 2, axis=-1, keepdims=True)
    return (x - mean) * jax.lax.rsqrt(var + eps) * g + b


def _attention(q, k, v, num_heads):
    """All-heads scaled-dot-product attention on 2-D (seq, D) operands.

    The 1/sqrt(head_dim) scale is folded into the Q projection at pack time.
    """
    d = q.shape[-1]
    dh = d // num_heads
    outs = []
    for h in range(num_heads):          # static unroll; all data stays in vregs
        lo = h * dh
        qh = q[:, lo:lo + dh]
        kh = k[:, lo:lo + dh]
        vh = v[:, lo:lo + dh]
        s = jax.lax.dot_general(qh, kh, (((1,), (1,)), ((), ())),
                                preferred_element_type=jnp.float32)
        s = s - jnp.max(s, axis=-1, keepdims=True)
        p = jnp.exp(s)
        p = p * pl.reciprocal(jnp.sum(p, axis=-1, keepdims=True), approx=True)
        outs.append(jnp.dot(p, vh, preferred_element_type=jnp.float32))
    return jnp.concatenate(outs, axis=-1)


# --------------------------------------------------------------------------
# The single fused forward kernel (grid over encoder + decoder layers)
# --------------------------------------------------------------------------

def _fused_forward_kernel(src_ref, emb_w_ref, cvec_ref, fc_w_ref,
                          wm_ref, vec_ref, b1_ref, w1_ref, w2_ref,
                          out_ref,
                          emb_sc, acc_sc, mem_sc,
                          *, num_heads, nl_enc, eps):
    l = pl.program_id(0)
    d = emb_w_ref.shape[-1]
    cvec = cvec_ref[...]                # (8, 128) packed constants (1 vreg)

    # ---- grid step 0: embedding Linear; seed activation / memory scratch ----
    @pl.when(l == 0)
    def _():
        x0 = (jnp.dot(src_ref[...], emb_w_ref[...],
                      preferred_element_type=jnp.float32)
              + cvec[_CROW_EMB_B:_CROW_EMB_B + 1, :d])
        emb_sc[...] = x0                # decoder target (kept across encoder)
        acc_sc[...] = x0                # running activation
        mem_sc[...] = jnp.zeros_like(mem_sc)

    # ---- first decoder layer: running activation restarts from embedding ----
    @pl.when(l == nl_enc)
    def _():
        acc_sc[...] = emb_sc[...]

    x = acc_sc[...]
    vec = vec_ref[0]                    # (16, 128) packed per-layer vectors

    def vrow(r, width):
        return vec[r:r + 1, :width]

    # ---- self-attention (encoder & decoder layers) ----
    qkv = (jnp.dot(x, wm_ref[0, :, _SEG_SA_WQKV:_SEG_SA_WQKV + 3 * d],
                   preferred_element_type=jnp.float32)
           + vrow(_ROW_SA_BQKV, 3 * d))
    ctx = _attention(qkv[:, :d], qkv[:, d:2 * d], qkv[:, 2 * d:3 * d], num_heads)
    sa = (jnp.dot(ctx, wm_ref[0, :, _SEG_SA_WO:_SEG_SA_WO + d],
                  preferred_element_type=jnp.float32)
          + vrow(_ROW_SA_BO, d))
    x = _layer_norm(x + sa, vrow(_ROW_LN1_G, d), vrow(_ROW_LN1_B, d), eps)
    acc_sc[...] = x

    # ---- cross-attention over the encoder memory (decoder layers only) ----
    @pl.when(l >= nl_enc)
    def _():
        mem = mem_sc[...]
        q = (jnp.dot(x, wm_ref[0, :, _SEG_CA_WQ:_SEG_CA_WQ + d],
                     preferred_element_type=jnp.float32)
             + vrow(_ROW_CA_BQ, d))
        kv = (jnp.dot(mem, wm_ref[0, :, _SEG_CA_WKV:_SEG_CA_WKV + 2 * d],
                      preferred_element_type=jnp.float32)
              + vrow(_ROW_CA_BKV, 2 * d))
        cctx = _attention(q, kv[:, :d], kv[:, d:2 * d], num_heads)
        ca = (jnp.dot(cctx, wm_ref[0, :, _SEG_CA_WO:_SEG_CA_WO + d],
                      preferred_element_type=jnp.float32)
              + vrow(_ROW_CA_BO, d))
        acc_sc[...] = _layer_norm(x + ca, vrow(_ROW_LN2_G, d),
                                  vrow(_ROW_LN2_B, d), eps)

    x = acc_sc[...]

    # ---- feed-forward (ReLU); bf16 weight stream, f32 accumulation ----
    h = (jnp.dot(x.astype(w1_ref.dtype), w1_ref[0],
                 preferred_element_type=jnp.float32) + b1_ref[0])
    h = jnp.maximum(h, 0.0)
    ff = (jnp.dot(h.astype(w2_ref.dtype), w2_ref[0],
                  preferred_element_type=jnp.float32) + vrow(_ROW_FF_B2, d))
    x = _layer_norm(x + ff, vrow(_ROW_LN3_G, d), vrow(_ROW_LN3_B, d), eps)
    acc_sc[...] = x

    # ---- last encoder layer: final encoder LayerNorm -> memory scratch ----
    @pl.when(l == nl_enc - 1)
    def _():
        mem_sc[...] = _layer_norm(x, cvec[_CROW_ENC_G:_CROW_ENC_G + 1, :d],
                                  cvec[_CROW_ENC_B:_CROW_ENC_B + 1, :d], eps)

    # ---- last decoder layer: final norm, mean(dim=0) identity, fc_out ----
    @pl.when(l == pl.num_programs(0) - 1)
    def _():
        ncls = out_ref.shape[-1]
        y = _layer_norm(x, cvec[_CROW_DEC_G:_CROW_DEC_G + 1, :d],
                        cvec[_CROW_DEC_B:_CROW_DEC_B + 1, :d], eps)
        out_ref[...] = (jnp.dot(y, fc_w_ref[...],
                                preferred_element_type=jnp.float32)
                        + cvec[_CROW_FC_B:_CROW_FC_B + 1, :ncls]
                        ).astype(out_ref.dtype)


# --------------------------------------------------------------------------
# Wrapper: one pallas_call for the whole forward pass
# --------------------------------------------------------------------------

def keystroke_transformer_forward(src, packed, *, num_heads, nl_enc, nl_dec,
                                  eps=1e-5):
    b, input_dim = src.shape
    d = packed["emb_w"].shape[-1]
    dff = packed["w1"].shape[-1]
    ncls = packed["fc_w"].shape[-1]
    nl = nl_enc + nl_dec

    def const(shape):
        return pl.BlockSpec(shape, lambda l: (0, 0))

    def stacked(shape):
        return pl.BlockSpec((1,) + shape, lambda l: (l, 0, 0))

    kernel = functools.partial(_fused_forward_kernel,
                               num_heads=num_heads, nl_enc=nl_enc, eps=eps)
    return pl.pallas_call(
        kernel,
        out_shape=jax.ShapeDtypeStruct((b, ncls), jnp.float32),
        grid=(nl,),
        in_specs=[
            const((b, input_dim)),            # src (fetched once)
            const((input_dim, d)),            # embedding weight (fetched once)
            const((_CSLAB_ROWS, 128)),        # packed constant vectors
            const((d, ncls)),                 # fc_out weight
            stacked((d, _WSLAB_LANES)),       # per-layer packed small matrices
            stacked((_VSLAB_ROWS, 128)),      # per-layer packed biases / LN vecs
            stacked((1, dff)),                # per-layer FFN bias1
            stacked((d, dff)),                # per-layer FFN w1 (bf16)
            stacked((dff, d)),                # per-layer FFN w2 (bf16)
        ],
        out_specs=const((b, ncls)),
        scratch_shapes=[pltpu.VMEM((b, d), jnp.float32),   # embedding (tgt)
                        pltpu.VMEM((b, d), jnp.float32),   # running activation
                        pltpu.VMEM((b, d), jnp.float32)],  # encoder memory
        compiler_params=pltpu.CompilerParams(
            dimension_semantics=("arbitrary",)),
    )(src, packed["emb_w"], packed["cvec"], packed["fc_w"],
      packed["wm"], packed["vec"], packed["b1"], packed["w1"], packed["w2"])


# --------------------------------------------------------------------------
# Deterministic synthetic parameters, packed into the slab layout above.
# (Real PyTorch weights would be packed the same way: Linear weights transposed
#  to (in, out), attention scale folded into the Q projection.)
# --------------------------------------------------------------------------

def init_packed_params(key, *, input_dim, model_dim, dff, num_classes,
                       num_heads, num_encoder_layers, num_decoder_layers):
    d, f = model_dim, dff
    dh = d // num_heads
    scale = 1.0 / math.sqrt(dh)
    state = [key]

    def nxt():
        state[0], sub = jax.random.split(state[0])
        return sub

    def mat(shape, s=0.02):
        return (s * jax.random.normal(nxt(), shape)).astype(jnp.float32)

    nl_enc, nl_dec = num_encoder_layers, num_decoder_layers
    nl = nl_enc + nl_dec

    wm_l, vec_l, b1_l, w1_l, w2_l = [], [], [], [], []
    for layer in range(nl):
        is_dec = layer >= nl_enc

        sa_wqkv = mat((d, 3 * d))
        sa_bqkv = mat((3 * d,))
        # Fold the 1/sqrt(head_dim) attention scale into the Q projection.
        sa_wqkv = sa_wqkv.at[:, :d].multiply(scale)
        sa_bqkv = sa_bqkv.at[:d].multiply(scale)
        sa_wo, sa_bo = mat((d, d)), mat((d,))
        ln1_g, ln1_b = jnp.ones((d,), jnp.float32), jnp.zeros((d,), jnp.float32)
        w1, b1 = mat((d, f)), mat((f,))
        w2, b2 = mat((f, d)), mat((d,))
        ln3_g, ln3_b = jnp.ones((d,), jnp.float32), jnp.zeros((d,), jnp.float32)

        wm = jnp.zeros((d, _WSLAB_LANES), jnp.float32)
        wm = wm.at[:, _SEG_SA_WQKV:_SEG_SA_WQKV + 3 * d].set(sa_wqkv)
        wm = wm.at[:, _SEG_SA_WO:_SEG_SA_WO + d].set(sa_wo)

        v = jnp.zeros((_VSLAB_ROWS, 128), jnp.float32)
        v = v.at[_ROW_SA_BQKV, :3 * d].set(sa_bqkv)
        v = v.at[_ROW_SA_BO, :d].set(sa_bo)
        v = v.at[_ROW_LN1_G, :d].set(ln1_g)
        v = v.at[_ROW_LN1_B, :d].set(ln1_b)
        v = v.at[_ROW_FF_B2, :d].set(b2)
        v = v.at[_ROW_LN3_G, :d].set(ln3_g)
        v = v.at[_ROW_LN3_B, :d].set(ln3_b)

        if is_dec:
            c_wq, c_bq = mat((d, d)) * scale, mat((d,)) * scale
            c_wkv, c_bkv = mat((d, 2 * d)), mat((2 * d,))
            c_wo, c_bo = mat((d, d)), mat((d,))
            ln2_g = jnp.ones((d,), jnp.float32)
            ln2_b = jnp.zeros((d,), jnp.float32)
            wm = wm.at[:, _SEG_CA_WQ:_SEG_CA_WQ + d].set(c_wq)
            wm = wm.at[:, _SEG_CA_WKV:_SEG_CA_WKV + 2 * d].set(c_wkv)
            wm = wm.at[:, _SEG_CA_WO:_SEG_CA_WO + d].set(c_wo)
            v = v.at[_ROW_CA_BQ, :d].set(c_bq)
            v = v.at[_ROW_CA_BKV, :2 * d].set(c_bkv)
            v = v.at[_ROW_CA_BO, :d].set(c_bo)
            v = v.at[_ROW_LN2_G, :d].set(ln2_g)
            v = v.at[_ROW_LN2_B, :d].set(ln2_b)
        # Encoder layers: cross-attn segments / rows stay zero (never used).

        wm_l.append(wm)
        vec_l.append(v)
        b1_l.append(b1.reshape(1, f))
        w1_l.append(w1.astype(jnp.bfloat16))
        w2_l.append(w2.astype(jnp.bfloat16))

    emb_w, emb_b = mat((input_dim, d)), mat((d,))
    fc_w, fc_b = mat((d, num_classes)), mat((num_classes,))

    cvec = jnp.zeros((_CSLAB_ROWS, 128), jnp.float32)
    cvec = cvec.at[_CROW_EMB_B, :d].set(emb_b)
    cvec = cvec.at[_CROW_ENC_G, :d].set(jnp.ones((d,), jnp.float32))
    cvec = cvec.at[_CROW_DEC_G, :d].set(jnp.ones((d,), jnp.float32))
    cvec = cvec.at[_CROW_FC_B, :num_classes].set(fc_b)
    # ENC_B / DEC_B rows stay zero (LayerNorm beta init).

    return dict(emb_w=emb_w, cvec=cvec, fc_w=fc_w,
                wm=jnp.stack(wm_l), vec=jnp.stack(vec_l),
                b1=jnp.stack(b1_l), w1=jnp.stack(w1_l), w2=jnp.stack(w2_l))


# --------------------------------------------------------------------------

if __name__ == "__main__":
    INPUT_DIM = 16
    MODEL_DIM = 32
    NUM_HEADS = 4
    NUM_ENCODER_LAYERS = 2     # `num_layers` in the PyTorch module
    NUM_DECODER_LAYERS = 6     # nn.Transformer default
    DIM_FEEDFORWARD = 2048     # nn.Transformer default
    NUM_CLASSES = 5
    BATCH = 8

    key = jax.random.PRNGKey(0)
    pkey, xkey = jax.random.split(key)
    packed = init_packed_params(
        pkey, input_dim=INPUT_DIM, model_dim=MODEL_DIM, dff=DIM_FEEDFORWARD,
        num_classes=NUM_CLASSES, num_heads=NUM_HEADS,
        num_encoder_layers=NUM_ENCODER_LAYERS,
        num_decoder_layers=NUM_DECODER_LAYERS)
    src = jax.random.normal(xkey, (BATCH, INPUT_DIM), dtype=jnp.float32)

    fwd = jax.jit(functools.partial(
        keystroke_transformer_forward, num_heads=NUM_HEADS,
        nl_enc=NUM_ENCODER_LAYERS, nl_dec=NUM_DECODER_LAYERS))
    out = jax.block_until_ready(fwd(src, packed))
    assert out.shape == (BATCH, NUM_CLASSES), out.shape
    assert bool(jnp.all(jnp.isfinite(out)))
    print("KERNEL_OK")
</pallas_src>

<mosaic_0001>
module attributes {stable_mosaic.version = 11 : i64} {
  func.func @_fused_forward_kernel(%arg0: i32, %arg1: memref<8x16xf32, #tpu.memory_space<vmem>>, %arg2: memref<16x32xf32, #tpu.memory_space<vmem>>, %arg3: memref<8x128xf32, #tpu.memory_space<vmem>>, %arg4: memref<32x5xf32, #tpu.memory_space<vmem>>, %arg5: memref<1x32x640xf32, #tpu.memory_space<vmem>>, %arg6: memref<1x16x128xf32, #tpu.memory_space<vmem>>, %arg7: memref<1x1x2048xf32, #tpu.memory_space<vmem>>, %arg8: memref<1x32x2048xbf16, #tpu.memory_space<vmem>>, %arg9: memref<1x2048x32xbf16, #tpu.memory_space<vmem>>, %arg10: memref<8x5xf32, #tpu.memory_space<vmem>>, %arg11: memref<8x32xf32, #tpu.memory_space<vmem>>, %arg12: memref<8x32xf32, #tpu.memory_space<vmem>>, %arg13: memref<8x32xf32, #tpu.memory_space<vmem>>) attributes {dimension_semantics = [#tpu.dimension_semantics<arbitrary>], iteration_bounds = array<i64: 8>, scalar_prefetch = 0 : i64, scratch_operands = 3 : i64, tpu.core_type = #tpu.core_type<tc>, window_params = [{pipeline_mode = #tpu.pipeline_mode<synchronous>, transform_indices = @transform_0, window_bounds = array<i64: 8, 16>}, {pipeline_mode = #tpu.pipeline_mode<synchronous>, transform_indices = @transform_1, window_bounds = array<i64: 16, 32>}, {pipeline_mode = #tpu.pipeline_mode<synchronous>, transform_indices = @transform_2, window_bounds = array<i64: 8, 128>}, {pipeline_mode = #tpu.pipeline_mode<synchronous>, transform_indices = @transform_3, window_bounds = array<i64: 32, 5>}, {transform_indices = @transform_4, window_bounds = array<i64: 1, 32, 640>}, {transform_indices = @transform_5, window_bounds = array<i64: 1, 16, 128>}, {transform_indices = @transform_6, window_bounds = array<i64: 1, 1, 2048>}, {transform_indices = @transform_7, window_bounds = array<i64: 1, 32, 2048>}, {transform_indices = @transform_8, window_bounds = array<i64: 1, 2048, 32>}, {pipeline_mode = #tpu.pipeline_mode<synchronous>, transform_indices = @transform_9, window_bounds = array<i64: 8, 5>}]} {
    %c0 = arith.constant 0 : index
    %c0_0 = arith.constant 0 : index
    %0 = vector.load %arg3[%c0, %c0_0] : memref<8x128xf32, #tpu.memory_space<vmem>>, vector<8x128xf32>
    %c0_i32 = arith.constant 0 : i32
    %1 = arith.cmpi eq, %arg0, %c0_i32 : i32
    %2 = arith.extui %1 : i1 to i32
    %c0_i32_1 = arith.constant 0 : i32
    %3 = arith.cmpi ne, %2, %c0_i32_1 : i32
    scf.if %3 {
      %c0_62 = arith.constant 0 : index
      %c0_63 = arith.constant 0 : index
      %165 = vector.load %arg1[%c0_62, %c0_63] : memref<8x16xf32, #tpu.memory_space<vmem>>, vector<8x16xf32>
      %c0_64 = arith.constant 0 : index
      %c0_65 = arith.constant 0 : index
      %166 = vector.load %arg2[%c0_64, %c0_65] : memref<16x32xf32, #tpu.memory_space<vmem>>, vector<16x32xf32>
      %cst_66 = arith.constant dense<0.000000e+00> : vector<8x32xf32>
      %167 = tpu.matmul %165, %166, %cst_66 {dimension_numbers = #tpu.dot_dimension_numbers<[1], [0], [0], [1], [0, 0, 1, 1], [], []>} : vector<8x16xf32>, vector<16x32xf32>, vector<8x32xf32> -> vector<8x32xf32>
      %168 = vector.extract_strided_slice %0 {offsets = [0, 0], sizes = [1, 32], strides = [1, 1]} : vector<8x128xf32> to vector<1x32xf32>
      %169 = vector.broadcast %168 : vector<1x32xf32> to vector<8x32xf32>
      %170 = arith.addf %167, %169 : vector<8x32xf32>
      %c0_67 = arith.constant 0 : index
      %c0_68 = arith.constant 0 : index
      %171 = vector.load %arg11[%c0_67, %c0_68] : memref<8x32xf32, #tpu.memory_space<vmem>>, vector<8x32xf32>
      tpu.vector_store %arg11[%c0_67, %c0_68], %170 {strides = array<i32>} : memref<8x32xf32, #tpu.memory_space<vmem>>, vector<8x32xf32>,
      %c0_69 = arith.constant 0 : index
      %c0_70 = arith.constant 0 : index
      %172 = vector.load %arg12[%c0_69, %c0_70] : memref<8x32xf32, #tpu.memory_space<vmem>>, vector<8x32xf32>
      tpu.vector_store %arg12[%c0_69, %c0_70], %170 {strides = array<i32>} : memref<8x32xf32, #tpu.memory_space<vmem>>, vector<8x32xf32>,
      %cst_71 = arith.constant 0.000000e+00 : f32
      %173 = vector.broadcast %cst_71 : f32 to vector<8x32xf32>
      %c0_72 = arith.constant 0 : index
      %c0_73 = arith.constant 0 : index
      %174 = vector.load %arg13[%c0_72, %c0_73] : memref<8x32xf32, #tpu.memory_space<vmem>>, vector<8x32xf32>
      tpu.vector_store %arg13[%c0_72, %c0_73], %173 {strides = array<i32>} : memref<8x32xf32, #tpu.memory_space<vmem>>, vector<8x32xf32>,
    } else {
    }
    %c2_i32 = arith.constant 2 : i32
    %4 = arith.cmpi eq, %arg0, %c2_i32 : i32
    %5 = arith.extui %4 : i1 to i32
    %c0_i32_2 = arith.constant 0 : i32
    %6 = arith.cmpi ne, %5, %c0_i32_2 : i32
    scf.if %6 {
      %c0_62 = arith.constant 0 : index
      %c0_63 = arith.constant 0 : index
      %165 = vector.load %arg11[%c0_62, %c0_63] : memref<8x32xf32, #tpu.memory_space<vmem>>, vector<8x32xf32>
      %c0_64 = arith.constant 0 : index
      %c0_65 = arith.constant 0 : index
      %166 = vector.load %arg12[%c0_64, %c0_65] : memref<8x32xf32, #tpu.memory_space<vmem>>, vector<8x32xf32>
      tpu.vector_store %arg12[%c0_64, %c0_65], %165 {strides = array<i32>} : memref<8x32xf32, #tpu.memory_space<vmem>>, vector<8x32xf32>,
    } else {
    }
    %c0_3 = arith.constant 0 : index
    %c0_4 = arith.constant 0 : index
    %7 = vector.load %arg12[%c0_3, %c0_4] : memref<8x32xf32, #tpu.memory_space<vmem>>, vector<8x32xf32>
    %c0_5 = arith.constant 0 : index
    %c0_6 = arith.constant 0 : index
    %c0_7 = arith.constant 0 : index
    %8 = vector.load %arg6[%c0_5, %c0_6, %c0_7] : memref<1x16x128xf32, #tpu.memory_space<vmem>>, vector<1x16x128xf32>
    %9 = vector.shape_cast %8 : vector<1x16x128xf32> to vector<16x128xf32>
    %c0_8 = arith.constant 0 : index
    %c0_9 = arith.constant 0 : index
    %c0_10 = arith.constant 0 : index
    %10 = vector.load %arg5[%c0_8, %c0_9, %c0_10] : memref<1x32x640xf32, #tpu.memory_space<vmem>>, vector<1x32x96xf32>
    %11 = vector.shape_cast %10 : vector<1x32x96xf32> to vector<32x96xf32>
    %cst = arith.constant dense<0.000000e+00> : vector<8x96xf32>
    %12 = tpu.matmul %7, %11, %cst {dimension_numbers = #tpu.dot_dimension_numbers<[1], [0], [0], [1], [0, 0, 1, 1], [], []>} : vector<8x32xf32>, vector<32x96xf32>, vector<8x96xf32> -> vector<8x96xf32>
    %13 = vector.extract_strided_slice %9 {offsets = [0, 0], sizes = [1, 96], strides = [1, 1]} : vector<16x128xf32> to vector<1x96xf32>
    %14 = vector.broadcast %13 : vector<1x96xf32> to vector<8x96xf32>
    %15 = arith.addf %12, %14 : vector<8x96xf32>
    %16 = vector.extract_strided_slice %15 {offsets = [0, 0], sizes = [8, 32], strides = [1, 1]} : vector<8x96xf32> to vector<8x32xf32>
    %17 = vector.extract_strided_slice %15 {offsets = [0, 32], sizes = [8, 32], strides = [1, 1]} : vector<8x96xf32> to vector<8x32xf32>
    %18 = vector.extract_strided_slice %15 {offsets = [0, 64], sizes = [8, 32], strides = [1, 1]} : vector<8x96xf32> to vector<8x32xf32>
    %19 = vector.extract_strided_slice %16 {offsets = [0, 0], sizes = [8, 8], strides = [1, 1]} : vector<8x32xf32> to vector<8x8xf32>
    %20 = vector.extract_strided_slice %17 {offsets = [0, 0], sizes = [8, 8], strides = [1, 1]} : vector<8x32xf32> to vector<8x8xf32>
    %21 = vector.extract_strided_slice %18 {offsets = [0, 0], sizes = [8, 8], strides = [1, 1]} : vector<8x32xf32> to vector<8x8xf32>
    %cst_11 = arith.constant dense<0.000000e+00> : vector<8x8xf32>
    %22 = tpu.matmul %19, %20, %cst_11 {dimension_numbers = #tpu.dot_dimension_numbers<[1], [1], [0], [0], [0, 0, 1, 0], [], []>} : vector<8x8xf32>, vector<8x8xf32>, vector<8x8xf32> -> vector<8x8xf32>
    %cst_12 = arith.constant dense<0xFF800000> : vector<8xf32>
    %23 = vector.multi_reduction <maximumf>, %22, %cst_12 [1] : vector<8x8xf32> to vector<8xf32>
    %24 = vector.shape_cast %23 : vector<8xf32> to vector<8x1xf32>
    %25 = vector.broadcast %24 : vector<8x1xf32> to vector<8x8xf32>
    %26 = arith.subf %22, %25 : vector<8x8xf32>
    %27 = math.exp %26 : vector<8x8xf32>
    %cst_13 = arith.constant dense<0.000000e+00> : vector<8xf32>
    %28 = vector.multi_reduction <add>, %27, %cst_13 [1] : vector<8x8xf32> to vector<8xf32>
    %29 = vector.shape_cast %28 : vector<8xf32> to vector<8x1xf32>
    %30 = tpu.reciprocal %29 {approx = true} : vector<8x1xf32> -> vector<8x1xf32>
    %31 = vector.broadcast %30 : vector<8x1xf32> to vector<8x8xf32>
    %32 = arith.mulf %27, %31 : vector<8x8xf32>
    %cst_14 = arith.constant dense<0.000000e+00> : vector<8x8xf32>
    %33 = tpu.matmul %32, %21, %cst_14 {dimension_numbers = #tpu.dot_dimension_numbers<[1], [0], [0], [1], [0, 0, 1, 1], [], []>} : vector<8x8xf32>, vector<8x8xf32>, vector<8x8xf32> -> vector<8x8xf32>
    %34 = vector.extract_strided_slice %16 {offsets = [0, 8], sizes = [8, 8], strides = [1, 1]} : vector<8x32xf32> to vector<8x8xf32>
    %35 = vector.extract_strided_slice %17 {offsets = [0, 8], sizes = [8, 8], strides = [1, 1]} : vector<8x32xf32> to vector<8x8xf32>
    %36 = vector.extract_strided_slice %18 {offsets = [0, 8], sizes = [8, 8], strides = [1, 1]} : vector<8x32xf32> to vector<8x8xf32>
    %cst_15 = arith.constant dense<0.000000e+00> : vector<8x8xf32>
    %37 = tpu.matmul %34, %35, %cst_15 {dimension_numbers = #tpu.dot_dimension_numbers<[1], [1], [0], [0], [0, 0, 1, 0], [], []>} : vector<8x8xf32>, vector<8x8xf32>, vector<8x8xf32> -> vector<8x8xf32>
    %cst_16 = arith.constant dense<0xFF800000> : vector<8xf32>
    %38 = vector.multi_reduction <maximumf>, %37, %cst_16 [1] : vector<8x8xf32> to vector<8xf32>
    %39 = vector.shape_cast %38 : vector<8xf32> to vector<8x1xf32>
    %40 = vector.broadcast %39 : vector<8x1xf32> to vector<8x8xf32>
    %41 = arith.subf %37, %40 : vector<8x8xf32>
    %42 = math.exp %41 : vector<8x8xf32>
    %cst_17 = arith.constant dense<0.000000e+00> : vector<8xf32>
    %43 = vector.multi_reduction <add>, %42, %cst_17 [1] : vector<8x8xf32> to vector<8xf32>
    %44 = vector.shape_cast %43 : vector<8xf32> to vector<8x1xf32>
    %45 = tpu.reciprocal %44 {approx = true} : vector<8x1xf32> -> vector<8x1xf32>
    %46 = vector.broadcast %45 : vector<8x1xf32> to vector<8x8xf32>
    %47 = arith.mulf %42, %46 : vector<8x8xf32>
    %cst_18 = arith.constant dense<0.000000e+00> : vector<8x8xf32>
    %48 = tpu.matmul %47, %36, %cst_18 {dimension_numbers = #tpu.dot_dimension_numbers<[1], [0], [0], [1], [0, 0, 1, 1], [], []>} : vector<8x8xf32>, vector<8x8xf32>, vector<8x8xf32> -> vector<8x8xf32>
    %49 = vector.extract_strided_slice %16 {offsets = [0, 16], sizes = [8, 8], strides = [1, 1]} : vector<8x32xf32> to vector<8x8xf32>
    %50 = vector.extract_strided_slice %17 {offsets = [0, 16], sizes = [8, 8], strides = [1, 1]} : vector<8x32xf32> to vector<8x8xf32>
    %51 = vector.extract_strided_slice %18 {offsets = [0, 16], sizes = [8, 8], strides = [1, 1]} : vector<8x32xf32> to vector<8x8xf32>
    %cst_19 = arith.constant dense<0.000000e+00> : vector<8x8xf32>
    %52 = tpu.matmul %49, %50, %cst_19 {dimension_numbers = #tpu.dot_dimension_numbers<[1], [1], [0], [0], [0, 0, 1, 0], [], []>} : vector<8x8xf32>, vector<8x8xf32>, vector<8x8xf32> -> vector<8x8xf32>
    %cst_20 = arith.constant dense<0xFF800000> : vector<8xf32>
    %53 = vector.multi_reduction <maximumf>, %52, %cst_20 [1] : vector<8x8xf32> to vector<8xf32>
    %54 = vector.shape_cast %53 : vector<8xf32> to vector<8x1xf32>
    %55 = vector.broadcast %54 : vector<8x1xf32> to vector<8x8xf32>
    %56 = arith.subf %52, %55 : vector<8x8xf32>
    %57 = math.exp %56 : vector<8x8xf32>
    %cst_21 = arith.constant dense<0.000000e+00> : vector<8xf32>
    %58 = vector.multi_reduction <add>, %57, %cst_21 [1] : vector<8x8xf32> to vector<8xf32>
    %59 = vector.shape_cast %58 : vector<8xf32> to vector<8x1xf32>
    %60 = tpu.reciprocal %59 {approx = true} : vector<8x1xf32> -> vector<8x1xf32>
    %61 = vector.broadcast %60 : vector<8x1xf32> to vector<8x8xf32>
    %62 = arith.mulf %57, %61 : vector<8x8xf32>
    %cst_22 = arith.constant dense<0.000000e+00> : vector<8x8xf32>
    %63 = tpu.matmul %62, %51, %cst_22 {dimension_numbers = #tpu.dot_dimension_numbers<[1], [0], [0], [1], [0, 0, 1, 1], [], []>} : vector<8x8xf32>, vector<8x8xf32>, vector<8x8xf32> -> vector<8x8xf32>
    %64 = vector.extract_strided_slice %16 {offsets = [0, 24], sizes = [8, 8], strides = [1, 1]} : vector<8x32xf32> to vector<8x8xf32>
    %65 = vector.extract_strided_slice %17 {offsets = [0, 24], sizes = [8, 8], strides = [1, 1]} : vector<8x32xf32> to vector<8x8xf32>
    %66 = vector.extract_strided_slice %18 {offsets = [0, 24], sizes = [8, 8], strides = [1, 1]} : vector<8x32xf32> to vector<8x8xf32>
    %cst_23 = arith.constant dense<0.000000e+00> : vector<8x8xf32>
    %67 = tpu.matmul %64, %65, %cst_23 {dimension_numbers = #tpu.dot_dimension_numbers<[1], [1], [0], [0], [0, 0, 1, 0], [], []>} : vector<8x8xf32>, vector<8x8xf32>, vector<8x8xf32> -> vector<8x8xf32>
    %cst_24 = arith.constant dense<0xFF800000> : vector<8xf32>
    %68 = vector.multi_reduction <maximumf>, %67, %cst_24 [1] : vector<8x8xf32> to vector<8xf32>
    %69 = vector.shape_cast %68 : vector<8xf32> to vector<8x1xf32>
    %70 = vector.broadcast %69 : vector<8x1xf32> to vector<8x8xf32>
    %71 = arith.subf %67, %70 : vector<8x8xf32>
    %72 = math.exp %71 : vector<8x8xf32>
    %cst_25 = arith.constant dense<0.000000e+00> : vector<8xf32>
    %73 = vector.multi_reduction <add>, %72, %cst_25 [1] : vector<8x8xf32> to vector<8xf32>
    %74 = vector.shape_cast %73 : vector<8xf32> to vector<8x1xf32>
    %75 = tpu.reciprocal %74 {approx = true} : vector<8x1xf32> -> vector<8x1xf32>
    %76 = vector.broadcast %75 : vector<8x1xf32> to vector<8x8xf32>
    %77 = arith.mulf %72, %76 : vector<8x8xf32>
    %cst_26 = arith.constant dense<0.000000e+00> : vector<8x8xf32>
    %78 = tpu.matmul %77, %66, %cst_26 {dimension_numbers = #tpu.dot_dimension_numbers<[1], [0], [0], [1], [0, 0, 1, 1], [], []>} : vector<8x8xf32>, vector<8x8xf32>, vector<8x8xf32> -> vector<8x8xf32>
    %79 = tpu.concatenate %33, %48, %63, %78 in 1 : vector<8x8xf32>, vector<8x8xf32>, vector<8x8xf32>, vector<8x8xf32> -> vector<8x32xf32>
    %c0_27 = arith.constant 0 : index
    %c0_28 = arith.constant 0 : index
    %c128 = arith.constant 128 : index
    %80 = vector.load %arg5[%c0_27, %c0_28, %c128] : memref<1x32x640xf32, #tpu.memory_space<vmem>>, vector<1x32x32xf32>
    %81 = vector.shape_cast %80 : vector<1x32x32xf32> to vector<32x32xf32>
    %cst_29 = arith.constant dense<0.000000e+00> : vector<8x32xf32>
    %82 = tpu.matmul %79, %81, %cst_29 {dimension_numbers = #tpu.dot_dimension_numbers<[1], [0], [0], [1], [0, 0, 1, 1], [], []>} : vector<8x32xf32>, vector<32x32xf32>, vector<8x32xf32> -> vector<8x32xf32>
    %83 = vector.extract_strided_slice %9 {offsets = [1, 0], sizes = [1, 32], strides = [1, 1]} : vector<16x128xf32> to vector<1x32xf32>
    %84 = vector.broadcast %83 : vector<1x32xf32> to vector<8x32xf32>
    %85 = arith.addf %82, %84 : vector<8x32xf32>
    %86 = arith.addf %7, %85 : vector<8x32xf32>
    %87 = vector.extract_strided_slice %9 {offsets = [2, 0], sizes = [1, 32], strides = [1, 1]} : vector<16x128xf32> to vector<1x32xf32>
    %88 = vector.extract_strided_slice %9 {offsets = [3, 0], sizes = [1, 32], strides = [1, 1]} : vector<16x128xf32> to vector<1x32xf32>
    %cst_30 = arith.constant dense<0.000000e+00> : vector<8xf32>
    %89 = vector.multi_reduction <add>, %86, %cst_30 [1] : vector<8x32xf32> to vector<8xf32>
    %90 = vector.shape_cast %89 : vector<8xf32> to vector<8x1xf32>
    %cst_31 = arith.constant 3.200000e+01 : f32
    %91 = vector.broadcast %cst_31 : f32 to vector<8x1xf32>
    %92 = arith.divf %90, %91 : vector<8x1xf32>
    %93 = vector.broadcast %92 : vector<8x1xf32> to vector<8x32xf32>
    %94 = arith.subf %86, %93 : vector<8x32xf32>
    %95 = arith.mulf %94, %94 : vector<8x32xf32>
    %cst_32 = arith.constant dense<0.000000e+00> : vector<8xf32>
    %96 = vector.multi_reduction <add>, %95, %cst_32 [1] : vector<8x32xf32> to vector<8xf32>
    %97 = vector.shape_cast %96 : vector<8xf32> to vector<8x1xf32>
    %cst_33 = arith.constant 3.200000e+01 : f32
    %98 = vector.broadcast %cst_33 : f32 to vector<8x1xf32>
    %99 = arith.divf %97, %98 : vector<8x1xf32>
    %100 = vector.broadcast %92 : vector<8x1xf32> to vector<8x32xf32>
    %101 = arith.subf %86, %100 : vector<8x32xf32>
    %cst_34 = arith.constant 9.99999974E-6 : f32
    %102 = vector.broadcast %cst_34 : f32 to vector<8x1xf32>
    %103 = arith.addf %99, %102 : vector<8x1xf32>
    %104 = math.rsqrt %103 : vector<8x1xf32>
    %105 = vector.broadcast %104 : vector<8x1xf32> to vector<8x32xf32>
    %106 = arith.mulf %101, %105 : vector<8x32xf32>
    %107 = vector.broadcast %87 : vector<1x32xf32> to vector<8x32xf32>
    %108 = arith.mulf %106, %107 : vector<8x32xf32>
    %109 = vector.broadcast %88 : vector<1x32xf32> to vector<8x32xf32>
    %110 = arith.addf %108, %109 : vector<8x32xf32>
    %c0_35 = arith.constant 0 : index
    %c0_36 = arith.constant 0 : index
    %111 = vector.load %arg12[%c0_35, %c0_36] : memref<8x32xf32, #tpu.memory_space<vmem>>, vector<8x32xf32>
    tpu.vector_store %arg12[%c0_35, %c0_36], %110 {strides = array<i32>} : memref<8x32xf32, #tpu.memory_space<vmem>>, vector<8x32xf32>,
    %c2_i32_37 = arith.constant 2 : i32
    %112 = arith.cmpi sge, %arg0, %c2_i32_37 : i32
    %113 = arith.extui %112 : i1 to i32
    %c0_i32_38 = arith.constant 0 : i32
    %114 = arith.cmpi ne, %113, %c0_i32_38 : i32
    scf.if %114 {
      %c0_62 = arith.constant 0 : index
      %c0_63 = arith.constant 0 : index
      %165 = vector.load %arg13[%c0_62, %c0_63] : memref<8x32xf32, #tpu.memory_space<vmem>>, vector<8x32xf32>
      %c0_64 = arith.constant 0 : index
      %c0_65 = arith.constant 0 : index
      %c256 = arith.constant 256 : index
      %166 = vector.load %arg5[%c0_64, %c0_65, %c256] : memref<1x32x640xf32, #tpu.memory_space<vmem>>, vector<1x32x32xf32>
      %167 = vector.shape_cast %166 : vector<1x32x32xf32> to vector<32x32xf32>
      %cst_66 = arith.constant dense<0.000000e+00> : vector<8x32xf32>
      %168 = tpu.matmul %110, %167, %cst_66 {dimension_numbers = #tpu.dot_dimension_numbers<[1], [0], [0], [1], [0, 0, 1, 1], [], []>} : vector<8x32xf32>, vector<32x32xf32>, vector<8x32xf32> -> vector<8x32xf32>
      %169 = vector.extract_strided_slice %9 {offsets = [4, 0], sizes = [1, 32], strides = [1, 1]} : vector<16x128xf32> to vector<1x32xf32>
      %170 = vector.broadcast %169 : vector<1x32xf32> to vector<8x32xf32>
      %171 = arith.addf %168, %170 : vector<8x32xf32>
      %c0_67 = arith.constant 0 : index
      %c0_68 = arith.constant 0 : index
      %c384 = arith.constant 384 : index
      %172 = vector.load %arg5[%c0_67, %c0_68, %c384] : memref<1x32x640xf32, #tpu.memory_space<vmem>>, vector<1x32x64xf32>
      %173 = vector.shape_cast %172 : vector<1x32x64xf32> to vector<32x64xf32>
      %cst_69 = arith.constant dense<0.000000e+00> : vector<8x64xf32>
      %174 = tpu.matmul %165, %173, %cst_69 {dimension_numbers = #tpu.dot_dimension_numbers<[1], [0], [0], [1], [0, 0, 1, 1], [], []>} : vector<8x32xf32>, vector<32x64xf32>, vector<8x64xf32> -> vector<8x64xf32>
      %175 = vector.extract_strided_slice %9 {offsets = [5, 0], sizes = [1, 64], strides = [1, 1]} : vector<16x128xf32> to vector<1x64xf32>
      %176 = vector.broadcast %175 : vector<1x64xf32> to vector<8x64xf32>
      %177 = arith.addf %174, %176 : vector<8x64xf32>
      %178 = vector.extract_strided_slice %177 {offsets = [0, 0], sizes = [8, 32], strides = [1, 1]} : vector<8x64xf32> to vector<8x32xf32>
      %179 = vector.extract_strided_slice %177 {offsets = [0, 32], sizes = [8, 32], strides = [1, 1]} : vector<8x64xf32> to vector<8x32xf32>
      %180 = vector.extract_strided_slice %171 {offsets = [0, 0], sizes = [8, 8], strides = [1, 1]} : vector<8x32xf32> to vector<8x8xf32>
      %181 = vector.extract_strided_slice %178 {offsets = [0, 0], sizes = [8, 8], strides = [1, 1]} : vector<8x32xf32> to vector<8x8xf32>
      %182 = vector.extract_strided_slice %179 {offsets = [0, 0], sizes = [8, 8], strides = [1, 1]} : vector<8x32xf32> to vector<8x8xf32>
      %cst_70 = arith.constant dense<0.000000e+00> : vector<8x8xf32>
      %183 = tpu.matmul %180, %181, %cst_70 {dimension_numbers = #tpu.dot_dimension_numbers<[1], [1], [0], [0], [0, 0, 1, 0], [], []>} : vector<8x8xf32>, vector<8x8xf32>, vector<8x8xf32> -> vector<8x8xf32>
      %cst_71 = arith.constant dense<0xFF800000> : vector<8xf32>
      %184 = vector.multi_reduction <maximumf>, %183, %cst_71 [1] : vector<8x8xf32> to vector<8xf32>
      %185 = vector.shape_cast %184 : vector<8xf32> to vector<8x1xf32>
      %186 = vector.broadcast %185 : vector<8x1xf32> to vector<8x8xf32>
      %187 = arith.subf %183, %186 : vector<8x8xf32>
      %188 = math.exp %187 : vector<8x8xf32>
      %cst_72 = arith.constant dense<0.000000e+00> : vector<8xf32>
      %189 = vector.multi_reduction <add>, %188, %cst_72 [1] : vector<8x8xf32> to vector<8xf32>
      %190 = vector.shape_cast %189 : vector<8xf32> to vector<8x1xf32>
      %191 = tpu.reciprocal %190 {approx = true} : vector<8x1xf32> -> vector<8x1xf32>
      %192 = vector.broadcast %191 : vector<8x1xf32> to vector<8x8xf32>
      %193 = arith.mulf %188, %192 : vector<8x8xf32>
      %cst_73 = arith.constant dense<0.000000e+00> : vector<8x8xf32>
      %194 = tpu.matmul %193, %182, %cst_73 {dimension_numbers = #tpu.dot_dimension_numbers<[1], [0], [0], [1], [0, 0, 1, 1], [], []>} : vector<8x8xf32>, vector<8x8xf32>, vector<8x8xf32> -> vector<8x8xf32>
      %195 = vector.extract_strided_slice %171 {offsets = [0, 8], sizes = [8, 8], strides = [1, 1]} : vector<8x32xf32> to vector<8x8xf32>
      %196 = vector.extract_strided_slice %178 {offsets = [0, 8], sizes = [8, 8], strides = [1, 1]} : vector<8x32xf32> to vector<8x8xf32>
      %197 = vector.extract_strided_slice %179 {offsets = [0, 8], sizes = [8, 8], strides = [1, 1]} : vector<8x32xf32> to vector<8x8xf32>
      %cst_74 = arith.constant dense<0.000000e+00> : vector<8x8xf32>
      %198 = tpu.matmul %195, %196, %cst_74 {dimension_numbers = #tpu.dot_dimension_numbers<[1], [1], [0], [0], [0, 0, 1, 0], [], []>} : vector<8x8xf32>, vector<8x8xf32>, vector<8x8xf32> -> vector<8x8xf32>
      %cst_75 = arith.constant dense<0xFF800000> : vector<8xf32>
      %199 = vector.multi_reduction <maximumf>, %198, %cst_75 [1] : vector<8x8xf32> to vector<8xf32>
      %200 = vector.shape_cast %199 : vector<8xf32> to vector<8x1xf32>
      %201 = vector.broadcast %200 : vector<8x1xf32> to vector<8x8xf32>
      %202 = arith.subf %198, %201 : vector<8x8xf32>
      %203 = math.exp %202 : vector<8x8xf32>
      %cst_76 = arith.constant dense<0.000000e+00> : vector<8xf32>
      %204 = vector.multi_reduction <add>, %203, %cst_76 [1] : vector<8x8xf32> to vector<8xf32>
      %205 = vector.shape_cast %204 : vector<8xf32> to vector<8x1xf32>
      %206 = tpu.reciprocal %205 {approx = true} : vector<8x1xf32> -> vector<8x1xf32>
      %207 = vector.broadcast %206 : vector<8x1xf32> to vector<8x8xf32>
      %208 = arith.mulf %203, %207 : vector<8x8xf32>
      %cst_77 = arith.constant dense<0.000000e+00> : vector<8x8xf32>
      %209 = tpu.matmul %208, %197, %cst_77 {dimension_numbers = #tpu.dot_dimension_numbers<[1], [0], [0], [1], [0, 0, 1, 1], [], []>} : vector<8x8xf32>, vector<8x8xf32>, vector<8x8xf32> -> vector<8x8xf32>
      %210 = vector.extract_strided_slice %171 {offsets = [0, 16], sizes = [8, 8], strides = [1, 1]} : vector<8x32xf32> to vector<8x8xf32>
      %211 = vector.extract_strided_slice %178 {offsets = [0, 16], sizes = [8, 8], strides = [1, 1]} : vector<8x32xf32> to vector<8x8xf32>
      %212 = vector.extract_strided_slice %179 {offsets = [0, 16], sizes = [8, 8], strides = [1, 1]} : vector<8x32xf32> to vector<8x8xf32>
      %cst_78 = arith.constant dense<0.000000e+00> : vector<8x8xf32>
      %213 = tpu.matmul %210, %211, %cst_78 {dimension_numbers = #tpu.dot_dimension_numbers<[1], [1], [0], [0], [0, 0, 1, 0], [], []>} : vector<8x8xf32>, vector<8x8xf32>, vector<8x8xf32> -> vector<8x8xf32>
      %cst_79 = arith.constant dense<0xFF800000> : vector<8xf32>
      %214 = vector.multi_reduction <maximumf>, %213, %cst_79 [1] : vector<8x8xf32> to vector<8xf32>
      %215 = vector.shape_cast %214 : vector<8xf32> to vector<8x1xf32>
      %216 = vector.broadcast %215 : vector<8x1xf32> to vector<8x8xf32>
      %217 = arith.subf %213, %216 : vector<8x8xf32>
      %218 = math.exp %217 : vector<8x8xf32>
      %cst_80 = arith.constant dense<0.000000e+00> : vector<8xf32>
      %219 = vector.multi_reduction <add>, %218, %cst_80 [1] : vector<8x8xf32> to vector<8xf32>
      %220 = vector.shape_cast %219 : vector<8xf32> to vector<8x1xf32>
      %221 = tpu.reciprocal %220 {approx = true} : vector<8x1xf32> -> vector<8x1xf32>
      %222 = vector.broadcast %221 : vector<8x1xf32> to vector<8x8xf32>
      %223 = arith.mulf %218, %222 : vector<8x8xf32>
      %cst_81 = arith.constant dense<0.000000e+00> : vector<8x8xf32>
      %224 = tpu.matmul %223, %212, %cst_81 {dimension_numbers = #tpu.dot_dimension_numbers<[1], [0], [0], [1], [0, 0, 1, 1], [], []>} : vector<8x8xf32>, vector<8x8xf32>, vector<8x8xf32> -> vector<8x8xf32>
      %225 = vector.extract_strided_slice %171 {offsets = [0, 24], sizes = [8, 8], strides = [1, 1]} : vector<8x32xf32> to vector<8x8xf32>
      %226 = vector.extract_strided_slice %178 {offsets = [0, 24], sizes = [8, 8], strides = [1, 1]} : vector<8x32xf32> to vector<8x8xf32>
      %227 = vector.extract_strided_slice %179 {offsets = [0, 24], sizes = [8, 8], strides = [1, 1]} : vector<8x32xf32> to vector<8x8xf32>
      %cst_82 = arith.constant dense<0.000000e+00> : vector<8x8xf32>
      %228 = tpu.matmul %225, %226, %cst_82 {dimension_numbers = #tpu.dot_dimension_numbers<[1], [1], [0], [0], [0, 0, 1, 0], [], []>} : vector<8x8xf32>, vector<8x8xf32>, vector<8x8xf32> -> vector<8x8xf32>
      %cst_83 = arith.constant dense<0xFF800000> : vector<8xf32>
      %229 = vector.multi_reduction <maximumf>, %228, %cst_83 [1] : vector<8x8xf32> to vector<8xf32>
      %230 = vector.shape_cast %229 : vector<8xf32> to vector<8x1xf32>
      %231 = vector.broadcast %230 : vector<8x1xf32> to vector<8x8xf32>
      %232 = arith.subf %228, %231 : vector<8x8xf32>
      %233 = math.exp %232 : vector<8x8xf32>
      %cst_84 = arith.constant dense<0.000000e+00> : vector<8xf32>
      %234 = vector.multi_reduction <add>, %233, %cst_84 [1] : vector<8x8xf32> to vector<8xf32>
      %235 = vector.shape_cast %234 : vector<8xf32> to vector<8x1xf32>
      %236 = tpu.reciprocal %235 {approx = true} : vector<8x1xf32> -> vector<8x1xf32>
      %237 = vector.broadcast %236 : vector<8x1xf32> to vector<8x8xf32>
      %238 = arith.mulf %233, %237 : vector<8x8xf32>
      %cst_85 = arith.constant dense<0.000000e+00> : vector<8x8xf32>
      %239 = tpu.matmul %238, %227, %cst_85 {dimension_numbers = #tpu.dot_dimension_numbers<[1], [0], [0], [1], [0, 0, 1, 1], [], []>} : vector<8x8xf32>, vector<8x8xf32>, vector<8x8xf32> -> vector<8x8xf32>
      %240 = tpu.concatenate %194, %209, %224, %239 in 1 : vector<8x8xf32>, vector<8x8xf32>, vector<8x8xf32>, vector<8x8xf32> -> vector<8x32xf32>
      %c0_86 = arith.constant 0 : index
      %c0_87 = arith.constant 0 : index
      %c512 = arith.constant 512 : index
      %241 = vector.load %arg5[%c0_86, %c0_87, %c512] : memref<1x32x640xf32, #tpu.memory_space<vmem>>, vector<1x32x32xf32>
      %242 = vector.shape_cast %241 : vector<1x32x32xf32> to vector<32x32xf32>
      %cst_88 = arith.constant dense<0.000000e+00> : vector<8x32xf32>
      %243 = tpu.matmul %240, %242, %cst_88 {dimension_numbers = #tpu.dot_dimension_numbers<[1], [0], [0], [1], [0, 0, 1, 1], [], []>} : vector<8x32xf32>, vector<32x32xf32>, vector<8x32xf32> -> vector<8x32xf32>
      %244 = vector.extract_strided_slice %9 {offsets = [6, 0], sizes = [1, 32], strides = [1, 1]} : vector<16x128xf32> to vector<1x32xf32>
      %245 = vector.broadcast %244 : vector<1x32xf32> to vector<8x32xf32>
      %246 = arith.addf %243, %245 : vector<8x32xf32>
      %247 = arith.addf %110, %246 : vector<8x32xf32>
      %248 = vector.extract_strided_slice %9 {offsets = [7, 0], sizes = [1, 32], strides = [1, 1]} : vector<16x128xf32> to vector<1x32xf32>
      %249 = vector.extract_strided_slice %9 {offsets = [8, 0], sizes = [1, 32], strides = [1, 1]} : vector<16x128xf32> to vector<1x32xf32>
      %cst_89 = arith.constant dense<0.000000e+00> : vector<8xf32>
      %250 = vector.multi_reduction <add>, %247, %cst_89 [1] : vector<8x32xf32> to vector<8xf32>
      %251 = vector.shape_cast %250 : vector<8xf32> to vector<8x1xf32>
      %cst_90 = arith.constant 3.200000e+01 : f32
      %252 = vector.broadcast %cst_90 : f32 to vector<8x1xf32>
      %253 = arith.divf %251, %252 : vector<8x1xf32>
      %254 = vector.broadcast %253 : vector<8x1xf32> to vector<8x32xf32>
      %255 = arith.subf %247, %254 : vector<8x32xf32>
      %256 = arith.mulf %255, %255 : vector<8x32xf32>
      %cst_91 = arith.constant dense<0.000000e+00> : vector<8xf32>
      %257 = vector.multi_reduction <add>, %256, %cst_91 [1] : vector<8x32xf32> to vector<8xf32>
      %258 = vector.shape_cast %257 : vector<8xf32> to vector<8x1xf32>
      %cst_92 = arith.constant 3.200000e+01 : f32
      %259 = vector.broadcast %cst_92 : f32 to vector<8x1xf32>
      %260 = arith.divf %258, %259 : vector<8x1xf32>
      %261 = vector.broadcast %253 : vector<8x1xf32> to vector<8x32xf32>
      %262 = arith.subf %247, %261 : vector<8x32xf32>
      %cst_93 = arith.constant 9.99999974E-6 : f32
      %263 = vector.broadcast %cst_93 : f32 to vector<8x1xf32>
      %264 = arith.addf %260, %263 : vector<8x1xf32>
      %265 = math.rsqrt %264 : vector<8x1xf32>
      %266 = vector.broadcast %265 : vector<8x1xf32> to vector<8x32xf32>
      %267 = arith.mulf %262, %266 : vector<8x32xf32>
      %268 = vector.broadcast %248 : vector<1x32xf32> to vector<8x32xf32>
      %269 = arith.mulf %267, %268 : vector<8x32xf32>
      %270 = vector.broadcast %249 : vector<1x32xf32> to vector<8x32xf32>
      %271 = arith.addf %269, %270 : vector<8x32xf32>
      %c0_94 = arith.constant 0 : index
      %c0_95 = arith.constant 0 : index
      %272 = vector.load %arg12[%c0_94, %c0_95] : memref<8x32xf32, #tpu.memory_space<vmem>>, vector<8x32xf32>
      tpu.vector_store %arg12[%c0_94, %c0_95], %271 {strides = array<i32>} : memref<8x32xf32, #tpu.memory_space<vmem>>, vector<8x32xf32>,
    } else {
    }
    %c0_39 = arith.constant 0 : index
    %c0_40 = arith.constant 0 : index
    %115 = vector.load %arg12[%c0_39, %c0_40] : memref<8x32xf32, #tpu.memory_space<vmem>>, vector<8x32xf32>
    %116 = arith.truncf %115 : vector<8x32xf32> to vector<8x32xbf16>
    %c0_41 = arith.constant 0 : index
    %c0_42 = arith.constant 0 : index
    %c0_43 = arith.constant 0 : index
    %117 = vector.load %arg8[%c0_41, %c0_42, %c0_43] : memref<1x32x2048xbf16, #tpu.memory_space<vmem>>, vector<1x32x2048xbf16>
    %118 = vector.shape_cast %117 : vector<1x32x2048xbf16> to vector<32x2048xbf16>
    %cst_44 = arith.constant dense<0.000000e+00> : vector<8x2048xf32>
    %119 = tpu.matmul %116, %118, %cst_44 {dimension_numbers = #tpu.dot_dimension_numbers<[1], [0], [0], [1], [0, 0, 1, 1], [], []>} : vector<8x32xbf16>, vector<32x2048xbf16>, vector<8x2048xf32> -> vector<8x2048xf32>
    %c0_45 = arith.constant 0 : index
    %c0_46 = arith.constant 0 : index
    %c0_47 = arith.constant 0 : index
    %120 = vector.load %arg7[%c0_45, %c0_46, %c0_47] : memref<1x1x2048xf32, #tpu.memory_space<vmem>>, vector<1x1x2048xf32>
    %121 = vector.shape_cast %120 : vector<1x1x2048xf32> to vector<1x2048xf32>
    %122 = vector.broadcast %121 : vector<1x2048xf32> to vector<8x2048xf32>
    %123 = arith.addf %119, %122 : vector<8x2048xf32>
    %cst_48 = arith.constant 0.000000e+00 : f32
    %124 = vector.broadcast %cst_48 : f32 to vector<8x2048xf32>
    %125 = arith.maximumf %123, %124 : vector<8x2048xf32>
    %126 = arith.truncf %125 : vector<8x2048xf32> to vector<8x2048xbf16>
    %c0_49 = arith.constant 0 : index
    %c0_50 = arith.constant 0 : index
    %c0_51 = arith.constant 0 : index
    %127 = vector.load %arg9[%c0_49, %c0_50, %c0_51] : memref<1x2048x32xbf16, #tpu.memory_space<vmem>>, vector<1x2048x32xbf16>
    %128 = vector.shape_cast %127 : vector<1x2048x32xbf16> to vector<2048x32xbf16>
    %cst_52 = arith.constant dense<0.000000e+00> : vector<8x32xf32>
    %129 = tpu.matmul %126, %128, %cst_52 {dimension_numbers = #tpu.dot_dimension_numbers<[1], [0], [0], [1], [0, 0, 1, 1], [], []>} : vector<8x2048xbf16>, vector<2048x32xbf16>, vector<8x32xf32> -> vector<8x32xf32>
    %130 = vector.extract_strided_slice %9 {offsets = [9, 0], sizes = [1, 32], strides = [1, 1]} : vector<16x128xf32> to vector<1x32xf32>
    %131 = vector.broadcast %130 : vector<1x32xf32> to vector<8x32xf32>
    %132 = arith.addf %129, %131 : vector<8x32xf32>
    %133 = arith.addf %115, %132 : vector<8x32xf32>
    %134 = vector.extract_strided_slice %9 {offsets = [10, 0], sizes = [1, 32], strides = [1, 1]} : vector<16x128xf32> to vector<1x32xf32>
    %135 = vector.extract_strided_slice %9 {offsets = [11, 0], sizes = [1, 32], strides = [1, 1]} : vector<16x128xf32> to vector<1x32xf32>
    %cst_53 = arith.constant dense<0.000000e+00> : vector<8xf32>
    %136 = vector.multi_reduction <add>, %133, %cst_53 [1] : vector<8x32xf32> to vector<8xf32>
    %137 = vector.shape_cast %136 : vector<8xf32> to vector<8x1xf32>
    %cst_54 = arith.constant 3.200000e+01 : f32
    %138 = vector.broadcast %cst_54 : f32 to vector<8x1xf32>
    %139 = arith.divf %137, %138 : vector<8x1xf32>
    %140 = vector.broadcast %139 : vector<8x1xf32> to vector<8x32xf32>
    %141 = arith.subf %133, %140 : vector<8x32xf32>
    %142 = arith.mulf %141, %141 : vector<8x32xf32>
    %cst_55 = arith.constant dense<0.000000e+00> : vector<8xf32>
    %143 = vector.multi_reduction <add>, %142, %cst_55 [1] : vector<8x32xf32> to vector<8xf32>
    %144 = vector.shape_cast %143 : vector<8xf32> to vector<8x1xf32>
    %cst_56 = arith.constant 3.200000e+01 : f32
    %145 = vector.broadcast %cst_56 : f32 to vector<8x1xf32>
    %146 = arith.divf %144, %145 : vector<8x1xf32>
    %147 = vector.broadcast %139 : vector<8x1xf32> to vector<8x32xf32>
    %148 = arith.subf %133, %147 : vector<8x32xf32>
    %cst_57 = arith.constant 9.99999974E-6 : f32
    %149 = vector.broadcast %cst_57 : f32 to vector<8x1xf32>
    %150 = arith.addf %146, %149 : vector<8x1xf32>
    %151 = math.rsqrt %150 : vector<8x1xf32>
    %152 = vector.broadcast %151 : vector<8x1xf32> to vector<8x32xf32>
    %153 = arith.mulf %148, %152 : vector<8x32xf32>
    %154 = vector.broadcast %134 : vector<1x32xf32> to vector<8x32xf32>
    %155 = arith.mulf %153, %154 : vector<8x32xf32>
    %156 = vector.broadcast %135 : vector<1x32xf32> to vector<8x32xf32>
    %157 = arith.addf %155, %156 : vector<8x32xf32>
    %c0_58 = arith.constant 0 : index
    %c0_59 = arith.constant 0 : index
    %158 = vector.load %arg12[%c0_58, %c0_59] : memref<8x32xf32, #tpu.memory_space<vmem>>, vector<8x32xf32>
    tpu.vector_store %arg12[%c0_58, %c0_59], %157 {strides = array<i32>} : memref<8x32xf32, #tpu.memory_space<vmem>>, vector<8x32xf32>,
    %c1_i32 = arith.constant 1 : i32
    %159 = arith.cmpi eq, %arg0, %c1_i32 : i32
    %160 = arith.extui %159 : i1 to i32
    %c0_i32_60 = arith.constant 0 : i32
    %161 = arith.cmpi ne, %160, %c0_i32_60 : i32
    scf.if %161 {
      %165 = vector.extract_strided_slice %0 {offsets = [1, 0], sizes = [1, 32], strides = [1, 1]} : vector<8x128xf32> to vector<1x32xf32>
      %166 = vector.extract_strided_slice %0 {offsets = [2, 0], sizes = [1, 32], strides = [1, 1]} : vector<8x128xf32> to vector<1x32xf32>
      %cst_62 = arith.constant dense<0.000000e+00> : vector<8xf32>
      %167 = vector.multi_reduction <add>, %157, %cst_62 [1] : vector<8x32xf32> to vector<8xf32>
      %168 = vector.shape_cast %167 : vector<8xf32> to vector<8x1xf32>
      %cst_63 = arith.constant 3.200000e+01 : f32
      %169 = vector.broadcast %cst_63 : f32 to vector<8x1xf32>
      %170 = arith.divf %168, %169 : vector<8x1xf32>
      %171 = vector.broadcast %170 : vector<8x1xf32> to vector<8x32xf32>
      %172 = arith.subf %157, %171 : vector<8x32xf32>
      %173 = arith.mulf %172, %172 : vector<8x32xf32>
      %cst_64 = arith.constant dense<0.000000e+00> : vector<8xf32>
      %174 = vector.multi_reduction <add>, %173, %cst_64 [1] : vector<8x32xf32> to vector<8xf32>
      %175 = vector.shape_cast %174 : vector<8xf32> to vector<8x1xf32>
      %cst_65 = arith.constant 3.200000e+01 : f32
      %176 = vector.broadcast %cst_65 : f32 to vector<8x1xf32>
      %177 = arith.divf %175, %176 : vector<8x1xf32>
      %178 = vector.broadcast %170 : vector<8x1xf32> to vector<8x32xf32>
      %179 = arith.subf %157, %178 : vector<8x32xf32>
      %cst_66 = arith.constant 9.99999974E-6 : f32
      %180 = vector.broadcast %cst_66 : f32 to vector<8x1xf32>
      %181 = arith.addf %177, %180 : vector<8x1xf32>
      %182 = math.rsqrt %181 : vector<8x1xf32>
      %183 = vector.broadcast %182 : vector<8x1xf32> to vector<8x32xf32>
      %184 = arith.mulf %179, %183 : vector<8x32xf32>
      %185 = vector.broadcast %165 : vector<1x32xf32> to vector<8x32xf32>
      %186 = arith.mulf %184, %185 : vector<8x32xf32>
      %187 = vector.broadcast %166 : vector<1x32xf32> to vector<8x32xf32>
      %188 = arith.addf %186, %187 : vector<8x32xf32>
      %c0_67 = arith.constant 0 : index
      %c0_68 = arith.constant 0 : index
      %189 = vector.load %arg13[%c0_67, %c0_68] : memref<8x32xf32, #tpu.memory_space<vmem>>, vector<8x32xf32>
      tpu.vector_store %arg13[%c0_67, %c0_68], %188 {strides = array<i32>} : memref<8x32xf32, #tpu.memory_space<vmem>>, vector<8x32xf32>,
    } else {
    }
    %c7_i32 = arith.constant 7 : i32
    %162 = arith.cmpi eq, %arg0, %c7_i32 : i32
    %163 = arith.extui %162 : i1 to i32
    %c0_i32_61 = arith.constant 0 : i32
    %164 = arith.cmpi ne, %163, %c0_i32_61 : i32
    scf.if %164 {
      %165 = vector.extract_strided_slice %0 {offsets = [3, 0], sizes = [1, 32], strides = [1, 1]} : vector<8x128xf32> to vector<1x32xf32>
      %166 = vector.extract_strided_slice %0 {offsets = [4, 0], sizes = [1, 32], strides = [1, 1]} : vector<8x128xf32> to vector<1x32xf32>
      %cst_62 = arith.constant dense<0.000000e+00> : vector<8xf32>
      %167 = vector.multi_reduction <add>, %157, %cst_62 [1] : vector<8x32xf32> to vector<8xf32>
      %168 = vector.shape_cast %167 : vector<8xf32> to vector<8x1xf32>
      %cst_63 = arith.constant 3.200000e+01 : f32
      %169 = vector.broadcast %cst_63 : f32 to vector<8x1xf32>
      %170 = arith.divf %168, %169 : vector<8x1xf32>
      %171 = vector.broadcast %170 : vector<8x1xf32> to vector<8x32xf32>
      %172 = arith.subf %157, %171 : vector<8x32xf32>
      %173 = arith.mulf %172, %172 : vector<8x32xf32>
      %cst_64 = arith.constant dense<0.000000e+00> : vector<8xf32>
      %174 = vector.multi_reduction <add>, %173, %cst_64 [1] : vector<8x32xf32> to vector<8xf32>
      %175 = vector.shape_cast %174 : vector<8xf32> to vector<8x1xf32>
      %cst_65 = arith.constant 3.200000e+01 : f32
      %176 = vector.broadcast %cst_65 : f32 to vector<8x1xf32>
      %177 = arith.divf %175, %176 : vector<8x1xf32>
      %178 = vector.broadcast %170 : vector<8x1xf32> to vector<8x32xf32>
      %179 = arith.subf %157, %178 : vector<8x32xf32>
      %cst_66 = arith.constant 9.99999974E-6 : f32
      %180 = vector.broadcast %cst_66 : f32 to vector<8x1xf32>
      %181 = arith.addf %177, %180 : vector<8x1xf32>
      %182 = math.rsqrt %181 : vector<8x1xf32>
      %183 = vector.broadcast %182 : vector<8x1xf32> to vector<8x32xf32>
      %184 = arith.mulf %179, %183 : vector<8x32xf32>
      %185 = vector.broadcast %165 : vector<1x32xf32> to vector<8x32xf32>
      %186 = arith.mulf %184, %185 : vector<8x32xf32>
      %187 = vector.broadcast %166 : vector<1x32xf32> to vector<8x32xf32>
      %188 = arith.addf %186, %187 : vector<8x32xf32>
      %c0_67 = arith.constant 0 : index
      %c0_68 = arith.constant 0 : index
      %189 = vector.load %arg4[%c0_67, %c0_68] : memref<32x5xf32, #tpu.memory_space<vmem>>, vector<32x5xf32>
      %cst_69 = arith.constant dense<0.000000e+00> : vector<8x5xf32>
      %190 = tpu.matmul %188, %189, %cst_69 {dimension_numbers = #tpu.dot_dimension_numbers<[1], [0], [0], [1], [0, 0, 1, 1], [], []>} : vector<8x32xf32>, vector<32x5xf32>, vector<8x5xf32> -> vector<8x5xf32>
      %191 = vector.extract_strided_slice %0 {offsets = [5, 0], sizes = [1, 5], strides = [1, 1]} : vector<8x128xf32> to vector<1x5xf32>
      %192 = vector.broadcast %191 : vector<1x5xf32> to vector<8x5xf32>
      %193 = arith.addf %190, %192 : vector<8x5xf32>
      %c0_70 = arith.constant 0 : index
      %c0_71 = arith.constant 0 : index
      %194 = vector.load %arg10[%c0_70, %c0_71] : memref<8x5xf32, #tpu.memory_space<vmem>>, vector<8x5xf32>
      tpu.vector_store %arg10[%c0_70, %c0_71], %193 {strides = array<i32>} : memref<8x5xf32, #tpu.memory_space<vmem>>, vector<8x5xf32>,
    } else {
    }
    return
  }
  func.func @transform_0(%arg0: i32) -> (i32, i32) {
    %c0_i32 = arith.constant 0 : i32
    %c0_i32_0 = arith.constant 0 : i32
    %c0_i32_1 = arith.constant 0 : i32
    return %c0_i32, %c0_i32_0 : i32, i32
  }
  func.func @transform_1(%arg0: i32) -> (i32, i32) {
    %c0_i32 = arith.constant 0 : i32
    %c0_i32_0 = arith.constant 0 : i32
    %c0_i32_1 = arith.constant 0 : i32
    return %c0_i32, %c0_i32_0 : i32, i32
  }
  func.func @transform_2(%arg0: i32) -> (i32, i32) {
    %c0_i32 = arith.constant 0 : i32
    %c0_i32_0 = arith.constant 0 : i32
    %c0_i32_1 = arith.constant 0 : i32
    return %c0_i32, %c0_i32_0 : i32, i32
  }
  func.func @transform_3(%arg0: i32) -> (i32, i32) {
    %c0_i32 = arith.constant 0 : i32
    %c0_i32_0 = arith.constant 0 : i32
    %c0_i32_1 = arith.constant 0 : i32
    return %c0_i32, %c0_i32_0 : i32, i32
  }
  func.func @transform_4(%arg0: i32) -> (i32, i32, i32) {
    %c0_i32 = arith.constant 0 : i32
    %c0_i32_0 = arith.constant 0 : i32
    %c0_i32_1 = arith.constant 0 : i32
    return %arg0, %c0_i32, %c0_i32_0 : i32, i32, i32
  }
  func.func @transform_5(%arg0: i32) -> (i32, i32, i32) {
    %c0_i32 = arith.constant 0 : i32
    %c0_i32_0 = arith.constant 0 : i32
    %c0_i32_1 = arith.constant 0 : i32
    return %arg0, %c0_i32, %c0_i32_0 : i32, i32, i32
  }
  func.func @transform_6(%arg0: i32) -> (i32, i32, i32) {
    %c0_i32 = arith.constant 0 : i32
    %c0_i32_0 = arith.constant 0 : i32
    %c0_i32_1 = arith.constant 0 : i32
    return %arg0, %c0_i32, %c0_i32_0 : i32, i32, i32
  }
  func.func @transform_7(%arg0: i32) -> (i32, i32, i32) {
    %c0_i32 = arith.constant 0 : i32
    %c0_i32_0 = arith.constant 0 : i32
    %c0_i32_1 = arith.constant 0 : i32
    return %arg0, %c0_i32, %c0_i32_0 : i32, i32, i32
  }
  func.func @transform_8(%arg0: i32) -> (i32, i32, i32) {
    %c0_i32 = arith.constant 0 : i32
    %c0_i32_0 = arith.constant 0 : i32
    %c0_i32_1 = arith.constant 0 : i32
    return %arg0, %c0_i32, %c0_i32_0 : i32, i32, i32
  }
  func.func @transform_9(%arg0: i32) -> (i32, i32) {
    %c0_i32 = arith.constant 0 : i32
    %c0_i32_0 = arith.constant 0 : i32
    %c0_i32_1 = arith.constant 0 : i32
    return %c0_i32, %c0_i32_0 : i32, i32
  }
}

</mosaic_0001>

<llo_original>
// kernel: keystroke_transformer_forward.1
$region0: #{keystroke_transformer_forward.1}
  #allocation0 [shape = 'u32[]', space=smem, size = 0x4, offset = 0x4, fixed_abs, tag = 'smem constant byte address 0x4 - core index']
  #allocation1 [shape = 'u32[72,128]{1,0:T(1,128)}', space=vmem, size = 0x9000, scoped, tag = 'internal scratch']
  #allocation2 [shape = 'f32[8,32]{1,0:T(8,128)}', space=vmem, size = 0x1000, scoped, tag = 'scratch operand']
  #allocation3 [shape = 'f32[8,32]{1,0:T(8,128)}', space=vmem, size = 0x1000, scoped, tag = 'scratch operand']
  #allocation4 [shape = 'f32[8,32]{1,0:T(8,128)}', space=vmem, size = 0x1000, scoped, tag = 'scratch operand']
  %s0 = inlined_call_operand.vmem [shape: f32[8,16], index: 0, kind: input, shape index: {}]
  %s1 = inlined_call_operand.vmem [shape: f32[16,32], index: 1, kind: input, shape index: {}]
  %s2 = inlined_call_operand.vmem [shape: f32[8,128], index: 2, kind: input, shape index: {}]
  %s3 = inlined_call_operand.vmem [shape: f32[32,5], index: 3, kind: input, shape index: {}]
  %s4 = inlined_call_operand.vmem [shape: f32[8,32,640], index: 4, kind: input, shape index: {}]
  %s5 = inlined_call_operand.vmem [shape: f32[8,16,128], index: 5, kind: input, shape index: {}]
  %s6 = inlined_call_operand.vmem [shape: f32[8,1,2048], index: 6, kind: input, shape index: {}]
  %s7 = inlined_call_operand.vmem [shape: bf16[8,32,2048], index: 7, kind: input, shape index: {}]
  %s8 = inlined_call_operand.vmem [shape: bf16[8,2048,32], index: 8, kind: input, shape index: {}]
  %s9 = inlined_call_operand.hbm [shape: f32[8,5], index: 9, kind: output, shape index: {}]
  %s10 = sld [smem:[#allocation0]]
  $region89: #{keystroke_transformer_forward.1} parent=0
    _
  %s12 = ssub.s32 1, %s10
  %s13 = scalar_select 0, %s12, %s10
  $region1: #{keystroke_transformer_forward.1} parent=0
    #allocation5 [shape = 'u8[4096]{0}', space=vmem, size = 0x1000, scoped, tag = 'output window, operand 0, single buffered']
    #allocation6 [shape = 's32[2]{0}', space=sflag, size = 0x8, scoped, tag = 'scoped memory for keystroke_transformer_forward.1']
    %14 = vsyncpa [#allocation6], 0
    loop: start=0, step=1, limit=10
    $region2: #{keystroke_transformer_forward.1} parent=1 // loop_pre_header
      _
    $region3: #{keystroke_transformer_forward.1} parent=1 // loop_header
      %s16 = sphi 0, %s20
      %p17 = scmp.ge.s32.totalorder %s16, 10
      %s24 = sphi 0, %s24
      %s26 = sphi 0, %s24
      %s27 = sphi 0, %s26
      %s41 = sphi 0, %s27
      %s45 = sphi 0, %s45
      %s47 = sphi 0, %s45
      %s48 = sphi 0, %s47
      %s62 = sphi 0, %s48
      %s66 = sphi 0, %s66
      %s68 = sphi 0, %s66
      %s69 = sphi 0, %s68
      %s83 = sphi 0, %s69
      %s87 = sphi 0, %s87
      %s89 = sphi 0, %s87
      %s90 = sphi 0, %s89
      %s104 = sphi 0, %s90
      %s110 = sphi 0, %s112
      %s113 = sphi 0, %s110
      %s114 = sphi 0, %s113
      %s130 = sphi 0, %s114
      %s136 = sphi 0, %s138
      %s139 = sphi 0, %s136
      %s140 = sphi 0, %s139
      %s156 = sphi 0, %s140
      %s162 = sphi 0, %s164
      %s165 = sphi 0, %s162
      %s166 = sphi 0, %s165
      %s182 = sphi 0, %s166
      %s188 = sphi 0, %s190
      %s191 = sphi 0, %s188
      %s192 = sphi 0, %s191
      %s208 = sphi 0, %s192
      %s214 = sphi 0, %s216
      %s217 = sphi 0, %s214
      %s218 = sphi 0, %s217
      %s234 = sphi 0, %s218
      %s238 = sphi 0, %s238
      %s240 = sphi 0, %s238
      %s241 = sphi 0, %s240
      %s255 = sphi 0, %s241
    $region4: #{keystroke_transformer_forward.1} parent=1 // loop_header_branch
      %19 = sbr.rel (%p17) target = $region8
    $region5: #{keystroke_transformer_forward.1} parent=1 // loop_body
      %s21 = ssub.s32 %s16, 1
      %s22 = ssub.s32 %s16, 2
      %s23 = sadd.s32 %s16, 1
      %s25 = sadd.s32 %s24, 1
      %p28 = scmp.eq.s32.totalorder %s16, 7
      %p29 = scmp.ne.s32.totalorder %s24, %s26
      %p30 = scmp.eq.s32.totalorder %s16, 0
      %p31 = por %p29, %p30
      %p32 = scmp.ne.s32.totalorder %s24, %s26
      %p33 = scmp.eq.s32.totalorder %s21, 7
      %p34 = por %p32, %p33
      %p35 = scmp.ne.s32.totalorder %s26, %s27
      %p36 = scmp.eq.s32.totalorder %s21, 0
      %p37 = por %p35, %p36
      %p38 = scmp.ne.s32.totalorder %s26, %s27
      %p39 = scmp.eq.s32.totalorder %s22, 7
      %p40 = por %p38, %p39
      %p42 = scmp.ne.s32.totalorder %s27, %s41
      %p43 = scmp.eq.s32.totalorder %s22, 0
      %p44 = por %p42, %p43
      %s46 = sadd.s32 %s45, 1
      %p49 = scmp.eq.s32.totalorder %s16, 7
      %p50 = scmp.ne.s32.totalorder %s45, %s47
      %p51 = scmp.eq.s32.totalorder %s16, 0
      %p52 = por %p50, %p51
      %p53 = scmp.ne.s32.totalorder %s45, %s47
      %p54 = scmp.eq.s32.totalorder %s21, 7
      %p55 = por %p53, %p54
      %p56 = scmp.ne.s32.totalorder %s47, %s48
      %p57 = scmp.eq.s32.totalorder %s21, 0
      %p58 = por %p56, %p57
      %p59 = scmp.ne.s32.totalorder %s47, %s48
      %p60 = scmp.eq.s32.totalorder %s22, 7
      %p61 = por %p59, %p60
      %p63 = scmp.ne.s32.totalorder %s48, %s62
      %p64 = scmp.eq.s32.totalorder %s22, 0
      %p65 = por %p63, %p64
      %s67 = sadd.s32 %s66, 1
      %p70 = scmp.eq.s32.totalorder %s16, 7
      %p71 = scmp.ne.s32.totalorder %s66, %s68
      %p72 = scmp.eq.s32.totalorder %s16, 0
      %p73 = por %p71, %p72
      %p74 = scmp.ne.s32.totalorder %s66, %s68
      %p75 = scmp.eq.s32.totalorder %s21, 7
      %p76 = por %p74, %p75
      %p77 = scmp.ne.s32.totalorder %s68, %s69
      %p78 = scmp.eq.s32.totalorder %s21, 0
      %p79 = por %p77, %p78
      %p80 = scmp.ne.s32.totalorder %s68, %s69
      %p81 = scmp.eq.s32.totalorder %s22, 7
      %p82 = por %p80, %p81
      %p84 = scmp.ne.s32.totalorder %s69, %s83
      %p85 = scmp.eq.s32.totalorder %s22, 0
      %p86 = por %p84, %p85
      %s88 = sadd.s32 %s87, 1
      %p91 = scmp.eq.s32.totalorder %s16, 7
      %p92 = scmp.ne.s32.totalorder %s87, %s89
      %p93 = scmp.eq.s32.totalorder %s16, 0
      %p94 = por %p92, %p93
      %p95 = scmp.ne.s32.totalorder %s87, %s89
      %p96 = scmp.eq.s32.totalorder %s21, 7
      %p97 = por %p95, %p96
      %p98 = scmp.ne.s32.totalorder %s89, %s90
      %p99 = scmp.eq.s32.totalorder %s21, 0
      %p100 = por %p98, %p99
      %p101 = scmp.ne.s32.totalorder %s89, %s90
      %p102 = scmp.eq.s32.totalorder %s22, 7
      %p103 = por %p101, %p102
      %p105 = scmp.ne.s32.totalorder %s90, %s104
      %p106 = scmp.eq.s32.totalorder %s22, 0
      %p107 = por %p105, %p106
      %s108 = ssub.s32 %s16, %s23
      %p109 = scmp.eq.s32.totalorder %s108, 0
      %s111 = sadd.s32 %s110, 1
      %s112 = scalar_select %p109, %s110, %s111
      %p115 = pneg %p109
      %p116 = scmp.eq.s32.totalorder %s16, 7
      %p117 = por %p115, %p116
      %p118 = scmp.ne.s32.totalorder %s110, %s113
      %p119 = scmp.eq.s32.totalorder %s16, 0
      %p120 = por %p118, %p119
      %p121 = scmp.ne.s32.totalorder %s110, %s113
      %p122 = scmp.eq.s32.totalorder %s21, 7
      %p123 = por %p121, %p122
      %p124 = scmp.ne.s32.totalorder %s113, %s114
      %p125 = scmp.eq.s32.totalorder %s21, 0
      %p126 = por %p124, %p125
      %p127 = scmp.ne.s32.totalorder %s113, %s114
      %p128 = scmp.eq.s32.totalorder %s22, 7
      %p129 = por %p127, %p128
      %p131 = scmp.ne.s32.totalorder %s114, %s130
      %p132 = scmp.eq.s32.totalorder %s22, 0
      %p133 = por %p131, %p132
      %s134 = ssub.s32 %s16, %s23
      %p135 = scmp.eq.s32.totalorder %s134, 0
      %s137 = sadd.s32 %s136, 1
      %s138 = scalar_select %p135, %s136, %s137
      %p141 = pneg %p135
      %p142 = scmp.eq.s32.totalorder %s16, 7
      %p143 = por %p141, %p142
      %p144 = scmp.ne.s32.totalorder %s136, %s139
      %p145 = scmp.eq.s32.totalorder %s16, 0
      %p146 = por %p144, %p145
      %p147 = scmp.ne.s32.totalorder %s136, %s139
      %p148 = scmp.eq.s32.totalorder %s21, 7
      %p149 = por %p147, %p148
      %p150 = scmp.ne.s32.totalorder %s139, %s140
      %p151 = scmp.eq.s32.totalorder %s21, 0
      %p152 = por %p150, %p151
      %p153 = scmp.ne.s32.totalorder %s139, %s140
      %p154 = scmp.eq.s32.totalorder %s22, 7
      %p155 = por %p153, %p154
      %p157 = scmp.ne.s32.totalorder %s140, %s156
      %p158 = scmp.eq.s32.totalorder %s22, 0
      %p159 = por %p157, %p158
      %s160 = ssub.s32 %s16, %s23
      %p161 = scmp.eq.s32.totalorder %s160, 0
      %s163 = sadd.s32 %s162, 1
      %s164 = scalar_select %p161, %s162, %s163
      %p167 = pneg %p161
      %p168 = scmp.eq.s32.totalorder %s16, 7
      %p169 = por %p167, %p168
      %p170 = scmp.ne.s32.totalorder %s162, %s165
      %p171 = scmp.eq.s32.totalorder %s16, 0
      %p172 = por %p170, %p171
      %p173 = scmp.ne.s32.totalorder %s162, %s165
      %p174 = scmp.eq.s32.totalorder %s21, 7
      %p175 = por %p173, %p174
      %p176 = scmp.ne.s32.totalorder %s165, %s166
      %p177 = scmp.eq.s32.totalorder %s21, 0
      %p178 = por %p176, %p177
      %p179 = scmp.ne.s32.totalorder %s165, %s166
      %p180 = scmp.eq.s32.totalorder %s22, 7
      %p181 = por %p179, %p180
      %p183 = scmp.ne.s32.totalorder %s166, %s182
      %p184 = scmp.eq.s32.totalorder %s22, 0
      %p185 = por %p183, %p184
      %s186 = ssub.s32 %s16, %s23
      %p187 = scmp.eq.s32.totalorder %s186, 0
      %s189 = sadd.s32 %s188, 1
      %s190 = scalar_select %p187, %s188, %s189
      %p193 = pneg %p187
      %p194 = scmp.eq.s32.totalorder %s16, 7
      %p195 = por %p193, %p194
      %p196 = scmp.ne.s32.totalorder %s188, %s191
      %p197 = scmp.eq.s32.totalorder %s16, 0
      %p198 = por %p196, %p197
      %p199 = scmp.ne.s32.totalorder %s188, %s191
      %p200 = scmp.eq.s32.totalorder %s21, 7
      %p201 = por %p199, %p200
      %p202 = scmp.ne.s32.totalorder %s191, %s192
      %p203 = scmp.eq.s32.totalorder %s21, 0
      %p204 = por %p202, %p203
      %p205 = scmp.ne.s32.totalorder %s191, %s192
      %p206 = scmp.eq.s32.totalorder %s22, 7
      %p207 = por %p205, %p206
      %p209 = scmp.ne.s32.totalorder %s192, %s208
      %p210 = scmp.eq.s32.totalorder %s22, 0
      %p211 = por %p209, %p210
      %s212 = ssub.s32 %s16, %s23
      %p213 = scmp.eq.s32.totalorder %s212, 0
      %s215 = sadd.s32 %s214, 1
      %s216 = scalar_select %p213, %s214, %s215
      %p219 = pneg %p213
      %p220 = scmp.eq.s32.totalorder %s16, 7
      %p221 = por %p219, %p220
      %p222 = scmp.ne.s32.totalorder %s214, %s217
      %p223 = scmp.eq.s32.totalorder %s16, 0
      %p224 = por %p222, %p223
      %p225 = scmp.ne.s32.totalorder %s214, %s217
      %p226 = scmp.eq.s32.totalorder %s21, 7
      %p227 = por %p225, %p226
      %p228 = scmp.ne.s32.totalorder %s217, %s218
      %p229 = scmp.eq.s32.totalorder %s21, 0
      %p230 = por %p228, %p229
      %p231 = scmp.ne.s32.totalorder %s217, %s218
      %p232 = scmp.eq.s32.totalorder %s22, 7
      %p233 = por %p231, %p232
      %p235 = scmp.ne.s32.totalorder %s218, %s234
      %p236 = scmp.eq.s32.totalorder %s22, 0
      %p237 = por %p235, %p236
      %s239 = sadd.s32 %s238, 1
      %p242 = scmp.eq.s32.totalorder %s16, 7
      %p243 = scmp.ne.s32.totalorder %s238, %s240
      %p244 = scmp.eq.s32.totalorder %s16, 0
      %p245 = por %p243, %p244
      %p246 = scmp.ne.s32.totalorder %s238, %s240
      %p247 = scmp.eq.s32.totalorder %s21, 7
      %p248 = por %p246, %p247
      %p249 = scmp.ne.s32.totalorder %s240, %s241
      %p250 = scmp.eq.s32.totalorder %s21, 0
      %p251 = por %p249, %p250
      %p252 = scmp.ne.s32.totalorder %s240, %s241
      %p253 = scmp.eq.s32.totalorder %s22, 7
      %p254 = por %p252, %p253
      %p256 = scmp.ne.s32.totalorder %s241, %s255
      %p257 = scmp.eq.s32.totalorder %s22, 0
      %p258 = por %p256, %p257
      %p259 = scmp.le.s32.totalorder 1, %s16
      %p260 = scmp.lt.s32.totalorder %s16, 9
      %p261 = pnand %p259, %p260
      %p262 = pneg %p261
      // Predicated region
      $region9: #{keystroke_transformer_forward.1} parent=5 // pred_check
        _
      $region10: #{keystroke_transformer_forward.1} parent=5 // pred_check_branch
        %264 = sbr.rel (%p261) target = $region12
      $region11: #{keystroke_transformer_forward.1} parent=5 // pred_region
        %s265 = ssub.s32 %s16, 1
        // Predicated region
        $region13: #{keystroke_transformer_forward.1} parent=11 // pred_check
          %p266 = pneg %p37
        $region14: #{keystroke_transformer_forward.1} parent=11 // pred_check_branch
          %268 = sbr.rel (%p266) target = $region16
        $region15: #{keystroke_transformer_forward.1} parent=11 // pred_region
          _
        $region16: #{keystroke_transformer_forward.1} parent=11 // pred_fallthru
          _
        // Predicated region
        $region17: #{keystroke_transformer_forward.1} parent=11 // pred_check
          %p269 = pneg %p58
        $region18: #{keystroke_transformer_forward.1} parent=11 // pred_check_branch
          %271 = sbr.rel (%p269) target = $region20
        $region19: #{keystroke_transformer_forward.1} parent=11 // pred_region
          _
        $region20: #{keystroke_transformer_forward.1} parent=11 // pred_fallthru
          _
        // Predicated region
        $region21: #{keystroke_transformer_forward.1} parent=11 // pred_check
          %p272 = pneg %p79
        $region22: #{keystroke_transformer_forward.1} parent=11 // pred_check_branch
          %274 = sbr.rel (%p272) target = $region24
        $region23: #{keystroke_transformer_forward.1} parent=11 // pred_region
          _
        $region24: #{keystroke_transformer_forward.1} parent=11 // pred_fallthru
          _
        // Predicated region
        $region25: #{keystroke_transformer_forward.1} parent=11 // pred_check
          %p275 = pneg %p100
        $region26: #{keystroke_transformer_forward.1} parent=11 // pred_check_branch
          %277 = sbr.rel (%p275) target = $region28
        $region27: #{keystroke_transformer_forward.1} parent=11 // pred_region
          _
        $region28: #{keystroke_transformer_forward.1} parent=11 // pred_fallthru
          _
      $region12: #{keystroke_transformer_forward.1} parent=5 // pred_fallthru
        _
      %p278 = scmp.lt.s32.totalorder %s16, 8
      // Predicated region
      $region29: #{keystroke_transformer_forward.1} parent=5 // pred_check
        %p279 = pneg %p278
      $region30: #{keystroke_transformer_forward.1} parent=5 // pred_check_branch
        %281 = sbr.rel (%p279) target = $region32
      $region31: #{keystroke_transformer_forward.1} parent=5 // pred_region
        // Predicated region
        $region33: #{keystroke_transformer_forward.1} parent=31 // pred_check
          %p282 = pneg %p120
        $region34: #{keystroke_transformer_forward.1} parent=31 // pred_check_branch
          %284 = sbr.rel (%p282) target = $region36
        $region35: #{keystroke_transformer_forward.1} parent=31 // pred_region
          %p285 = scmp.lt.s32.totalorder %s16, 7
          %s286 = scalar_select %p285, %s16, 7
          %s287 = smul.addr %s286, 20
          %s288 = smul.addr %s287, 8
          %s289 = scalar_lea.vmem %s4, %s288
        $region36: #{keystroke_transformer_forward.1} parent=31 // pred_fallthru
          _
        // Predicated region
        $region37: #{keystroke_transformer_forward.1} parent=31 // pred_check
          %p290 = pneg %p146
        $region38: #{keystroke_transformer_forward.1} parent=31 // pred_check_branch
          %292 = sbr.rel (%p290) target = $region40
        $region39: #{keystroke_transformer_forward.1} parent=31 // pred_region
          %p293 = scmp.lt.s32.totalorder %s16, 7
          %s294 = scalar_select %p293, %s16, 7
          %s295 = smul.addr %s294, 2
          %s296 = smul.addr %s295, 8
          %s297 = scalar_lea.vmem %s5, %s296
        $region40: #{keystroke_transformer_forward.1} parent=31 // pred_fallthru
          _
        // Predicated region
        $region41: #{keystroke_transformer_forward.1} parent=31 // pred_check
          %p298 = pneg %p172
        $region42: #{keystroke_transformer_forward.1} parent=31 // pred_check_branch
          %300 = sbr.rel (%p298) target = $region44
        $region43: #{keystroke_transformer_forward.1} parent=31 // pred_region
          %p301 = scmp.lt.s32.totalorder %s16, 7
          %s302 = scalar_select %p301, %s16, 7
          %s303 = smul.addr %s302, 16
          %s304 = scalar_lea.vmem %s6, %s303
        $region44: #{keystroke_transformer_forward.1} parent=31 // pred_fallthru
          _
        // Predicated region
        $region45: #{keystroke_transformer_forward.1} parent=31 // pred_check
          %p305 = pneg %p198
        $region46: #{keystroke_transformer_forward.1} parent=31 // pred_check_branch
          %307 = sbr.rel (%p305) target = $region48
        $region47: #{keystroke_transformer_forward.1} parent=31 // pred_region
          %p308 = scmp.lt.s32.totalorder %s16, 7
          %s309 = scalar_select %p308, %s16, 7
          %s310 = smul.addr %s309, 64
          %s311 = smul.addr %s310, 4
          %s312 = scalar_lea.vmem %s7, %s311
        $region48: #{keystroke_transformer_forward.1} parent=31 // pred_fallthru
          _
        // Predicated region
        $region49: #{keystroke_transformer_forward.1} parent=31 // pred_check
          %p313 = pneg %p224
        $region50: #{keystroke_transformer_forward.1} parent=31 // pred_check_branch
          %315 = sbr.rel (%p313) target = $region52
        $region51: #{keystroke_transformer_forward.1} parent=31 // pred_region
          %p316 = scmp.lt.s32.totalorder %s16, 7
          %s317 = scalar_select %p316, %s16, 7
          %s318 = smul.addr %s317, 256
          %s319 = smul.addr %s318, 4
          %s320 = scalar_lea.vmem %s8, %s319
        $region52: #{keystroke_transformer_forward.1} parent=31 // pred_fallthru
          _
      $region32: #{keystroke_transformer_forward.1} parent=5 // pred_fallthru
        _
      %p321 = scmp.le.s32.totalorder 1, %s16
      %p322 = scmp.lt.s32.totalorder %s16, 9
      %p323 = pnand %p321, %p322
      %p324 = pneg %p323
      // Predicated region
      $region53: #{keystroke_transformer_forward.1} parent=5 // pred_check
        _
      $region54: #{keystroke_transformer_forward.1} parent=5 // pred_check_branch
        %326 = sbr.rel (%p323) target = $region56
      $region55: #{keystroke_transformer_forward.1} parent=5 // pred_region
        %s327 = ssub.s32 %s16, 1
        %p328 = pneg %p37
        %p329 = pneg %p34
        %p330 = pneg %p58
        %p331 = pneg %p55
        %p332 = pneg %p79
        %p333 = pneg %p76
        %p334 = pneg %p100
        %p335 = pneg %p97
        %p336 = scmp.lt.s32.totalorder %s21, 7
        %s337 = scalar_select %p336, %s21, 7
        %s338 = smul.addr %s337, 20
        %s339 = smul.addr %s338, 8
        %s340 = scalar_lea.vmem %s4, %s339
        %p341 = pneg %p126
        %p342 = pneg %p123
        %p343 = scmp.lt.s32.totalorder %s21, 7
        %s344 = scalar_select %p343, %s21, 7
        %s345 = smul.addr %s344, 2
        %s346 = smul.addr %s345, 8
        %s347 = scalar_lea.vmem %s5, %s346
        %p348 = pneg %p152
        %p349 = pneg %p149
        %p350 = scmp.lt.s32.totalorder %s21, 7
        %s351 = scalar_select %p350, %s21, 7
        %s352 = smul.addr %s351, 16
        %s353 = scalar_lea.vmem %s6, %s352
        %p354 = pneg %p178
        %p355 = pneg %p175
        %p356 = scmp.lt.s32.totalorder %s21, 7
        %s357 = scalar_select %p356, %s21, 7
        %s358 = smul.addr %s357, 64
        %s359 = smul.addr %s358, 4
        %s360 = scalar_lea.vmem %s7, %s359
        %p361 = pneg %p204
        %p362 = pneg %p201
        %p363 = scmp.lt.s32.totalorder %s21, 7
        %s364 = scalar_select %p363, %s21, 7
        %s365 = smul.addr %s364, 256
        %s366 = smul.addr %s365, 4
        %s367 = scalar_lea.vmem %s8, %s366
        %p368 = pneg %p230
        %p369 = pneg %p227
        %p370 = pneg %p251
        %p371 = pneg %p248
        %p372 = scmp.lt.s32.totalorder %s21, 7
        %s373 = scalar_select %p372, %s21, 7
        %s374 = smul.addr %s373, 20
        %s375 = smul.addr %s374, 8
        %s376 = scalar_lea.vmem %s4, %s375
        %p377 = scmp.lt.s32.totalorder %s21, 7
        %s378 = scalar_select %p377, %s21, 7
        %s379 = smul.addr %s378, 2
        %s380 = smul.addr %s379, 8
        %s381 = scalar_lea.vmem %s5, %s380
        %p382 = scmp.lt.s32.totalorder %s21, 7
        %s383 = scalar_select %p382, %s21, 7
        %s384 = smul.addr %s383, 16
        %s385 = scalar_lea.vmem %s6, %s384
        %p386 = scmp.lt.s32.totalorder %s21, 7
        %s387 = scalar_select %p386, %s21, 7
        %s388 = smul.addr %s387, 64
        %s389 = smul.addr %s388, 4
        %s390 = scalar_lea.vmem %s7, %s389
        %p391 = scmp.lt.s32.totalorder %s21, 7
        %s392 = scalar_select %p391, %s21, 7
        %s393 = smul.addr %s392, 256
        %s394 = smul.addr %s393, 4
        %s395 = scalar_lea.vmem %s8, %s394
        %v397 = vld [vmem:[%s2] sm:$0xff]
        %p398 = scmp.eq.s32.totalorder %s21, 0
        // Predicated region
        $region57: #{keystroke_transformer_forward.1} parent=55 // pred_check
          %p399 = pneg %p398
        $region58: #{keystroke_transformer_forward.1} parent=55 // pred_check_branch
          %401 = sbr.rel (%p399) target = $region60
        $region59: #{keystroke_transformer_forward.1} parent=55 // pred_region
          %v402 = vld [vmem:[%s0] sm:$0xff]
          %v403 = vld [vmem:[%s1] sm:$0xff]
          %v404 = vld [vmem:[%s1 + $0x8] sm:$0xff]
          %v405 = vperm.slane %v397, 0
          %vm406 = vcmask 130048
          %v408 = vsel %vm406, %v402, 0
          %410 = vmatpush.msra.mxu0 0.0
          %411 = vmatpush.msra.mxu0 0.0
          %412 = vmatpush.msra.mxu0 0.0
          %413 = vmatpush.msra.mxu0 0.0
          %414 = vmatpush.msra.mxu0 0.0
          %415 = vmatpush.msra.mxu0 0.0
          %416 = vmatpush.msra.mxu0 0.0
          %417 = vmatpush.msra.mxu0 0.0
          %418 = vmatpush.msra.mxu0 0.0
          %419 = vmatpush.msra.mxu0 0.0
          %420 = vmatpush.msra.mxu0 0.0
          %421 = vmatpush.msra.mxu0 0.0
          %422 = vmatpush.msra.mxu0 0.0
          %423 = vmatpush.msra.mxu0 0.0
          %424 = vmatpush.msra.mxu0 %v404
          %425 = vmatpush.msra.mxu0 %v403
          %426 = vmatmul.f32.gmra.mxu0 %v408
          %v427 = vpop.f32.mrf.mxu0
          %v428 = vadd.f32 %v405, %v427
          %429 = vdwg.mxu0
          %vm430 = vcmask 261120
          %431 = vst.msk [vmem:[#allocation2] sm:$0xff] %vm430, %v428
          %432 = vst.msk [vmem:[#allocation3] sm:$0xff] %vm430, %v428
          %433 = vst.msk [vmem:[#allocation4] sm:$0xff] %vm430, 0.0
        $region60: #{keystroke_transformer_forward.1} parent=55 // pred_fallthru
          _
        %p434 = scmp.eq.s32.totalorder %s21, 2
        // Predicated region
        $region61: #{keystroke_transformer_forward.1} parent=55 // pred_check
          %p435 = pneg %p434
        $region62: #{keystroke_transformer_forward.1} parent=55 // pred_check_branch
          %437 = sbr.rel (%p435) target = $region64
        $region63: #{keystroke_transformer_forward.1} parent=55 // pred_region
          %v438 = vld [vmem:[#allocation2] sm:$0xff]
          %vm439 = vcmask 261120
          %440 = vst.msk [vmem:[#allocation3] sm:$0xff] %vm439, %v438
        $region64: #{keystroke_transformer_forward.1} parent=55 // pred_fallthru
          _
        %v441 = vld [vmem:[#allocation3] sm:$0xff]
        %v442 = vld [vmem:[%s381] sm:$0xff]
        %v443 = vld [vmem:[%s381 + $0x8] sm:$0xff]
        %v444 = vld [vmem:[%s376] sm:$0xff]
        %v445 = vld [vmem:[%s376 + $0x28] sm:$0xff]
        %v446 = vld [vmem:[%s376 + $0x50] sm:$0xff]
        %v447 = vld [vmem:[%s376 + $0x78] sm:$0xff]
        %v448 = vperm.slane %v442, 0
        %vm449 = vcmask 261120
        %v451 = vsel %vm449, %v441, 0
        %453 = vmatpush.msra.mxu0 0.0
        %454 = vmatpush.msra.mxu0 0.0
        %455 = vmatpush.msra.mxu0 0.0
        %456 = vmatpush.msra.mxu0 0.0
        %457 = vmatpush.msra.mxu0 0.0
        %458 = vmatpush.msra.mxu0 0.0
        %459 = vmatpush.msra.mxu0 0.0
        %460 = vmatpush.msra.mxu0 0.0
        %461 = vmatpush.msra.mxu0 0.0
        %462 = vmatpush.msra.mxu0 0.0
        %463 = vmatpush.msra.mxu0 0.0
        %464 = vmatpush.msra.mxu0 0.0
        %465 = vmatpush.msra.mxu0 %v447
        %466 = vmatpush.msra.mxu0 %v446
        %467 = vmatpush.msra.mxu0 %v445
        %468 = vmatpush.msra.mxu0 %v444
        %469 = vmatmul.f32.gmra.mxu0 %v451
        %v470 = vpop.f32.mrf.mxu0
        %v471 = vadd.f32 %v448, %v470
        %472 = vdwg.mxu0
        %474 = vrot.lane.b32.xlu0 %v471, 96
        %v475 = vpop.permute.xlu0 %474
        %vm476 = vcmask 64512
        %v477 = vsel %vm476, %v471, 0
        %v479 = vsel %vm476, %v475, 0
        %481 = vmatpush.xpose.msra.mxu0 0.0
        %482 = vmatpush.xpose.msra.mxu0 0.0
        %483 = vmatpush.xpose.msra.mxu0 0.0
        %484 = vmatpush.xpose.msra.mxu0 0.0
        %485 = vmatpush.xpose.msra.mxu0 0.0
        %486 = vmatpush.xpose.msra.mxu0 0.0
        %487 = vmatpush.xpose.msra.mxu0 0.0
        %488 = vmatpush.xpose.msra.mxu0 0.0
        %489 = vmatpush.xpose.msra.mxu0 0.0
        %490 = vmatpush.xpose.msra.mxu0 0.0
        %491 = vmatpush.xpose.msra.mxu0 0.0
        %492 = vmatpush.xpose.msra.mxu0 0.0
        %493 = vmatpush.xpose.msra.mxu0 0.0
        %494 = vmatpush.xpose.msra.mxu0 0.0
        %495 = vmatpush.xpose.msra.mxu0 0.0
        %496 = vmatpush.xpose.msra.mxu0 %v479
        %497 = vmatmul.f32.gmra.mxu0 %v477
        %v498 = vpop.f32.mrf.mxu0
        %v499 = vadd.f32 0.0, %v498
        %500 = vdwg.mxu0
        %v501 = vsel %vm476, %v499, -inf
        %502 = vmax.xlane.f32.xlu0 %v501
        %v503 = vpop.xlane.xlu0 %502
        %v504 = vsub.f32 %v499, %v503
        %v505 = vmul.f32 %v504, 1.442695
        %v506 = vpow.pop %v505
        %v507 = vsel %vm476, %v506, 0.0
        %508 = vadd.xlane.f32.xlu0 %v507
        %v509 = vpop.xlane.xlu0 %508
        %v510 = vrcp.pop %v509
        %v511 = vmul.f32 %v506, %v510
        %512 = vrot.lane.b32.xlu0 %v471, 64
        %v513 = vpop.permute.xlu0 %512
        %v516 = vsel %vm476, %v511, 0
        %518 = vmatpush.msra.mxu0 0.0
        %519 = vmatpush.msra.mxu0 0.0
        %520 = vmatpush.msra.mxu0 0.0
        %521 = vmatpush.msra.mxu0 0.0
        %522 = vmatpush.msra.mxu0 0.0
        %523 = vmatpush.msra.mxu0 0.0
        %524 = vmatpush.msra.mxu0 0.0
        %525 = vmatpush.msra.mxu0 0.0
        %526 = vmatpush.msra.mxu0 0.0
        %527 = vmatpush.msra.mxu0 0.0
        %528 = vmatpush.msra.mxu0 0.0
        %529 = vmatpush.msra.mxu0 0.0
        %530 = vmatpush.msra.mxu0 0.0
        %531 = vmatpush.msra.mxu0 0.0
        %532 = vmatpush.msra.mxu0 0.0
        %533 = vmatpush.msra.mxu0 %v513
        %534 = vmatmul.f32.gmra.mxu0 %v516
        %v535 = vpop.f32.mrf.mxu0
        %v536 = vadd.f32 0.0, %v535
        %537 = vdwg.mxu0
        %538 = vrot.lane.b32.xlu0 %v471, 120
        %v539 = vpop.permute.xlu0 %538
        %540 = vrot.lane.b32.xlu0 %v471, 88
        %v541 = vpop.permute.xlu0 %540
        %v542 = vsel %vm476, %v539, 0
        %v544 = vsel %vm476, %v541, 0
        %546 = vmatpush.xpose.msra.mxu0 0.0
        %547 = vmatpush.xpose.msra.mxu0 0.0
        %548 = vmatpush.xpose.msra.mxu0 0.0
        %549 = vmatpush.xpose.msra.mxu0 0.0
        %550 = vmatpush.xpose.msra.mxu0 0.0
        %551 = vmatpush.xpose.msra.mxu0 0.0
        %552 = vmatpush.xpose.msra.mxu0 0.0
        %553 = vmatpush.xpose.msra.mxu0 0.0
        %554 = vmatpush.xpose.msra.mxu0 0.0
        %555 = vmatpush.xpose.msra.mxu0 0.0
        %556 = vmatpush.xpose.msra.mxu0 0.0
        %557 = vmatpush.xpose.msra.mxu0 0.0
        %558 = vmatpush.xpose.msra.mxu0 0.0
        %559 = vmatpush.xpose.msra.mxu0 0.0
        %560 = vmatpush.xpose.msra.mxu0 0.0
        %561 = vmatpush.xpose.msra.mxu0 %v544
        %562 = vmatmul.f32.gmra.mxu0 %v542
        %v563 = vpop.f32.mrf.mxu0
        %v564 = vadd.f32 0.0, %v563
        %565 = vdwg.mxu0
        %v566 = vsel %vm476, %v564, -inf
        %567 = vmax.xlane.f32.xlu0 %v566
        %v568 = vpop.xlane.xlu0 %567
        %v569 = vsub.f32 %v564, %v568
        %v570 = vmul.f32 %v569, 1.442695
        %v571 = vpow.pop %v570
        %v572 = vsel %vm476, %v571, 0.0
        %573 = vadd.xlane.f32.xlu0 %v572
        %v574 = vpop.xlane.xlu0 %573
        %v575 = vrcp.pop %v574
        %v576 = vmul.f32 %v571, %v575
        %577 = vrot.lane.b32.xlu0 %v471, 56
        %v578 = vpop.permute.xlu0 %577
        %v581 = vsel %vm476, %v576, 0
        %583 = vmatpush.msra.mxu0 0.0
        %584 = vmatpush.msra.mxu0 0.0
        %585 = vmatpush.msra.mxu0 0.0
        %586 = vmatpush.msra.mxu0 0.0
        %587 = vmatpush.msra.mxu0 0.0
        %588 = vmatpush.msra.mxu0 0.0
        %589 = vmatpush.msra.mxu0 0.0
        %590 = vmatpush.msra.mxu0 0.0
        %591 = vmatpush.msra.mxu0 0.0
        %592 = vmatpush.msra.mxu0 0.0
        %593 = vmatpush.msra.mxu0 0.0
        %594 = vmatpush.msra.mxu0 0.0
        %595 = vmatpush.msra.mxu0 0.0
        %596 = vmatpush.msra.mxu0 0.0
        %597 = vmatpush.msra.mxu0 0.0
        %598 = vmatpush.msra.mxu0 %v578
        %599 = vmatmul.f32.gmra.mxu0 %v581
        %v600 = vpop.f32.mrf.mxu0
        %v601 = vadd.f32 0.0, %v600
        %602 = vdwg.mxu0
        %603 = vrot.lane.b32.xlu0 %v471, 112
        %v604 = vpop.permute.xlu0 %603
        %605 = vrot.lane.b32.xlu0 %v471, 80
        %v606 = vpop.permute.xlu0 %605
        %v607 = vsel %vm476, %v604, 0
        %v609 = vsel %vm476, %v606, 0
        %611 = vmatpush.xpose.msra.mxu0 0.0
        %612 = vmatpush.xpose.msra.mxu0 0.0
        %613 = vmatpush.xpose.msra.mxu0 0.0
        %614 = vmatpush.xpose.msra.mxu0 0.0
        %615 = vmatpush.xpose.msra.mxu0 0.0
        %616 = vmatpush.xpose.msra.mxu0 0.0
        %617 = vmatpush.xpose.msra.mxu0 0.0
        %618 = vmatpush.xpose.msra.mxu0 0.0
        %619 = vmatpush.xpose.msra.mxu0 0.0
        %620 = vmatpush.xpose.msra.mxu0 0.0
        %621 = vmatpush.xpose.msra.mxu0 0.0
        %622 = vmatpush.xpose.msra.mxu0 0.0
        %623 = vmatpush.xpose.msra.mxu0 0.0
        %624 = vmatpush.xpose.msra.mxu0 0.0
        %625 = vmatpush.xpose.msra.mxu0 0.0
        %626 = vmatpush.xpose.msra.mxu0 %v609
        %627 = vmatmul.f32.gmra.mxu0 %v607
        %v628 = vpop.f32.mrf.mxu0
        %v629 = vadd.f32 0.0, %v628
        %630 = vdwg.mxu0
        %v631 = vsel %vm476, %v629, -inf
        %632 = vmax.xlane.f32.xlu0 %v631
        %v633 = vpop.xlane.xlu0 %632
        %v634 = vsub.f32 %v629, %v633
        %v635 = vmul.f32 %v634, 1.442695
        %v636 = vpow.pop %v635
        %v637 = vsel %vm476, %v636, 0.0
        %638 = vadd.xlane.f32.xlu0 %v637
        %v639 = vpop.xlane.xlu0 %638
        %v640 = vrcp.pop %v639
        %v641 = vmul.f32 %v636, %v640
        %642 = vrot.lane.b32.xlu0 %v471, 48
        %v643 = vpop.permute.xlu0 %642
        %v646 = vsel %vm476, %v641, 0
        %648 = vmatpush.msra.mxu0 0.0
        %649 = vmatpush.msra.mxu0 0.0
        %650 = vmatpush.msra.mxu0 0.0
        %651 = vmatpush.msra.mxu0 0.0
        %652 = vmatpush.msra.mxu0 0.0
        %653 = vmatpush.msra.mxu0 0.0
        %654 = vmatpush.msra.mxu0 0.0
        %655 = vmatpush.msra.mxu0 0.0
        %656 = vmatpush.msra.mxu0 0.0
        %657 = vmatpush.msra.mxu0 0.0
        %658 = vmatpush.msra.mxu0 0.0
        %659 = vmatpush.msra.mxu0 0.0
        %660 = vmatpush.msra.mxu0 0.0
        %661 = vmatpush.msra.mxu0 0.0
        %662 = vmatpush.msra.mxu0 0.0
        %663 = vmatpush.msra.mxu0 %v643
        %664 = vmatmul.f32.gmra.mxu0 %v646
        %v665 = vpop.f32.mrf.mxu0
        %v666 = vadd.f32 0.0, %v665
        %667 = vdwg.mxu0
        %668 = vrot.lane.b32.xlu0 %v471, 104
        %v669 = vpop.permute.xlu0 %668
        %670 = vrot.lane.b32.xlu0 %v471, 72
        %v671 = vpop.permute.xlu0 %670
        %v672 = vsel %vm476, %v669, 0
        %v674 = vsel %vm476, %v671, 0
        %676 = vmatpush.xpose.msra.mxu0 0.0
        %677 = vmatpush.xpose.msra.mxu0 0.0
        %678 = vmatpush.xpose.msra.mxu0 0.0
        %679 = vmatpush.xpose.msra.mxu0 0.0
        %680 = vmatpush.xpose.msra.mxu0 0.0
        %681 = vmatpush.xpose.msra.mxu0 0.0
        %682 = vmatpush.xpose.msra.mxu0 0.0
        %683 = vmatpush.xpose.msra.mxu0 0.0
        %684 = vmatpush.xpose.msra.mxu0 0.0
        %685 = vmatpush.xpose.msra.mxu0 0.0
        %686 = vmatpush.xpose.msra.mxu0 0.0
        %687 = vmatpush.xpose.msra.mxu0 0.0
        %688 = vmatpush.xpose.msra.mxu0 0.0
        %689 = vmatpush.xpose.msra.mxu0 0.0
        %690 = vmatpush.xpose.msra.mxu0 0.0
        %691 = vmatpush.xpose.msra.mxu0 %v674
        %692 = vmatmul.f32.gmra.mxu0 %v672
        %v693 = vpop.f32.mrf.mxu0
        %v694 = vadd.f32 0.0, %v693
        %695 = vdwg.mxu0
        %v696 = vsel %vm476, %v694, -inf
        %697 = vmax.xlane.f32.xlu0 %v696
        %v698 = vpop.xlane.xlu0 %697
        %v699 = vsub.f32 %v694, %v698
        %v700 = vmul.f32 %v699, 1.442695
        %v701 = vpow.pop %v700
        %v702 = vsel %vm476, %v701, 0.0
        %703 = vadd.xlane.f32.xlu0 %v702
        %v704 = vpop.xlane.xlu0 %703
        %v705 = vrcp.pop %v704
        %v706 = vmul.f32 %v701, %v705
        %707 = vrot.lane.b32.xlu0 %v471, 40
        %v708 = vpop.permute.xlu0 %707
        %v711 = vsel %vm476, %v706, 0
        %713 = vmatpush.msra.mxu0 0.0
        %714 = vmatpush.msra.mxu0 0.0
        %715 = vmatpush.msra.mxu0 0.0
        %716 = vmatpush.msra.mxu0 0.0
        %717 = vmatpush.msra.mxu0 0.0
        %718 = vmatpush.msra.mxu0 0.0
        %719 = vmatpush.msra.mxu0 0.0
        %720 = vmatpush.msra.mxu0 0.0
        %721 = vmatpush.msra.mxu0 0.0
        %722 = vmatpush.msra.mxu0 0.0
        %723 = vmatpush.msra.mxu0 0.0
        %724 = vmatpush.msra.mxu0 0.0
        %725 = vmatpush.msra.mxu0 0.0
        %726 = vmatpush.msra.mxu0 0.0
        %727 = vmatpush.msra.mxu0 0.0
        %728 = vmatpush.msra.mxu0 %v708
        %729 = vmatmul.f32.gmra.mxu0 %v711
        %v730 = vpop.f32.mrf.mxu0
        %v731 = vadd.f32 0.0, %v730
        %732 = vdwg.mxu0
        %734 = vrot.lane.b32.xlu0 %v601, 8
        %v735 = vpop.permute.xlu0 %734
        %738 = vrot.lane.b32.xlu0 %v666, 16
        %v739 = vpop.permute.xlu0 %738
        %742 = vrot.lane.b32.xlu0 %v731, 24
        %v743 = vpop.permute.xlu0 %742
        %v745 = vsel %vm476, %v536, %v735
        %vm746 = vcmask 130048
        %v747 = vsel %vm746, %v745, %v739
        %vm748 = vcmask 195584
        %v749 = vsel %vm748, %v747, %v743
        %v750 = vld [vmem:[%s376 + $0x8] sm:$0xff]
        %v751 = vld [vmem:[%s376 + $0x30] sm:$0xff]
        %v752 = vld [vmem:[%s376 + $0x58] sm:$0xff]
        %v753 = vld [vmem:[%s376 + $0x80] sm:$0xff]
        %v754 = vperm.slane %v442, 1
        %v756 = vsel %vm449, %v749, 0
        %758 = vmatpush.msra.mxu0 0.0
        %759 = vmatpush.msra.mxu0 0.0
        %760 = vmatpush.msra.mxu0 0.0
        %761 = vmatpush.msra.mxu0 0.0
        %762 = vmatpush.msra.mxu0 0.0
        %763 = vmatpush.msra.mxu0 0.0
        %764 = vmatpush.msra.mxu0 0.0
        %765 = vmatpush.msra.mxu0 0.0
        %766 = vmatpush.msra.mxu0 0.0
        %767 = vmatpush.msra.mxu0 0.0
        %768 = vmatpush.msra.mxu0 0.0
        %769 = vmatpush.msra.mxu0 0.0
        %770 = vmatpush.msra.mxu0 %v753
        %771 = vmatpush.msra.mxu0 %v752
        %772 = vmatpush.msra.mxu0 %v751
        %773 = vmatpush.msra.mxu0 %v750
        %774 = vmatmul.f32.gmra.mxu0 %v756
        %v775 = vpop.f32.mrf.mxu0
        %v776 = vadd.f32 %v754, %v775
        %777 = vdwg.mxu0
        %v778 = vadd.f32 %v441, %v776
        %v779 = vsel %vm449, %v778, 0.0
        %780 = vadd.xlane.f32.xlu0 %v779
        %v781 = vpop.xlane.xlu0 %780
        %v782 = vrcp.pop 32.0
        %v783 = vmul.f32 32.0, %v782
        %v784 = vsub.f32 1.0, %v783
        %v785 = vmul.f32 %v782, %v784
        %v786 = vadd.f32 %v782, %v785
        %vm787 = vweird.f32 %v782
        %v788 = vsel %vm787, %v782, %v786
        %v789 = vmul.f32 %v781, %v788
        %v790 = vsub.f32 %v778, %v789
        %v791 = vmul.f32 %v790, %v790
        %v792 = vsel %vm449, %v791, 0.0
        %793 = vadd.xlane.f32.xlu0 %v792
        %v794 = vpop.xlane.xlu0 %793
        %v795 = vmul.f32 %v794, %v788
        %v796 = vadd.f32 %v795, 1e-05
        %v797 = vrsqrt.pop %v796
        %v798 = vmul.f32 %v797, %v796
        %v799 = vmul.f32 %v798, %v797
        %v800 = vmul.f32 0.5, %v799
        %v801 = vsub.f32 1.5, %v800
        %v802 = vmul.f32 %v797, %v801
        %vm803 = vweird.f32 %v796
        %vm804 = vweird.f32 %v797
        %vm805 = vmor %vm803, %vm804
        %v806 = vsel %vm805, %v797, %v802
        %v807 = vmul.f32 %v790, %v806
        %v808 = vperm.slane %v442, 2
        %v809 = vmul.f32 %v807, %v808
        %v810 = vperm.slane %v442, 3
        %v811 = vadd.f32 %v809, %v810
        %812 = vst.msk [vmem:[#allocation3] sm:$0xff] %vm449, %v811
        %p813 = scmp.ge.s32.totalorder %s21, 2
        // Predicated region
        $region65: #{keystroke_transformer_forward.1} parent=55 // pred_check
          %p814 = pneg %p813
        $region66: #{keystroke_transformer_forward.1} parent=55 // pred_check_branch
          %816 = sbr.rel (%p814) target = $region68
        $region67: #{keystroke_transformer_forward.1} parent=55 // pred_region
          %v817 = vld [vmem:[#allocation4] sm:$0xff]
          %v818 = vld [vmem:[%s376 + $0x10] sm:$0xff]
          %v819 = vld [vmem:[%s376 + $0x38] sm:$0xff]
          %v820 = vld [vmem:[%s376 + $0x60] sm:$0xff]
          %v821 = vld [vmem:[%s376 + $0x88] sm:$0xff]
          %v822 = vperm.slane %v442, 4
          %v824 = vsel %vm449, %v811, 0
          %826 = vmatpush.msra.mxu0 0.0
          %827 = vmatpush.msra.mxu0 0.0
          %828 = vmatpush.msra.mxu0 0.0
          %829 = vmatpush.msra.mxu0 0.0
          %830 = vmatpush.msra.mxu0 0.0
          %831 = vmatpush.msra.mxu0 0.0
          %832 = vmatpush.msra.mxu0 0.0
          %833 = vmatpush.msra.mxu0 0.0
          %834 = vmatpush.msra.mxu0 0.0
          %835 = vmatpush.msra.mxu0 0.0
          %836 = vmatpush.msra.mxu0 0.0
          %837 = vmatpush.msra.mxu0 0.0
          %838 = vmatpush.msra.mxu0 %v821
          %839 = vmatpush.msra.mxu0 %v820
          %840 = vmatpush.msra.mxu0 %v819
          %841 = vmatpush.msra.mxu0 %v818
          %842 = vmatmul.f32.gmra.mxu0 %v824
          %v843 = vpop.f32.mrf.mxu0
          %v844 = vadd.f32 %v822, %v843
          %845 = vdwg.mxu0
          %v846 = vld [vmem:[%s376 + $0x18] sm:$0xff]
          %v847 = vld [vmem:[%s376 + $0x40] sm:$0xff]
          %v848 = vld [vmem:[%s376 + $0x68] sm:$0xff]
          %v849 = vld [vmem:[%s376 + $0x90] sm:$0xff]
          %v850 = vperm.slane %v442, 5
          %v852 = vsel %vm449, %v817, 0
          %854 = vmatpush.msra.mxu0 0.0
          %855 = vmatpush.msra.mxu0 0.0
          %856 = vmatpush.msra.mxu0 0.0
          %857 = vmatpush.msra.mxu0 0.0
          %858 = vmatpush.msra.mxu0 0.0
          %859 = vmatpush.msra.mxu0 0.0
          %860 = vmatpush.msra.mxu0 0.0
          %861 = vmatpush.msra.mxu0 0.0
          %862 = vmatpush.msra.mxu0 0.0
          %863 = vmatpush.msra.mxu0 0.0
          %864 = vmatpush.msra.mxu0 0.0
          %865 = vmatpush.msra.mxu0 0.0
          %866 = vmatpush.msra.mxu0 %v849
          %867 = vmatpush.msra.mxu0 %v848
          %868 = vmatpush.msra.mxu0 %v847
          %869 = vmatpush.msra.mxu0 %v846
          %870 = vmatmul.f32.gmra.mxu0 %v852
          %v871 = vpop.f32.mrf.mxu0
          %v872 = vadd.f32 %v850, %v871
          %873 = vdwg.mxu0
          %v875 = vsel %vm476, %v844, 0
          %v878 = vsel %vm476, %v872, 0
          %880 = vmatpush.xpose.msra.mxu0 0.0
          %881 = vmatpush.xpose.msra.mxu0 0.0
          %882 = vmatpush.xpose.msra.mxu0 0.0
          %883 = vmatpush.xpose.msra.mxu0 0.0
          %884 = vmatpush.xpose.msra.mxu0 0.0
          %885 = vmatpush.xpose.msra.mxu0 0.0
          %886 = vmatpush.xpose.msra.mxu0 0.0
          %887 = vmatpush.xpose.msra.mxu0 0.0
          %888 = vmatpush.xpose.msra.mxu0 0.0
          %889 = vmatpush.xpose.msra.mxu0 0.0
          %890 = vmatpush.xpose.msra.mxu0 0.0
          %891 = vmatpush.xpose.msra.mxu0 0.0
          %892 = vmatpush.xpose.msra.mxu0 0.0
          %893 = vmatpush.xpose.msra.mxu0 0.0
          %894 = vmatpush.xpose.msra.mxu0 0.0
          %895 = vmatpush.xpose.msra.mxu0 %v878
          %896 = vmatmul.f32.gmra.mxu0 %v875
          %v897 = vpop.f32.mrf.mxu0
          %v898 = vadd.f32 0.0, %v897
          %899 = vdwg.mxu0
          %v900 = vsel %vm476, %v898, -inf
          %901 = vmax.xlane.f32.xlu0 %v900
          %v902 = vpop.xlane.xlu0 %901
          %v903 = vsub.f32 %v898, %v902
          %v904 = vmul.f32 %v903, 1.442695
          %v905 = vpow.pop %v904
          %v906 = vsel %vm476, %v905, 0.0
          %907 = vadd.xlane.f32.xlu0 %v906
          %v908 = vpop.xlane.xlu0 %907
          %v909 = vrcp.pop %v908
          %v910 = vmul.f32 %v905, %v909
          %911 = vrot.lane.b32.xlu0 %v872, 96
          %v912 = vpop.permute.xlu0 %911
          %v915 = vsel %vm476, %v910, 0
          %917 = vmatpush.msra.mxu0 0.0
          %918 = vmatpush.msra.mxu0 0.0
          %919 = vmatpush.msra.mxu0 0.0
          %920 = vmatpush.msra.mxu0 0.0
          %921 = vmatpush.msra.mxu0 0.0
          %922 = vmatpush.msra.mxu0 0.0
          %923 = vmatpush.msra.mxu0 0.0
          %924 = vmatpush.msra.mxu0 0.0
          %925 = vmatpush.msra.mxu0 0.0
          %926 = vmatpush.msra.mxu0 0.0
          %927 = vmatpush.msra.mxu0 0.0
          %928 = vmatpush.msra.mxu0 0.0
          %929 = vmatpush.msra.mxu0 0.0
          %930 = vmatpush.msra.mxu0 0.0
          %931 = vmatpush.msra.mxu0 0.0
          %932 = vmatpush.msra.mxu0 %v912
          %933 = vmatmul.f32.gmra.mxu0 %v915
          %v934 = vpop.f32.mrf.mxu0
          %v935 = vadd.f32 0.0, %v934
          %936 = vdwg.mxu0
          %937 = vrot.lane.b32.xlu0 %v844, 120
          %v938 = vpop.permute.xlu0 %937
          %939 = vrot.lane.b32.xlu0 %v872, 120
          %v940 = vpop.permute.xlu0 %939
          %v941 = vsel %vm476, %v938, 0
          %v943 = vsel %vm476, %v940, 0
          %945 = vmatpush.xpose.msra.mxu0 0.0
          %946 = vmatpush.xpose.msra.mxu0 0.0
          %947 = vmatpush.xpose.msra.mxu0 0.0
          %948 = vmatpush.xpose.msra.mxu0 0.0
          %949 = vmatpush.xpose.msra.mxu0 0.0
          %950 = vmatpush.xpose.msra.mxu0 0.0
          %951 = vmatpush.xpose.msra.mxu0 0.0
          %952 = vmatpush.xpose.msra.mxu0 0.0
          %953 = vmatpush.xpose.msra.mxu0 0.0
          %954 = vmatpush.xpose.msra.mxu0 0.0
          %955 = vmatpush.xpose.msra.mxu0 0.0
          %956 = vmatpush.xpose.msra.mxu0 0.0
          %957 = vmatpush.xpose.msra.mxu0 0.0
          %958 = vmatpush.xpose.msra.mxu0 0.0
          %959 = vmatpush.xpose.msra.mxu0 0.0
          %960 = vmatpush.xpose.msra.mxu0 %v943
          %961 = vmatmul.f32.gmra.mxu0 %v941
          %v962 = vpop.f32.mrf.mxu0
          %v963 = vadd.f32 0.0, %v962
          %964 = vdwg.mxu0
          %v965 = vsel %vm476, %v963, -inf
          %966 = vmax.xlane.f32.xlu0 %v965
          %v967 = vpop.xlane.xlu0 %966
          %v968 = vsub.f32 %v963, %v967
          %v969 = vmul.f32 %v968, 1.442695
          %v970 = vpow.pop %v969
          %v971 = vsel %vm476, %v970, 0.0
          %972 = vadd.xlane.f32.xlu0 %v971
          %v973 = vpop.xlane.xlu0 %972
          %v974 = vrcp.pop %v973
          %v975 = vmul.f32 %v970, %v974
          %976 = vrot.lane.b32.xlu0 %v872, 88
          %v977 = vpop.permute.xlu0 %976
          %v980 = vsel %vm476, %v975, 0
          %982 = vmatpush.msra.mxu0 0.0
          %983 = vmatpush.msra.mxu0 0.0
          %984 = vmatpush.msra.mxu0 0.0
          %985 = vmatpush.msra.mxu0 0.0
          %986 = vmatpush.msra.mxu0 0.0
          %987 = vmatpush.msra.mxu0 0.0
          %988 = vmatpush.msra.mxu0 0.0
          %989 = vmatpush.msra.mxu0 0.0
          %990 = vmatpush.msra.mxu0 0.0
          %991 = vmatpush.msra.mxu0 0.0
          %992 = vmatpush.msra.mxu0 0.0
          %993 = vmatpush.msra.mxu0 0.0
          %994 = vmatpush.msra.mxu0 0.0
          %995 = vmatpush.msra.mxu0 0.0
          %996 = vmatpush.msra.mxu0 0.0
          %997 = vmatpush.msra.mxu0 %v977
          %998 = vmatmul.f32.gmra.mxu0 %v980
          %v999 = vpop.f32.mrf.mxu0
          %v1000 = vadd.f32 0.0, %v999
          %1001 = vdwg.mxu0
          %1002 = vrot.lane.b32.xlu0 %v844, 112
          %v1003 = vpop.permute.xlu0 %1002
          %1004 = vrot.lane.b32.xlu0 %v872, 112
          %v1005 = vpop.permute.xlu0 %1004
          %v1006 = vsel %vm476, %v1003, 0
          %v1008 = vsel %vm476, %v1005, 0
          %1010 = vmatpush.xpose.msra.mxu0 0.0
          %1011 = vmatpush.xpose.msra.mxu0 0.0
          %1012 = vmatpush.xpose.msra.mxu0 0.0
          %1013 = vmatpush.xpose.msra.mxu0 0.0
          %1014 = vmatpush.xpose.msra.mxu0 0.0
          %1015 = vmatpush.xpose.msra.mxu0 0.0
          %1016 = vmatpush.xpose.msra.mxu0 0.0
          %1017 = vmatpush.xpose.msra.mxu0 0.0
          %1018 = vmatpush.xpose.msra.mxu0 0.0
          %1019 = vmatpush.xpose.msra.mxu0 0.0
          %1020 = vmatpush.xpose.msra.mxu0 0.0
          %1021 = vmatpush.xpose.msra.mxu0 0.0
          %1022 = vmatpush.xpose.msra.mxu0 0.0
          %1023 = vmatpush.xpose.msra.mxu0 0.0
          %1024 = vmatpush.xpose.msra.mxu0 0.0
          %1025 = vmatpush.xpose.msra.mxu0 %v1008
          %1026 = vmatmul.f32.gmra.mxu0 %v1006
          %v1027 = vpop.f32.mrf.mxu0
          %v1028 = vadd.f32 0.0, %v1027
          %1029 = vdwg.mxu0
          %v1030 = vsel %vm476, %v1028, -inf
          %1031 = vmax.xlane.f32.xlu0 %v1030
          %v1032 = vpop.xlane.xlu0 %1031
          %v1033 = vsub.f32 %v1028, %v1032
          %v1034 = vmul.f32 %v1033, 1.442695
          %v1035 = vpow.pop %v1034
          %v1036 = vsel %vm476, %v1035, 0.0
          %1037 = vadd.xlane.f32.xlu0 %v1036
          %v1038 = vpop.xlane.xlu0 %1037
          %v1039 = vrcp.pop %v1038
          %v1040 = vmul.f32 %v1035, %v1039
          %1041 = vrot.lane.b32.xlu0 %v872, 80
          %v1042 = vpop.permute.xlu0 %1041
          %v1045 = vsel %vm476, %v1040, 0
          %1047 = vmatpush.msra.mxu0 0.0
          %1048 = vmatpush.msra.mxu0 0.0
          %1049 = vmatpush.msra.mxu0 0.0
          %1050 = vmatpush.msra.mxu0 0.0
          %1051 = vmatpush.msra.mxu0 0.0
          %1052 = vmatpush.msra.mxu0 0.0
          %1053 = vmatpush.msra.mxu0 0.0
          %1054 = vmatpush.msra.mxu0 0.0
          %1055 = vmatpush.msra.mxu0 0.0
          %1056 = vmatpush.msra.mxu0 0.0
          %1057 = vmatpush.msra.mxu0 0.0
          %1058 = vmatpush.msra.mxu0 0.0
          %1059 = vmatpush.msra.mxu0 0.0
          %1060 = vmatpush.msra.mxu0 0.0
          %1061 = vmatpush.msra.mxu0 0.0
          %1062 = vmatpush.msra.mxu0 %v1042
          %1063 = vmatmul.f32.gmra.mxu0 %v1045
          %v1064 = vpop.f32.mrf.mxu0
          %v1065 = vadd.f32 0.0, %v1064
          %1066 = vdwg.mxu0
          %1067 = vrot.lane.b32.xlu0 %v844, 104
          %v1068 = vpop.permute.xlu0 %1067
          %1069 = vrot.lane.b32.xlu0 %v872, 104
          %v1070 = vpop.permute.xlu0 %1069
          %v1071 = vsel %vm476, %v1068, 0
          %v1073 = vsel %vm476, %v1070, 0
          %1075 = vmatpush.xpose.msra.mxu0 0.0
          %1076 = vmatpush.xpose.msra.mxu0 0.0
          %1077 = vmatpush.xpose.msra.mxu0 0.0
          %1078 = vmatpush.xpose.msra.mxu0 0.0
          %1079 = vmatpush.xpose.msra.mxu0 0.0
          %1080 = vmatpush.xpose.msra.mxu0 0.0
          %1081 = vmatpush.xpose.msra.mxu0 0.0
          %1082 = vmatpush.xpose.msra.mxu0 0.0
          %1083 = vmatpush.xpose.msra.mxu0 0.0
          %1084 = vmatpush.xpose.msra.mxu0 0.0
          %1085 = vmatpush.xpose.msra.mxu0 0.0
          %1086 = vmatpush.xpose.msra.mxu0 0.0
          %1087 = vmatpush.xpose.msra.mxu0 0.0
          %1088 = vmatpush.xpose.msra.mxu0 0.0
          %1089 = vmatpush.xpose.msra.mxu0 0.0
          %1090 = vmatpush.xpose.msra.mxu0 %v1073
          %1091 = vmatmul.f32.gmra.mxu0 %v1071
          %v1092 = vpop.f32.mrf.mxu0
          %v1093 = vadd.f32 0.0, %v1092
          %1094 = vdwg.mxu0
          %v1095 = vsel %vm476, %v1093, -inf
          %1096 = vmax.xlane.f32.xlu0 %v1095
          %v1097 = vpop.xlane.xlu0 %1096
          %v1098 = vsub.f32 %v1093, %v1097
          %v1099 = vmul.f32 %v1098, 1.442695
          %v1100 = vpow.pop %v1099
          %v1101 = vsel %vm476, %v1100, 0.0
          %1102 = vadd.xlane.f32.xlu0 %v1101
          %v1103 = vpop.xlane.xlu0 %1102
          %v1104 = vrcp.pop %v1103
          %v1105 = vmul.f32 %v1100, %v1104
          %1106 = vrot.lane.b32.xlu0 %v872, 72
          %v1107 = vpop.permute.xlu0 %1106
          %v1110 = vsel %vm476, %v1105, 0
          %1112 = vmatpush.msra.mxu0 0.0
          %1113 = vmatpush.msra.mxu0 0.0
          %1114 = vmatpush.msra.mxu0 0.0
          %1115 = vmatpush.msra.mxu0 0.0
          %1116 = vmatpush.msra.mxu0 0.0
          %1117 = vmatpush.msra.mxu0 0.0
          %1118 = vmatpush.msra.mxu0 0.0
          %1119 = vmatpush.msra.mxu0 0.0
          %1120 = vmatpush.msra.mxu0 0.0
          %1121 = vmatpush.msra.mxu0 0.0
          %1122 = vmatpush.msra.mxu0 0.0
          %1123 = vmatpush.msra.mxu0 0.0
          %1124 = vmatpush.msra.mxu0 0.0
          %1125 = vmatpush.msra.mxu0 0.0
          %1126 = vmatpush.msra.mxu0 0.0
          %1127 = vmatpush.msra.mxu0 %v1107
          %1128 = vmatmul.f32.gmra.mxu0 %v1110
          %v1129 = vpop.f32.mrf.mxu0
          %v1130 = vadd.f32 0.0, %v1129
          %1131 = vdwg.mxu0
          %1133 = vrot.lane.b32.xlu0 %v1000, 8
          %v1134 = vpop.permute.xlu0 %1133
          %1137 = vrot.lane.b32.xlu0 %v1065, 16
          %v1138 = vpop.permute.xlu0 %1137
          %1141 = vrot.lane.b32.xlu0 %v1130, 24
          %v1142 = vpop.permute.xlu0 %1141
          %v1144 = vsel %vm476, %v935, %v1134
          %v1145 = vsel %vm746, %v1144, %v1138
          %v1146 = vsel %vm748, %v1145, %v1142
          %v1147 = vld [vmem:[%s376 + $0x20] sm:$0xff]
          %v1148 = vld [vmem:[%s376 + $0x48] sm:$0xff]
          %v1149 = vld [vmem:[%s376 + $0x70] sm:$0xff]
          %v1150 = vld [vmem:[%s376 + $0x98] sm:$0xff]
          %v1151 = vperm.slane %v442, 6
          %v1153 = vsel %vm449, %v1146, 0
          %1155 = vmatpush.msra.mxu0 0.0
          %1156 = vmatpush.msra.mxu0 0.0
          %1157 = vmatpush.msra.mxu0 0.0
          %1158 = vmatpush.msra.mxu0 0.0
          %1159 = vmatpush.msra.mxu0 0.0
          %1160 = vmatpush.msra.mxu0 0.0
          %1161 = vmatpush.msra.mxu0 0.0
          %1162 = vmatpush.msra.mxu0 0.0
          %1163 = vmatpush.msra.mxu0 0.0
          %1164 = vmatpush.msra.mxu0 0.0
          %1165 = vmatpush.msra.mxu0 0.0
          %1166 = vmatpush.msra.mxu0 0.0
          %1167 = vmatpush.msra.mxu0 %v1150
          %1168 = vmatpush.msra.mxu0 %v1149
          %1169 = vmatpush.msra.mxu0 %v1148
          %1170 = vmatpush.msra.mxu0 %v1147
          %1171 = vmatmul.f32.gmra.mxu0 %v1153
          %v1172 = vpop.f32.mrf.mxu0
          %v1173 = vadd.f32 %v1151, %v1172
          %1174 = vdwg.mxu0
          %v1175 = vadd.f32 %v811, %v1173
          %v1176 = vsel %vm449, %v1175, 0.0
          %1177 = vadd.xlane.f32.xlu0 %v1176
          %v1178 = vpop.xlane.xlu0 %1177
          %v1179 = vmul.f32 %v1178, %v788
          %v1180 = vsub.f32 %v1175, %v1179
          %v1181 = vmul.f32 %v1180, %v1180
          %v1182 = vsel %vm449, %v1181, 0.0
          %1183 = vadd.xlane.f32.xlu0 %v1182
          %v1184 = vpop.xlane.xlu0 %1183
          %v1185 = vmul.f32 %v1184, %v788
          %v1186 = vadd.f32 %v1185, 1e-05
          %v1187 = vrsqrt.pop %v1186
          %v1188 = vmul.f32 %v1187, %v1186
          %v1189 = vmul.f32 %v1188, %v1187
          %v1190 = vmul.f32 0.5, %v1189
          %v1191 = vsub.f32 1.5, %v1190
          %v1192 = vmul.f32 %v1187, %v1191
          %vm1193 = vweird.f32 %v1186
          %vm1194 = vweird.f32 %v1187
          %vm1195 = vmor %vm1193, %vm1194
          %v1196 = vsel %vm1195, %v1187, %v1192
          %v1197 = vmul.f32 %v1180, %v1196
          %v1198 = vperm.slane %v442, 7
          %v1199 = vmul.f32 %v1197, %v1198
          %v1200 = vperm.slane %v443, 0
          %v1201 = vadd.f32 %v1199, %v1200
          %1202 = vst.msk [vmem:[#allocation3] sm:$0xff] %vm449, %v1201
        $region68: #{keystroke_transformer_forward.1} parent=55 // pred_fallthru
          _
        %v1203 = vld [vmem:[#allocation3] sm:$0xff]
        %v1204 = vpack.c.bf16 %v1203, %v1203
        %v1205 = vld [vmem:[%s390] sm:$0xff]
        %v1206 = vld [vmem:[%s390 + $0x8] sm:$0xff]
        %v1207 = vld [vmem:[%s390 + $0x10] sm:$0xff]
        %v1208 = vld [vmem:[%s390 + $0x18] sm:$0xff]
        %v1209 = vld [vmem:[%s390 + $0x20] sm:$0xff]
        %v1210 = vld [vmem:[%s390 + $0x28] sm:$0xff]
        %v1211 = vld [vmem:[%s390 + $0x30] sm:$0xff]
        %v1212 = vld [vmem:[%s390 + $0x38] sm:$0xff]
        %v1213 = vld [vmem:[%s390 + $0x40] sm:$0xff]
        %v1214 = vld [vmem:[%s390 + $0x48] sm:$0xff]
        %v1215 = vld [vmem:[%s390 + $0x50] sm:$0xff]
        %v1216 = vld [vmem:[%s390 + $0x58] sm:$0xff]
        %v1217 = vld [vmem:[%s390 + $0x60] sm:$0xff]
        %v1218 = vld [vmem:[%s390 + $0x68] sm:$0xff]
        %v1219 = vld [vmem:[%s390 + $0x70] sm:$0xff]
        %v1220 = vld [vmem:[%s390 + $0x78] sm:$0xff]
        %v1221 = vld [vmem:[%s390 + $0x80] sm:$0xff]
        %v1222 = vld [vmem:[%s390 + $0x88] sm:$0xff]
        %v1223 = vld [vmem:[%s390 + $0x90] sm:$0xff]
        %v1224 = vld [vmem:[%s390 + $0x98] sm:$0xff]
        %v1225 = vld [vmem:[%s390 + $0xa0] sm:$0xff]
        %v1226 = vld [vmem:[%s390 + $0xa8] sm:$0xff]
        %v1227 = vld [vmem:[%s390 + $0xb0] sm:$0xff]
        %v1228 = vld [vmem:[%s390 + $0xb8] sm:$0xff]
        %v1229 = vld [vmem:[%s390 + $0xc0] sm:$0xff]
        %v1230 = vld [vmem:[%s390 + $0xc8] sm:$0xff]
        %v1231 = vld [vmem:[%s390 + $0xd0] sm:$0xff]
        %v1232 = vld [vmem:[%s390 + $0xd8] sm:$0xff]
        %v1233 = vld [vmem:[%s390 + $0xe0] sm:$0xff]
        %v1234 = vld [vmem:[%s390 + $0xe8] sm:$0xff]
        %v1235 = vld [vmem:[%s390 + $0xf0] sm:$0xff]
        %v1236 = vld [vmem:[%s390 + $0xf8] sm:$0xff]
        %v1237 = vld [vmem:[%s385] sm:$0xff]
        %v1238 = vld [vmem:[%s385 + $0x8] sm:$0xff]
        %v1241 = vperm.slane %v1237, 0
        %v1242 = vperm.slane %v1237, 1
        %v1243 = vperm.slane %v1237, 2
        %v1244 = vperm.slane %v1237, 3
        %v1245 = vperm.slane %v1237, 4
        %v1246 = vperm.slane %v1237, 5
        %v1247 = vperm.slane %v1237, 6
        %v1248 = vperm.slane %v1237, 7
        %v1249 = vperm.slane %v1238, 0
        %v1250 = vperm.slane %v1238, 1
        %v1251 = vperm.slane %v1238, 2
        %v1252 = vperm.slane %v1238, 3
        %v1253 = vperm.slane %v1238, 4
        %v1254 = vperm.slane %v1238, 5
        %v1255 = vperm.slane %v1238, 6
        %v1256 = vperm.slane %v1238, 7
        %v1305 = vunpack.c.l.b16 %v1205
        %v1306 = vunpack.c.h.b16 %v1205
        %v1307 = vunpack.c.l.b16 %v1206
        %v1308 = vunpack.c.h.b16 %v1206
        %v1309 = vunpack.c.l.b16 %v1207
        %v1310 = vunpack.c.h.b16 %v1207
        %v1311 = vunpack.c.l.b16 %v1208
        %v1312 = vunpack.c.h.b16 %v1208
        %v1313 = vunpack.c.l.b16 %v1209
        %v1314 = vunpack.c.h.b16 %v1209
        %v1315 = vunpack.c.l.b16 %v1210
        %v1316 = vunpack.c.h.b16 %v1210
        %v1317 = vunpack.c.l.b16 %v1211
        %v1318 = vunpack.c.h.b16 %v1211
        %v1319 = vunpack.c.l.b16 %v1212
        %v1320 = vunpack.c.h.b16 %v1212
        %v1321 = vunpack.c.l.b16 %v1213
        %v1322 = vunpack.c.h.b16 %v1213
        %v1323 = vunpack.c.l.b16 %v1214
        %v1324 = vunpack.c.h.b16 %v1214
        %v1325 = vunpack.c.l.b16 %v1215
        %v1326 = vunpack.c.h.b16 %v1215
        %v1327 = vunpack.c.l.b16 %v1216
        %v1328 = vunpack.c.h.b16 %v1216
        %v1329 = vunpack.c.l.b16 %v1217
        %v1330 = vunpack.c.h.b16 %v1217
        %v1331 = vunpack.c.l.b16 %v1218
        %v1332 = vunpack.c.h.b16 %v1218
        %v1333 = vunpack.c.l.b16 %v1219
        %v1334 = vunpack.c.h.b16 %v1219
        %v1335 = vunpack.c.l.b16 %v1220
        %v1336 = vunpack.c.h.b16 %v1220
        %v1337 = vunpack.c.l.b16 %v1221
        %v1338 = vunpack.c.h.b16 %v1221
        %v1339 = vunpack.c.l.b16 %v1222
        %v1340 = vunpack.c.h.b16 %v1222
        %v1341 = vunpack.c.l.b16 %v1223
        %v1342 = vunpack.c.h.b16 %v1223
        %v1343 = vunpack.c.l.b16 %v1224
        %v1344 = vunpack.c.h.b16 %v1224
        %v1345 = vunpack.c.l.b16 %v1225
        %v1346 = vunpack.c.h.b16 %v1225
        %v1347 = vunpack.c.l.b16 %v1226
        %v1348 = vunpack.c.h.b16 %v1226
        %v1349 = vunpack.c.l.b16 %v1227
        %v1350 = vunpack.c.h.b16 %v1227
        %v1351 = vunpack.c.l.b16 %v1228
        %v1352 = vunpack.c.h.b16 %v1228
        %v1353 = vunpack.c.l.b16 %v1229
        %v1354 = vunpack.c.h.b16 %v1229
        %v1355 = vunpack.c.l.b16 %v1230
        %v1356 = vunpack.c.h.b16 %v1230
        %v1357 = vunpack.c.l.b16 %v1231
        %v1358 = vunpack.c.h.b16 %v1231
        %v1359 = vunpack.c.l.b16 %v1232
        %v1360 = vunpack.c.h.b16 %v1232
        %v1361 = vunpack.c.l.b16 %v1233
        %v1362 = vunpack.c.h.b16 %v1233
        %v1363 = vunpack.c.l.b16 %v1234
        %v1364 = vunpack.c.h.b16 %v1234
        %v1365 = vunpack.c.l.b16 %v1235
        %v1366 = vunpack.c.h.b16 %v1235
        %v1367 = vunpack.c.l.b16 %v1236
        %v1368 = vunpack.c.h.b16 %v1236
        %v1369 = vpack.c.b16 %v1321, %v1305
        %v1370 = vpack.c.b16 %v1322, %v1306
        %v1371 = vpack.c.b16 %v1323, %v1307
        %v1372 = vpack.c.b16 %v1324, %v1308
        %v1373 = vpack.c.b16 %v1325, %v1309
        %v1374 = vpack.c.b16 %v1326, %v1310
        %v1375 = vpack.c.b16 %v1327, %v1311
        %v1376 = vpack.c.b16 %v1328, %v1312
        %v1377 = vpack.c.b16 %v1329, %v1313
        %v1378 = vpack.c.b16 %v1330, %v1314
        %v1379 = vpack.c.b16 %v1331, %v1315
        %v1380 = vpack.c.b16 %v1332, %v1316
        %v1381 = vpack.c.b16 %v1333, %v1317
        %v1382 = vpack.c.b16 %v1334, %v1318
        %v1383 = vpack.c.b16 %v1335, %v1319
        %v1384 = vpack.c.b16 %v1336, %v1320
        %v1385 = vpack.c.b16 %v1353, %v1337
        %v1386 = vpack.c.b16 %v1354, %v1338
        %v1387 = vpack.c.b16 %v1355, %v1339
        %v1388 = vpack.c.b16 %v1356, %v1340
        %v1389 = vpack.c.b16 %v1357, %v1341
        %v1390 = vpack.c.b16 %v1358, %v1342
        %v1391 = vpack.c.b16 %v1359, %v1343
        %v1392 = vpack.c.b16 %v1360, %v1344
        %v1393 = vpack.c.b16 %v1361, %v1345
        %v1394 = vpack.c.b16 %v1362, %v1346
        %v1395 = vpack.c.b16 %v1363, %v1347
        %v1396 = vpack.c.b16 %v1364, %v1348
        %v1397 = vpack.c.b16 %v1365, %v1349
        %v1398 = vpack.c.b16 %v1366, %v1350
        %v1399 = vpack.c.b16 %v1367, %v1351
        %v1400 = vpack.c.b16 %v1368, %v1352
        %v1434 = vsel %vm449, %v1204, 0
        %1436 = vmatpush.bf16.msra.mxu0 0
        %1437 = vmatpush.bf16.msra.mxu0 0
        %1438 = vmatpush.bf16.msra.mxu0 0
        %1439 = vmatpush.bf16.msra.mxu0 0
        %1440 = vmatpush.bf16.msra.mxu0 0
        %1441 = vmatpush.bf16.msra.mxu0 0
        %1442 = vmatpush.bf16.msra.mxu0 %v1385
        %1443 = vmatpush.bf16.msra.mxu0 %v1369
        %1444 = vmatmul.bf16.gmra.mxu0 %v1434
        %v1445 = vpop.f32.mrf.mxu0
        %v1446 = vadd.f32 %v1241, %v1445
        %v1447 = vpop.f32.mrf.mxu0
        %1448 = vdwg.mxu0
        %1449 = vmatpush.bf16.msra.mxu0 0
        %1450 = vmatpush.bf16.msra.mxu0 0
        %1451 = vmatpush.bf16.msra.mxu0 0
        %1452 = vmatpush.bf16.msra.mxu0 0
        %1453 = vmatpush.bf16.msra.mxu0 0
        %1454 = vmatpush.bf16.msra.mxu0 0
        %1455 = vmatpush.bf16.msra.mxu0 %v1386
        %1456 = vmatpush.bf16.msra.mxu0 %v1370
        %1457 = vmatmul.bf16.gmra.mxu0 %v1434
        %v1458 = vpop.f32.mrf.mxu0
        %v1459 = vadd.f32 %v1242, %v1458
        %v1460 = vpop.f32.mrf.mxu0
        %1461 = vdwg.mxu0
        %1462 = vmatpush.bf16.msra.mxu0 0
        %1463 = vmatpush.bf16.msra.mxu0 0
        %1464 = vmatpush.bf16.msra.mxu0 0
        %1465 = vmatpush.bf16.msra.mxu0 0
        %1466 = vmatpush.bf16.msra.mxu0 0
        %1467 = vmatpush.bf16.msra.mxu0 0
        %1468 = vmatpush.bf16.msra.mxu0 %v1387
        %1469 = vmatpush.bf16.msra.mxu0 %v1371
        %1470 = vmatmul.bf16.gmra.mxu0 %v1434
        %v1471 = vpop.f32.mrf.mxu0
        %v1472 = vadd.f32 %v1243, %v1471
        %v1473 = vpop.f32.mrf.mxu0
        %1474 = vdwg.mxu0
        %1475 = vmatpush.bf16.msra.mxu0 0
        %1476 = vmatpush.bf16.msra.mxu0 0
        %1477 = vmatpush.bf16.msra.mxu0 0
        %1478 = vmatpush.bf16.msra.mxu0 0
        %1479 = vmatpush.bf16.msra.mxu0 0
        %1480 = vmatpush.bf16.msra.mxu0 0
        %1481 = vmatpush.bf16.msra.mxu0 %v1388
        %1482 = vmatpush.bf16.msra.mxu0 %v1372
        %1483 = vmatmul.bf16.gmra.mxu0 %v1434
        %v1484 = vpop.f32.mrf.mxu0
        %v1485 = vadd.f32 %v1244, %v1484
        %v1486 = vpop.f32.mrf.mxu0
        %1487 = vdwg.mxu0
        %1488 = vmatpush.bf16.msra.mxu0 0
        %1489 = vmatpush.bf16.msra.mxu0 0
        %1490 = vmatpush.bf16.msra.mxu0 0
        %1491 = vmatpush.bf16.msra.mxu0 0
        %1492 = vmatpush.bf16.msra.mxu0 0
        %1493 = vmatpush.bf16.msra.mxu0 0
        %1494 = vmatpush.bf16.msra.mxu0 %v1389
        %1495 = vmatpush.bf16.msra.mxu0 %v1373
        %1496 = vmatmul.bf16.gmra.mxu0 %v1434
        %v1497 = vpop.f32.mrf.mxu0
        %v1498 = vadd.f32 %v1245, %v1497
        %v1499 = vpop.f32.mrf.mxu0
        %1500 = vdwg.mxu0
        %1501 = vmatpush.bf16.msra.mxu0 0
        %1502 = vmatpush.bf16.msra.mxu0 0
        %1503 = vmatpush.bf16.msra.mxu0 0
        %1504 = vmatpush.bf16.msra.mxu0 0
        %1505 = vmatpush.bf16.msra.mxu0 0
        %1506 = vmatpush.bf16.msra.mxu0 0
        %1507 = vmatpush.bf16.msra.mxu0 %v1390
        %1508 = vmatpush.bf16.msra.mxu0 %v1374
        %1509 = vmatmul.bf16.gmra.mxu0 %v1434
        %v1510 = vpop.f32.mrf.mxu0
        %v1511 = vadd.f32 %v1246, %v1510
        %v1512 = vpop.f32.mrf.mxu0
        %1513 = vdwg.mxu0
        %1514 = vmatpush.bf16.msra.mxu0 0
        %1515 = vmatpush.bf16.msra.mxu0 0
        %1516 = vmatpush.bf16.msra.mxu0 0
        %1517 = vmatpush.bf16.msra.mxu0 0
        %1518 = vmatpush.bf16.msra.mxu0 0
        %1519 = vmatpush.bf16.msra.mxu0 0
        %1520 = vmatpush.bf16.msra.mxu0 %v1391
        %1521 = vmatpush.bf16.msra.mxu0 %v1375
        %1522 = vmatmul.bf16.gmra.mxu0 %v1434
        %v1523 = vpop.f32.mrf.mxu0
        %v1524 = vadd.f32 %v1247, %v1523
        %v1525 = vpop.f32.mrf.mxu0
        %1526 = vdwg.mxu0
        %1527 = vmatpush.bf16.msra.mxu0 0
        %1528 = vmatpush.bf16.msra.mxu0 0
        %1529 = vmatpush.bf16.msra.mxu0 0
        %1530 = vmatpush.bf16.msra.mxu0 0
        %1531 = vmatpush.bf16.msra.mxu0 0
        %1532 = vmatpush.bf16.msra.mxu0 0
        %1533 = vmatpush.bf16.msra.mxu0 %v1392
        %1534 = vmatpush.bf16.msra.mxu0 %v1376
        %1535 = vmatmul.bf16.gmra.mxu0 %v1434
        %v1536 = vpop.f32.mrf.mxu0
        %v1537 = vadd.f32 %v1248, %v1536
        %v1538 = vpop.f32.mrf.mxu0
        %1539 = vdwg.mxu0
        %1540 = vmatpush.bf16.msra.mxu0 0
        %1541 = vmatpush.bf16.msra.mxu0 0
        %1542 = vmatpush.bf16.msra.mxu0 0
        %1543 = vmatpush.bf16.msra.mxu0 0
        %1544 = vmatpush.bf16.msra.mxu0 0
        %1545 = vmatpush.bf16.msra.mxu0 0
        %1546 = vmatpush.bf16.msra.mxu0 %v1393
        %1547 = vmatpush.bf16.msra.mxu0 %v1377
        %1548 = vmatmul.bf16.gmra.mxu0 %v1434
        %v1549 = vpop.f32.mrf.mxu0
        %v1550 = vadd.f32 %v1249, %v1549
        %v1551 = vpop.f32.mrf.mxu0
        %1552 = vdwg.mxu0
        %1553 = vmatpush.bf16.msra.mxu0 0
        %1554 = vmatpush.bf16.msra.mxu0 0
        %1555 = vmatpush.bf16.msra.mxu0 0
        %1556 = vmatpush.bf16.msra.mxu0 0
        %1557 = vmatpush.bf16.msra.mxu0 0
        %1558 = vmatpush.bf16.msra.mxu0 0
        %1559 = vmatpush.bf16.msra.mxu0 %v1394
        %1560 = vmatpush.bf16.msra.mxu0 %v1378
        %1561 = vmatmul.bf16.gmra.mxu0 %v1434
        %v1562 = vpop.f32.mrf.mxu0
        %v1563 = vadd.f32 %v1250, %v1562
        %v1564 = vpop.f32.mrf.mxu0
        %1565 = vdwg.mxu0
        %1566 = vmatpush.bf16.msra.mxu0 0
        %1567 = vmatpush.bf16.msra.mxu0 0
        %1568 = vmatpush.bf16.msra.mxu0 0
        %1569 = vmatpush.bf16.msra.mxu0 0
        %1570 = vmatpush.bf16.msra.mxu0 0
        %1571 = vmatpush.bf16.msra.mxu0 0
        %1572 = vmatpush.bf16.msra.mxu0 %v1395
        %1573 = vmatpush.bf16.msra.mxu0 %v1379
        %1574 = vmatmul.bf16.gmra.mxu0 %v1434
        %v1575 = vpop.f32.mrf.mxu0
        %v1576 = vadd.f32 %v1251, %v1575
        %v1577 = vpop.f32.mrf.mxu0
        %1578 = vdwg.mxu0
        %1579 = vmatpush.bf16.msra.mxu0 0
        %1580 = vmatpush.bf16.msra.mxu0 0
        %1581 = vmatpush.bf16.msra.mxu0 0
        %1582 = vmatpush.bf16.msra.mxu0 0
        %1583 = vmatpush.bf16.msra.mxu0 0
        %1584 = vmatpush.bf16.msra.mxu0 0
        %1585 = vmatpush.bf16.msra.mxu0 %v1396
        %1586 = vmatpush.bf16.msra.mxu0 %v1380
        %1587 = vmatmul.bf16.gmra.mxu0 %v1434
        %v1588 = vpop.f32.mrf.mxu0
        %v1589 = vadd.f32 %v1252, %v1588
        %v1590 = vpop.f32.mrf.mxu0
        %1591 = vdwg.mxu0
        %1592 = vmatpush.bf16.msra.mxu0 0
        %1593 = vmatpush.bf16.msra.mxu0 0
        %1594 = vmatpush.bf16.msra.mxu0 0
        %1595 = vmatpush.bf16.msra.mxu0 0
        %1596 = vmatpush.bf16.msra.mxu0 0
        %1597 = vmatpush.bf16.msra.mxu0 0
        %1598 = vmatpush.bf16.msra.mxu0 %v1397
        %1599 = vmatpush.bf16.msra.mxu0 %v1381
        %1600 = vmatmul.bf16.gmra.mxu0 %v1434
        %v1601 = vpop.f32.mrf.mxu0
        %v1602 = vadd.f32 %v1253, %v1601
        %v1603 = vpop.f32.mrf.mxu0
        %1604 = vdwg.mxu0
        %1605 = vmatpush.bf16.msra.mxu0 0
        %1606 = vmatpush.bf16.msra.mxu0 0
        %1607 = vmatpush.bf16.msra.mxu0 0
        %1608 = vmatpush.bf16.msra.mxu0 0
        %1609 = vmatpush.bf16.msra.mxu0 0
        %1610 = vmatpush.bf16.msra.mxu0 0
        %1611 = vmatpush.bf16.msra.mxu0 %v1398
        %1612 = vmatpush.bf16.msra.mxu0 %v1382
        %1613 = vmatmul.bf16.gmra.mxu0 %v1434
        %v1614 = vpop.f32.mrf.mxu0
        %v1615 = vadd.f32 %v1254, %v1614
        %v1616 = vpop.f32.mrf.mxu0
        %1617 = vdwg.mxu0
        %1618 = vmatpush.bf16.msra.mxu0 0
        %1619 = vmatpush.bf16.msra.mxu0 0
        %1620 = vmatpush.bf16.msra.mxu0 0
        %1621 = vmatpush.bf16.msra.mxu0 0
        %1622 = vmatpush.bf16.msra.mxu0 0
        %1623 = vmatpush.bf16.msra.mxu0 0
        %1624 = vmatpush.bf16.msra.mxu0 %v1399
        %1625 = vmatpush.bf16.msra.mxu0 %v1383
        %1626 = vmatmul.bf16.gmra.mxu0 %v1434
        %v1627 = vpop.f32.mrf.mxu0
        %v1628 = vadd.f32 %v1255, %v1627
        %v1629 = vpop.f32.mrf.mxu0
        %1630 = vdwg.mxu0
        %1631 = vmatpush.bf16.msra.mxu0 0
        %1632 = vmatpush.bf16.msra.mxu0 0
        %1633 = vmatpush.bf16.msra.mxu0 0
        %1634 = vmatpush.bf16.msra.mxu0 0
        %1635 = vmatpush.bf16.msra.mxu0 0
        %1636 = vmatpush.bf16.msra.mxu0 0
        %1637 = vmatpush.bf16.msra.mxu0 %v1400
        %1638 = vmatpush.bf16.msra.mxu0 %v1384
        %1639 = vmatmul.bf16.gmra.mxu0 %v1434
        %v1640 = vpop.f32.mrf.mxu0
        %v1641 = vadd.f32 %v1256, %v1640
        %v1642 = vpop.f32.mrf.mxu0
        %1643 = vdwg.mxu0
        %v1644 = vmax.f32 %v1446, 0.0
        %v1645 = vmax.f32 %v1459, 0.0
        %v1646 = vmax.f32 %v1472, 0.0
        %v1647 = vmax.f32 %v1485, 0.0
        %v1648 = vmax.f32 %v1498, 0.0
        %v1649 = vmax.f32 %v1511, 0.0
        %v1650 = vmax.f32 %v1524, 0.0
        %v1651 = vmax.f32 %v1537, 0.0
        %v1652 = vmax.f32 %v1550, 0.0
        %v1653 = vmax.f32 %v1563, 0.0
        %v1654 = vmax.f32 %v1576, 0.0
        %v1655 = vmax.f32 %v1589, 0.0
        %v1656 = vmax.f32 %v1602, 0.0
        %v1657 = vmax.f32 %v1615, 0.0
        %v1658 = vmax.f32 %v1628, 0.0
        %v1659 = vmax.f32 %v1641, 0.0
        %v1660 = vpack.c.bf16 %v1644, %v1644
        %v1661 = vpack.c.bf16 %v1645, %v1645
        %v1662 = vpack.c.bf16 %v1646, %v1646
        %v1663 = vpack.c.bf16 %v1647, %v1647
        %v1664 = vpack.c.bf16 %v1648, %v1648
        %v1665 = vpack.c.bf16 %v1649, %v1649
        %v1666 = vpack.c.bf16 %v1650, %v1650
        %v1667 = vpack.c.bf16 %v1651, %v1651
        %v1668 = vpack.c.bf16 %v1652, %v1652
        %v1669 = vpack.c.bf16 %v1653, %v1653
        %v1670 = vpack.c.bf16 %v1654, %v1654
        %v1671 = vpack.c.bf16 %v1655, %v1655
        %v1672 = vpack.c.bf16 %v1656, %v1656
        %v1673 = vpack.c.bf16 %v1657, %v1657
        %v1674 = vpack.c.bf16 %v1658, %v1658
        %v1675 = vpack.c.bf16 %v1659, %v1659
        %v1676 = vld [vmem:[%s395] sm:$0xf]
        %v1677 = vld [vmem:[%s395 + $0x4] sm:$0xf]
        %v1678 = vld [vmem:[%s395 + $0x8] sm:$0xf]
        %v1679 = vld [vmem:[%s395 + $0xc] sm:$0xf]
        %v1680 = vld [vmem:[%s395 + $0x10] sm:$0xf]
        %v1681 = vld [vmem:[%s395 + $0x14] sm:$0xf]
        %v1682 = vld [vmem:[%s395 + $0x18] sm:$0xf]
        %v1683 = vld [vmem:[%s395 + $0x1c] sm:$0xf]
        %v1684 = vld [vmem:[%s395 + $0x20] sm:$0xf]
        %v1685 = vld [vmem:[%s395 + $0x24] sm:$0xf]
        %v1686 = vld [vmem:[%s395 + $0x28] sm:$0xf]
        %v1687 = vld [vmem:[%s395 + $0x2c] sm:$0xf]
        %v1688 = vld [vmem:[%s395 + $0x30] sm:$0xf]
        %v1689 = vld [vmem:[%s395 + $0x34] sm:$0xf]
        %v1690 = vld [vmem:[%s395 + $0x38] sm:$0xf]
        %v1691 = vld [vmem:[%s395 + $0x3c] sm:$0xf]
        %v1692 = vld [vmem:[%s395 + $0x40] sm:$0xf]
        %v1693 = vld [vmem:[%s395 + $0x44] sm:$0xf]
        %v1694 = vld [vmem:[%s395 + $0x48] sm:$0xf]
        %v1695 = vld [vmem:[%s395 + $0x4c] sm:$0xf]
        %v1696 = vld [vmem:[%s395 + $0x50] sm:$0xf]
        %v1697 = vld [vmem:[%s395 + $0x54] sm:$0xf]
        %v1698 = vld [vmem:[%s395 + $0x58] sm:$0xf]
        %v1699 = vld [vmem:[%s395 + $0x5c] sm:$0xf]
        %v1700 = vld [vmem:[%s395 + $0x60] sm:$0xf]
        %v1701 = vld [vmem:[%s395 + $0x64] sm:$0xf]
        %v1702 = vld [vmem:[%s395 + $0x68] sm:$0xf]
        %v1703 = vld [vmem:[%s395 + $0x6c] sm:$0xf]
        %v1704 = vld [vmem:[%s395 + $0x70] sm:$0xf]
        %v1705 = vld [vmem:[%s395 + $0x74] sm:$0xf]
        %v1706 = vld [vmem:[%s395 + $0x78] sm:$0xf]
        %v1707 = vld [vmem:[%s395 + $0x7c] sm:$0xf]
        %v1708 = vld [vmem:[%s395 + $0x80] sm:$0xf]
        %v1709 = vld [vmem:[%s395 + $0x84] sm:$0xf]
        %v1710 = vld [vmem:[%s395 + $0x88] sm:$0xf]
        %v1711 = vld [vmem:[%s395 + $0x8c] sm:$0xf]
        %v1712 = vld [vmem:[%s395 + $0x90] sm:$0xf]
        %v1713 = vld [vmem:[%s395 + $0x94] sm:$0xf]
        %v1714 = vld [vmem:[%s395 + $0x98] sm:$0xf]
        %v1715 = vld [vmem:[%s395 + $0x9c] sm:$0xf]
        %v1716 = vld [vmem:[%s395 + $0xa0] sm:$0xf]
        %v1717 = vld [vmem:[%s395 + $0xa4] sm:$0xf]
        %v1718 = vld [vmem:[%s395 + $0xa8] sm:$0xf]
        %v1719 = vld [vmem:[%s395 + $0xac] sm:$0xf]
        %v1720 = vld [vmem:[%s395 + $0xb0] sm:$0xf]
        %v1721 = vld [vmem:[%s395 + $0xb4] sm:$0xf]
        %v1722 = vld [vmem:[%s395 + $0xb8] sm:$0xf]
        %v1723 = vld [vmem:[%s395 + $0xbc] sm:$0xf]
        %v1724 = vld [vmem:[%s395 + $0xc0] sm:$0xf]
        %v1725 = vld [vmem:[%s395 + $0xc4] sm:$0xf]
        %v1726 = vld [vmem:[%s395 + $0xc8] sm:$0xf]
        %v1727 = vld [vmem:[%s395 + $0xcc] sm:$0xf]
        %v1728 = vld [vmem:[%s395 + $0xd0] sm:$0xf]
        %v1729 = vld [vmem:[%s395 + $0xd4] sm:$0xf]
        %v1730 = vld [vmem:[%s395 + $0xd8] sm:$0xf]
        %v1731 = vld [vmem:[%s395 + $0xdc] sm:$0xf]
        %v1732 = vld [vmem:[%s395 + $0xe0] sm:$0xf]
        %v1733 = vld [vmem:[%s395 + $0xe4] sm:$0xf]
        %v1734 = vld [vmem:[%s395 + $0xe8] sm:$0xf]
        %v1735 = vld [vmem:[%s395 + $0xec] sm:$0xf]
        %v1736 = vld [vmem:[%s395 + $0xf0] sm:$0xf]
        %v1737 = vld [vmem:[%s395 + $0xf4] sm:$0xf]
        %v1738 = vld [vmem:[%s395 + $0xf8] sm:$0xf]
        %v1739 = vld [vmem:[%s395 + $0xfc] sm:$0xf]
        %v1740 = vld [vmem:[%s395 + $0x100] sm:$0xf]
        %v1741 = vld [vmem:[%s395 + $0x104] sm:$0xf]
        %v1742 = vld [vmem:[%s395 + $0x108] sm:$0xf]
        %v1743 = vld [vmem:[%s395 + $0x10c] sm:$0xf]
        %v1744 = vld [vmem:[%s395 + $0x110] sm:$0xf]
        %v1745 = vld [vmem:[%s395 + $0x114] sm:$0xf]
        %v1746 = vld [vmem:[%s395 + $0x118] sm:$0xf]
        %v1747 = vld [vmem:[%s395 + $0x11c] sm:$0xf]
        %v1748 = vld [vmem:[%s395 + $0x120] sm:$0xf]
        %v1749 = vld [vmem:[%s395 + $0x124] sm:$0xf]
        %v1750 = vld [vmem:[%s395 + $0x128] sm:$0xf]
        %v1751 = vld [vmem:[%s395 + $0x12c] sm:$0xf]
        %v1752 = vld [vmem:[%s395 + $0x130] sm:$0xf]
        %v1753 = vld [vmem:[%s395 + $0x134] sm:$0xf]
        %v1754 = vld [vmem:[%s395 + $0x138] sm:$0xf]
        %v1755 = vld [vmem:[%s395 + $0x13c] sm:$0xf]
        %v1756 = vld [vmem:[%s395 + $0x140] sm:$0xf]
        %v1757 = vld [vmem:[%s395 + $0x144] sm:$0xf]
        %v1758 = vld [vmem:[%s395 + $0x148] sm:$0xf]
        %v1759 = vld [vmem:[%s395 + $0x14c] sm:$0xf]
        %v1760 = vld [vmem:[%s395 + $0x150] sm:$0xf]
        %v1761 = vld [vmem:[%s395 + $0x154] sm:$0xf]
        %v1762 = vld [vmem:[%s395 + $0x158] sm:$0xf]
        %v1763 = vld [vmem:[%s395 + $0x15c] sm:$0xf]
        %v1764 = vld [vmem:[%s395 + $0x160] sm:$0xf]
        %v1765 = vld [vmem:[%s395 + $0x164] sm:$0xf]
        %v1766 = vld [vmem:[%s395 + $0x168] sm:$0xf]
        %v1767 = vld [vmem:[%s395 + $0x16c] sm:$0xf]
        %v1768 = vld [vmem:[%s395 + $0x170] sm:$0xf]
        %v1769 = vld [vmem:[%s395 + $0x174] sm:$0xf]
        %v1770 = vld [vmem:[%s395 + $0x178] sm:$0xf]
        %v1771 = vld [vmem:[%s395 + $0x17c] sm:$0xf]
        %v1772 = vld [vmem:[%s395 + $0x180] sm:$0xf]
        %v1773 = vld [vmem:[%s395 + $0x184] sm:$0xf]
        %v1774 = vld [vmem:[%s395 + $0x188] sm:$0xf]
        %v1775 = vld [vmem:[%s395 + $0x18c] sm:$0xf]
        %v1776 = vld [vmem:[%s395 + $0x190] sm:$0xf]
        %v1777 = vld [vmem:[%s395 + $0x194] sm:$0xf]
        %v1778 = vld [vmem:[%s395 + $0x198] sm:$0xf]
        %v1779 = vld [vmem:[%s395 + $0x19c] sm:$0xf]
        %v1780 = vld [vmem:[%s395 + $0x1a0] sm:$0xf]
        %v1781 = vld [vmem:[%s395 + $0x1a4] sm:$0xf]
        %v1782 = vld [vmem:[%s395 + $0x1a8] sm:$0xf]
        %v1783 = vld [vmem:[%s395 + $0x1ac] sm:$0xf]
        %v1784 = vld [vmem:[%s395 + $0x1b0] sm:$0xf]
        %v1785 = vld [vmem:[%s395 + $0x1b4] sm:$0xf]
        %v1786 = vld [vmem:[%s395 + $0x1b8] sm:$0xf]
        %v1787 = vld [vmem:[%s395 + $0x1bc] sm:$0xf]
        %v1788 = vld [vmem:[%s395 + $0x1c0] sm:$0xf]
        %v1789 = vld [vmem:[%s395 + $0x1c4] sm:$0xf]
        %v1790 = vld [vmem:[%s395 + $0x1c8] sm:$0xf]
        %v1791 = vld [vmem:[%s395 + $0x1cc] sm:$0xf]
        %v1792 = vld [vmem:[%s395 + $0x1d0] sm:$0xf]
        %v1793 = vld [vmem:[%s395 + $0x1d4] sm:$0xf]
        %v1794 = vld [vmem:[%s395 + $0x1d8] sm:$0xf]
        %v1795 = vld [vmem:[%s395 + $0x1dc] sm:$0xf]
        %v1796 = vld [vmem:[%s395 + $0x1e0] sm:$0xf]
        %v1797 = vld [vmem:[%s395 + $0x1e4] sm:$0xf]
        %v1798 = vld [vmem:[%s395 + $0x1e8] sm:$0xf]
        %v1799 = vld [vmem:[%s395 + $0x1ec] sm:$0xf]
        %v1800 = vld [vmem:[%s395 + $0x1f0] sm:$0xf]
        %v1801 = vld [vmem:[%s395 + $0x1f4] sm:$0xf]
        %v1802 = vld [vmem:[%s395 + $0x1f8] sm:$0xf]
        %v1803 = vld [vmem:[%s395 + $0x1fc] sm:$0xf]
        %v1804 = vld [vmem:[%s395 + $0x200] sm:$0xf]
        %v1805 = vld [vmem:[%s395 + $0x204] sm:$0xf]
        %v1806 = vld [vmem:[%s395 + $0x208] sm:$0xf]
        %v1807 = vld [vmem:[%s395 + $0x20c] sm:$0xf]
        %v1808 = vld [vmem:[%s395 + $0x210] sm:$0xf]
        %v1809 = vld [vmem:[%s395 + $0x214] sm:$0xf]
        %v1810 = vld [vmem:[%s395 + $0x218] sm:$0xf]
        %v1811 = vld [vmem:[%s395 + $0x21c] sm:$0xf]
        %v1812 = vld [vmem:[%s395 + $0x220] sm:$0xf]
        %v1813 = vld [vmem:[%s395 + $0x224] sm:$0xf]
        %v1814 = vld [vmem:[%s395 + $0x228] sm:$0xf]
        %v1815 = vld [vmem:[%s395 + $0x22c] sm:$0xf]
        %v1816 = vld [vmem:[%s395 + $0x230] sm:$0xf]
        %v1817 = vld [vmem:[%s395 + $0x234] sm:$0xf]
        %v1818 = vld [vmem:[%s395 + $0x238] sm:$0xf]
        %v1819 = vld [vmem:[%s395 + $0x23c] sm:$0xf]
        %v1820 = vld [vmem:[%s395 + $0x240] sm:$0xf]
        %v1821 = vld [vmem:[%s395 + $0x244] sm:$0xf]
        %v1822 = vld [vmem:[%s395 + $0x248] sm:$0xf]
        %v1823 = vld [vmem:[%s395 + $0x24c] sm:$0xf]
        %v1824 = vld [vmem:[%s395 + $0x250] sm:$0xf]
        %v1825 = vld [vmem:[%s395 + $0x254] sm:$0xf]
        %v1826 = vld [vmem:[%s395 + $0x258] sm:$0xf]
        %v1827 = vld [vmem:[%s395 + $0x25c] sm:$0xf]
        %v1828 = vld [vmem:[%s395 + $0x260] sm:$0xf]
        %v1829 = vld [vmem:[%s395 + $0x264] sm:$0xf]
        %v1830 = vld [vmem:[%s395 + $0x268] sm:$0xf]
        %v1831 = vld [vmem:[%s395 + $0x26c] sm:$0xf]
        %v1832 = vld [vmem:[%s395 + $0x270] sm:$0xf]
        %v1833 = vld [vmem:[%s395 + $0x274] sm:$0xf]
        %v1834 = vld [vmem:[%s395 + $0x278] sm:$0xf]
        %v1835 = vld [vmem:[%s395 + $0x27c] sm:$0xf]
        %v1836 = vld [vmem:[%s395 + $0x280] sm:$0xf]
        %v1837 = vld [vmem:[%s395 + $0x284] sm:$0xf]
        %v1838 = vld [vmem:[%s395 + $0x288] sm:$0xf]
        %v1839 = vld [vmem:[%s395 + $0x28c] sm:$0xf]
        %v1840 = vld [vmem:[%s395 + $0x290] sm:$0xf]
        %v1841 = vld [vmem:[%s395 + $0x294] sm:$0xf]
        %v1842 = vld [vmem:[%s395 + $0x298] sm:$0xf]
        %v1843 = vld [vmem:[%s395 + $0x29c] sm:$0xf]
        %v1844 = vld [vmem:[%s395 + $0x2a0] sm:$0xf]
        %v1845 = vld [vmem:[%s395 + $0x2a4] sm:$0xf]
        %v1846 = vld [vmem:[%s395 + $0x2a8] sm:$0xf]
        %v1847 = vld [vmem:[%s395 + $0x2ac] sm:$0xf]
        %v1848 = vld [vmem:[%s395 + $0x2b0] sm:$0xf]
        %v1849 = vld [vmem:[%s395 + $0x2b4] sm:$0xf]
        %v1850 = vld [vmem:[%s395 + $0x2b8] sm:$0xf]
        %v1851 = vld [vmem:[%s395 + $0x2bc] sm:$0xf]
        %v1852 = vld [vmem:[%s395 + $0x2c0] sm:$0xf]
        %v1853 = vld [vmem:[%s395 + $0x2c4] sm:$0xf]
        %v1854 = vld [vmem:[%s395 + $0x2c8] sm:$0xf]
        %v1855 = vld [vmem:[%s395 + $0x2cc] sm:$0xf]
        %v1856 = vld [vmem:[%s395 + $0x2d0] sm:$0xf]
        %v1857 = vld [vmem:[%s395 + $0x2d4] sm:$0xf]
        %v1858 = vld [vmem:[%s395 + $0x2d8] sm:$0xf]
        %v1859 = vld [vmem:[%s395 + $0x2dc] sm:$0xf]
        %v1860 = vld [vmem:[%s395 + $0x2e0] sm:$0xf]
        %v1861 = vld [vmem:[%s395 + $0x2e4] sm:$0xf]
        %v1862 = vld [vmem:[%s395 + $0x2e8] sm:$0xf]
        %v1863 = vld [vmem:[%s395 + $0x2ec] sm:$0xf]
        %v1864 = vld [vmem:[%s395 + $0x2f0] sm:$0xf]
        %v1865 = vld [vmem:[%s395 + $0x2f4] sm:$0xf]
        %v1866 = vld [vmem:[%s395 + $0x2f8] sm:$0xf]
        %v1867 = vld [vmem:[%s395 + $0x2fc] sm:$0xf]
        %v1868 = vld [vmem:[%s395 + $0x300] sm:$0xf]
        %v1869 = vld [vmem:[%s395 + $0x304] sm:$0xf]
        %v1870 = vld [vmem:[%s395 + $0x308] sm:$0xf]
        %v1871 = vld [vmem:[%s395 + $0x30c] sm:$0xf]
        %v1872 = vld [vmem:[%s395 + $0x310] sm:$0xf]
        %v1873 = vld [vmem:[%s395 + $0x314] sm:$0xf]
        %v1874 = vld [vmem:[%s395 + $0x318] sm:$0xf]
        %v1875 = vld [vmem:[%s395 + $0x31c] sm:$0xf]
        %v1876 = vld [vmem:[%s395 + $0x320] sm:$0xf]
        %v1877 = vld [vmem:[%s395 + $0x324] sm:$0xf]
        %v1878 = vld [vmem:[%s395 + $0x328] sm:$0xf]
        %v1879 = vld [vmem:[%s395 + $0x32c] sm:$0xf]
        %v1880 = vld [vmem:[%s395 + $0x330] sm:$0xf]
        %v1881 = vld [vmem:[%s395 + $0x334] sm:$0xf]
        %v1882 = vld [vmem:[%s395 + $0x338] sm:$0xf]
        %v1883 = vld [vmem:[%s395 + $0x33c] sm:$0xf]
        %v1884 = vld [vmem:[%s395 + $0x340] sm:$0xf]
        %v1885 = vld [vmem:[%s395 + $0x344] sm:$0xf]
        %v1886 = vld [vmem:[%s395 + $0x348] sm:$0xf]
        %v1887 = vld [vmem:[%s395 + $0x34c] sm:$0xf]
        %v1888 = vld [vmem:[%s395 + $0x350] sm:$0xf]
        %v1889 = vld [vmem:[%s395 + $0x354] sm:$0xf]
        %v1890 = vld [vmem:[%s395 + $0x358] sm:$0xf]
        %v1891 = vld [vmem:[%s395 + $0x35c] sm:$0xf]
        %v1892 = vld [vmem:[%s395 + $0x360] sm:$0xf]
        %v1893 = vld [vmem:[%s395 + $0x364] sm:$0xf]
        %v1894 = vld [vmem:[%s395 + $0x368] sm:$0xf]
        %v1895 = vld [vmem:[%s395 + $0x36c] sm:$0xf]
        %v1896 = vld [vmem:[%s395 + $0x370] sm:$0xf]
        %v1897 = vld [vmem:[%s395 + $0x374] sm:$0xf]
        %v1898 = vld [vmem:[%s395 + $0x378] sm:$0xf]
        %v1899 = vld [vmem:[%s395 + $0x37c] sm:$0xf]
        %v1900 = vld [vmem:[%s395 + $0x380] sm:$0xf]
        %v1901 = vld [vmem:[%s395 + $0x384] sm:$0xf]
        %v1902 = vld [vmem:[%s395 + $0x388] sm:$0xf]
        %v1903 = vld [vmem:[%s395 + $0x38c] sm:$0xf]
        %v1904 = vld [vmem:[%s395 + $0x390] sm:$0xf]
        %v1905 = vld [vmem:[%s395 + $0x394] sm:$0xf]
        %v1906 = vld [vmem:[%s395 + $0x398] sm:$0xf]
        %v1907 = vld [vmem:[%s395 + $0x39c] sm:$0xf]
        %v1908 = vld [vmem:[%s395 + $0x3a0] sm:$0xf]
        %v1909 = vld [vmem:[%s395 + $0x3a4] sm:$0xf]
        %v1910 = vld [vmem:[%s395 + $0x3a8] sm:$0xf]
        %v1911 = vld [vmem:[%s395 + $0x3ac] sm:$0xf]
        %v1912 = vld [vmem:[%s395 + $0x3b0] sm:$0xf]
        %v1913 = vld [vmem:[%s395 + $0x3b4] sm:$0xf]
        %v1914 = vld [vmem:[%s395 + $0x3b8] sm:$0xf]
        %v1915 = vld [vmem:[%s395 + $0x3bc] sm:$0xf]
        %v1916 = vld [vmem:[%s395 + $0x3c0] sm:$0xf]
        %v1917 = vld [vmem:[%s395 + $0x3c4] sm:$0xf]
        %v1918 = vld [vmem:[%s395 + $0x3c8] sm:$0xf]
        %v1919 = vld [vmem:[%s395 + $0x3cc] sm:$0xf]
        %v1920 = vld [vmem:[%s395 + $0x3d0] sm:$0xf]
        %v1921 = vld [vmem:[%s395 + $0x3d4] sm:$0xf]
        %v1922 = vld [vmem:[%s395 + $0x3d8] sm:$0xf]
        %v1923 = vld [vmem:[%s395 + $0x3dc] sm:$0xf]
        %v1924 = vld [vmem:[%s395 + $0x3e0] sm:$0xf]
        %v1925 = vld [vmem:[%s395 + $0x3e4] sm:$0xf]
        %v1926 = vld [vmem:[%s395 + $0x3e8] sm:$0xf]
        %v1927 = vld [vmem:[%s395 + $0x3ec] sm:$0xf]
        %v1928 = vld [vmem:[%s395 + $0x3f0] sm:$0xf]
        %v1929 = vld [vmem:[%s395 + $0x3f4] sm:$0xf]
        %v1930 = vld [vmem:[%s395 + $0x3f8] sm:$0xf]
        %v1931 = vld [vmem:[%s395 + $0x3fc] sm:$0xf]
        %v1932 = vperm.slane %v443, 1
        %v2189 = vunpack.c.l.b16 %v1676
        %v2190 = vunpack.c.l.b16 %v1677
        %v2191 = vunpack.c.l.b16 %v1678
        %v2192 = vunpack.c.l.b16 %v1679
        %v2193 = vunpack.c.l.b16 %v1680
        %v2194 = vunpack.c.l.b16 %v1681
        %v2195 = vunpack.c.l.b16 %v1682
        %v2196 = vunpack.c.l.b16 %v1683
        %v2197 = vunpack.c.l.b16 %v1684
        %v2198 = vunpack.c.l.b16 %v1685
        %v2199 = vunpack.c.l.b16 %v1686
        %v2200 = vunpack.c.l.b16 %v1687
        %v2201 = vunpack.c.l.b16 %v1688
        %v2202 = vunpack.c.l.b16 %v1689
        %v2203 = vunpack.c.l.b16 %v1690
        %v2204 = vunpack.c.l.b16 %v1691
        %v2205 = vunpack.c.l.b16 %v1692
        %v2206 = vunpack.c.l.b16 %v1693
        %v2207 = vunpack.c.l.b16 %v1694
        %v2208 = vunpack.c.l.b16 %v1695
        %v2209 = vunpack.c.l.b16 %v1696
        %v2210 = vunpack.c.l.b16 %v1697
        %v2211 = vunpack.c.l.b16 %v1698
        %v2212 = vunpack.c.l.b16 %v1699
        %v2213 = vunpack.c.l.b16 %v1700
        %v2214 = vunpack.c.l.b16 %v1701
        %v2215 = vunpack.c.l.b16 %v1702
        %v2216 = vunpack.c.l.b16 %v1703
        %v2217 = vunpack.c.l.b16 %v1704
        %v2218 = vunpack.c.l.b16 %v1705
        %v2219 = vunpack.c.l.b16 %v1706
        %v2220 = vunpack.c.l.b16 %v1707
        %v2221 = vunpack.c.l.b16 %v1708
        %v2222 = vunpack.c.l.b16 %v1709
        %v2223 = vunpack.c.l.b16 %v1710
        %v2224 = vunpack.c.l.b16 %v1711
        %v2225 = vunpack.c.l.b16 %v1712
        %v2226 = vunpack.c.l.b16 %v1713
        %v2227 = vunpack.c.l.b16 %v1714
        %v2228 = vunpack.c.l.b16 %v1715
        %v2229 = vunpack.c.l.b16 %v1716
        %v2230 = vunpack.c.l.b16 %v1717
        %v2231 = vunpack.c.l.b16 %v1718
        %v2232 = vunpack.c.l.b16 %v1719
        %v2233 = vunpack.c.l.b16 %v1720
        %v2234 = vunpack.c.l.b16 %v1721
        %v2235 = vunpack.c.l.b16 %v1722
        %v2236 = vunpack.c.l.b16 %v1723
        %v2237 = vunpack.c.l.b16 %v1724
        %v2238 = vunpack.c.l.b16 %v1725
        %v2239 = vunpack.c.l.b16 %v1726
        %v2240 = vunpack.c.l.b16 %v1727
        %v2241 = vunpack.c.l.b16 %v1728
        %v2242 = vunpack.c.l.b16 %v1729
        %v2243 = vunpack.c.l.b16 %v1730
        %v2244 = vunpack.c.l.b16 %v1731
        %v2245 = vunpack.c.l.b16 %v1732
        %v2246 = vunpack.c.l.b16 %v1733
        %v2247 = vunpack.c.l.b16 %v1734
        %v2248 = vunpack.c.l.b16 %v1735
        %v2249 = vunpack.c.l.b16 %v1736
        %v2250 = vunpack.c.l.b16 %v1737
        %v2251 = vunpack.c.l.b16 %v1738
        %v2252 = vunpack.c.l.b16 %v1739
        %v2253 = vunpack.c.l.b16 %v1740
        %v2254 = vunpack.c.l.b16 %v1741
        %v2255 = vunpack.c.l.b16 %v1742
        %v2256 = vunpack.c.l.b16 %v1743
        %v2257 = vunpack.c.l.b16 %v1744
        %v2258 = vunpack.c.l.b16 %v1745
        %v2259 = vunpack.c.l.b16 %v1746
        %v2260 = vunpack.c.l.b16 %v1747
        %v2261 = vunpack.c.l.b16 %v1748
        %v2262 = vunpack.c.l.b16 %v1749
        %v2263 = vunpack.c.l.b16 %v1750
        %v2264 = vunpack.c.l.b16 %v1751
        %v2265 = vunpack.c.l.b16 %v1752
        %v2266 = vunpack.c.l.b16 %v1753
        %v2267 = vunpack.c.l.b16 %v1754
        %v2268 = vunpack.c.l.b16 %v1755
        %v2269 = vunpack.c.l.b16 %v1756
        %v2270 = vunpack.c.l.b16 %v1757
        %v2271 = vunpack.c.l.b16 %v1758
        %v2272 = vunpack.c.l.b16 %v1759
        %v2273 = vunpack.c.l.b16 %v1760
        %v2274 = vunpack.c.l.b16 %v1761
        %v2275 = vunpack.c.l.b16 %v1762
        %v2276 = vunpack.c.l.b16 %v1763
        %v2277 = vunpack.c.l.b16 %v1764
        %v2278 = vunpack.c.l.b16 %v1765
        %v2279 = vunpack.c.l.b16 %v1766
        %v2280 = vunpack.c.l.b16 %v1767
        %v2281 = vunpack.c.l.b16 %v1768
        %v2282 = vunpack.c.l.b16 %v1769
        %v2283 = vunpack.c.l.b16 %v1770
        %v2284 = vunpack.c.l.b16 %v1771
        %v2285 = vunpack.c.l.b16 %v1772
        %v2286 = vunpack.c.l.b16 %v1773
        %v2287 = vunpack.c.l.b16 %v1774
        %v2288 = vunpack.c.l.b16 %v1775
        %v2289 = vunpack.c.l.b16 %v1776
        %v2290 = vunpack.c.l.b16 %v1777
        %v2291 = vunpack.c.l.b16 %v1778
        %v2292 = vunpack.c.l.b16 %v1779
        %v2293 = vunpack.c.l.b16 %v1780
        %v2294 = vunpack.c.l.b16 %v1781
        %v2295 = vunpack.c.l.b16 %v1782
        %v2296 = vunpack.c.l.b16 %v1783
        %v2297 = vunpack.c.l.b16 %v1784
        %v2298 = vunpack.c.l.b16 %v1785
        %v2299 = vunpack.c.l.b16 %v1786
        %v2300 = vunpack.c.l.b16 %v1787
        %v2301 = vunpack.c.l.b16 %v1788
        %v2302 = vunpack.c.l.b16 %v1789
        %v2303 = vunpack.c.l.b16 %v1790
        %v2304 = vunpack.c.l.b16 %v1791
        %v2305 = vunpack.c.l.b16 %v1792
        %v2306 = vunpack.c.l.b16 %v1793
        %v2307 = vunpack.c.l.b16 %v1794
        %v2308 = vunpack.c.l.b16 %v1795
        %v2309 = vunpack.c.l.b16 %v1796
        %v2310 = vunpack.c.l.b16 %v1797
        %v2311 = vunpack.c.l.b16 %v1798
        %v2312 = vunpack.c.l.b16 %v1799
        %v2313 = vunpack.c.l.b16 %v1800
        %v2314 = vunpack.c.l.b16 %v1801
        %v2315 = vunpack.c.l.b16 %v1802
        %v2316 = vunpack.c.l.b16 %v1803
        %v2317 = vunpack.c.l.b16 %v1804
        %v2318 = vunpack.c.l.b16 %v1805
        %v2319 = vunpack.c.l.b16 %v1806
        %v2320 = vunpack.c.l.b16 %v1807
        %v2321 = vunpack.c.l.b16 %v1808
        %v2322 = vunpack.c.l.b16 %v1809
        %v2323 = vunpack.c.l.b16 %v1810
        %v2324 = vunpack.c.l.b16 %v1811
        %v2325 = vunpack.c.l.b16 %v1812
        %v2326 = vunpack.c.l.b16 %v1813
        %v2327 = vunpack.c.l.b16 %v1814
        %v2328 = vunpack.c.l.b16 %v1815
        %v2329 = vunpack.c.l.b16 %v1816
        %v2330 = vunpack.c.l.b16 %v1817
        %v2331 = vunpack.c.l.b16 %v1818
        %v2332 = vunpack.c.l.b16 %v1819
        %v2333 = vunpack.c.l.b16 %v1820
        %v2334 = vunpack.c.l.b16 %v1821
        %v2335 = vunpack.c.l.b16 %v1822
        %v2336 = vunpack.c.l.b16 %v1823
        %v2337 = vunpack.c.l.b16 %v1824
        %v2338 = vunpack.c.l.b16 %v1825
        %v2339 = vunpack.c.l.b16 %v1826
        %v2340 = vunpack.c.l.b16 %v1827
        %v2341 = vunpack.c.l.b16 %v1828
        %v2342 = vunpack.c.l.b16 %v1829
        %v2343 = vunpack.c.l.b16 %v1830
        %v2344 = vunpack.c.l.b16 %v1831
        %v2345 = vunpack.c.l.b16 %v1832
        %v2346 = vunpack.c.l.b16 %v1833
        %v2347 = vunpack.c.l.b16 %v1834
        %v2348 = vunpack.c.l.b16 %v1835
        %v2349 = vunpack.c.l.b16 %v1836
        %v2350 = vunpack.c.l.b16 %v1837
        %v2351 = vunpack.c.l.b16 %v1838
        %v2352 = vunpack.c.l.b16 %v1839
        %v2353 = vunpack.c.l.b16 %v1840
        %v2354 = vunpack.c.l.b16 %v1841
        %v2355 = vunpack.c.l.b16 %v1842
        %v2356 = vunpack.c.l.b16 %v1843
        %v2357 = vunpack.c.l.b16 %v1844
        %v2358 = vunpack.c.l.b16 %v1845
        %v2359 = vunpack.c.l.b16 %v1846
        %v2360 = vunpack.c.l.b16 %v1847
        %v2361 = vunpack.c.l.b16 %v1848
        %v2362 = vunpack.c.l.b16 %v1849
        %v2363 = vunpack.c.l.b16 %v1850
        %v2364 = vunpack.c.l.b16 %v1851
        %v2365 = vunpack.c.l.b16 %v1852
        %v2366 = vunpack.c.l.b16 %v1853
        %v2367 = vunpack.c.l.b16 %v1854
        %v2368 = vunpack.c.l.b16 %v1855
        %v2369 = vunpack.c.l.b16 %v1856
        %v2370 = vunpack.c.l.b16 %v1857
        %v2371 = vunpack.c.l.b16 %v1858
        %v2372 = vunpack.c.l.b16 %v1859
        %v2373 = vunpack.c.l.b16 %v1860
        %v2374 = vunpack.c.l.b16 %v1861
        %v2375 = vunpack.c.l.b16 %v1862
        %v2376 = vunpack.c.l.b16 %v1863
        %v2377 = vunpack.c.l.b16 %v1864
        %v2378 = vunpack.c.l.b16 %v1865
        %v2379 = vunpack.c.l.b16 %v1866
        %v2380 = vunpack.c.l.b16 %v1867
        %v2381 = vunpack.c.l.b16 %v1868
        %v2382 = vunpack.c.l.b16 %v1869
        %v2383 = vunpack.c.l.b16 %v1870
        %v2384 = vunpack.c.l.b16 %v1871
        %v2385 = vunpack.c.l.b16 %v1872
        %v2386 = vunpack.c.l.b16 %v1873
        %v2387 = vunpack.c.l.b16 %v1874
        %v2388 = vunpack.c.l.b16 %v1875
        %v2389 = vunpack.c.l.b16 %v1876
        %v2390 = vunpack.c.l.b16 %v1877
        %v2391 = vunpack.c.l.b16 %v1878
        %v2392 = vunpack.c.l.b16 %v1879
        %v2393 = vunpack.c.l.b16 %v1880
        %v2394 = vunpack.c.l.b16 %v1881
        %v2395 = vunpack.c.l.b16 %v1882
        %v2396 = vunpack.c.l.b16 %v1883
        %v2397 = vunpack.c.l.b16 %v1884
        %v2398 = vunpack.c.l.b16 %v1885
        %v2399 = vunpack.c.l.b16 %v1886
        %v2400 = vunpack.c.l.b16 %v1887
        %v2401 = vunpack.c.l.b16 %v1888
        %v2402 = vunpack.c.l.b16 %v1889
        %v2403 = vunpack.c.l.b16 %v1890
        %v2404 = vunpack.c.l.b16 %v1891
        %v2405 = vunpack.c.l.b16 %v1892
        %v2406 = vunpack.c.l.b16 %v1893
        %v2407 = vunpack.c.l.b16 %v1894
        %v2408 = vunpack.c.l.b16 %v1895
        %v2409 = vunpack.c.l.b16 %v1896
        %v2410 = vunpack.c.l.b16 %v1897
        %v2411 = vunpack.c.l.b16 %v1898
        %v2412 = vunpack.c.l.b16 %v1899
        %v2413 = vunpack.c.l.b16 %v1900
        %v2414 = vunpack.c.l.b16 %v1901
        %v2415 = vunpack.c.l.b16 %v1902
        %v2416 = vunpack.c.l.b16 %v1903
        %v2417 = vunpack.c.l.b16 %v1904
        %v2418 = vunpack.c.l.b16 %v1905
        %v2419 = vunpack.c.l.b16 %v1906
        %v2420 = vunpack.c.l.b16 %v1907
        %v2421 = vunpack.c.l.b16 %v1908
        %v2422 = vunpack.c.l.b16 %v1909
        %v2423 = vunpack.c.l.b16 %v1910
        %v2424 = vunpack.c.l.b16 %v1911
        %v2425 = vunpack.c.l.b16 %v1912
        %v2426 = vunpack.c.l.b16 %v1913
        %v2427 = vunpack.c.l.b16 %v1914
        %v2428 = vunpack.c.l.b16 %v1915
        %v2429 = vunpack.c.l.b16 %v1916
        %v2430 = vunpack.c.l.b16 %v1917
        %v2431 = vunpack.c.l.b16 %v1918
        %v2432 = vunpack.c.l.b16 %v1919
        %v2433 = vunpack.c.l.b16 %v1920
        %v2434 = vunpack.c.l.b16 %v1921
        %v2435 = vunpack.c.l.b16 %v1922
        %v2436 = vunpack.c.l.b16 %v1923
        %v2437 = vunpack.c.l.b16 %v1924
        %v2438 = vunpack.c.l.b16 %v1925
        %v2439 = vunpack.c.l.b16 %v1926
        %v2440 = vunpack.c.l.b16 %v1927
        %v2441 = vunpack.c.l.b16 %v1928
        %v2442 = vunpack.c.l.b16 %v1929
        %v2443 = vunpack.c.l.b16 %v1930
        %v2444 = vunpack.c.l.b16 %v1931
        %v2445 = vpack.c.b16 %v2190, %v2189
        %v2446 = vpack.c.b16 %v2192, %v2191
        %v2447 = vpack.c.b16 %v2194, %v2193
        %v2448 = vpack.c.b16 %v2196, %v2195
        %v2449 = vpack.c.b16 %v2198, %v2197
        %v2450 = vpack.c.b16 %v2200, %v2199
        %v2451 = vpack.c.b16 %v2202, %v2201
        %v2452 = vpack.c.b16 %v2204, %v2203
        %v2453 = vpack.c.b16 %v2206, %v2205
        %v2454 = vpack.c.b16 %v2208, %v2207
        %v2455 = vpack.c.b16 %v2210, %v2209
        %v2456 = vpack.c.b16 %v2212, %v2211
        %v2457 = vpack.c.b16 %v2214, %v2213
        %v2458 = vpack.c.b16 %v2216, %v2215
        %v2459 = vpack.c.b16 %v2218, %v2217
        %v2460 = vpack.c.b16 %v2220, %v2219
        %v2461 = vpack.c.b16 %v2222, %v2221
        %v2462 = vpack.c.b16 %v2224, %v2223
        %v2463 = vpack.c.b16 %v2226, %v2225
        %v2464 = vpack.c.b16 %v2228, %v2227
        %v2465 = vpack.c.b16 %v2230, %v2229
        %v2466 = vpack.c.b16 %v2232, %v2231
        %v2467 = vpack.c.b16 %v2234, %v2233
        %v2468 = vpack.c.b16 %v2236, %v2235
        %v2469 = vpack.c.b16 %v2238, %v2237
        %v2470 = vpack.c.b16 %v2240, %v2239
        %v2471 = vpack.c.b16 %v2242, %v2241
        %v2472 = vpack.c.b16 %v2244, %v2243
        %v2473 = vpack.c.b16 %v2246, %v2245
        %v2474 = vpack.c.b16 %v2248, %v2247
        %v2475 = vpack.c.b16 %v2250, %v2249
        %v2476 = vpack.c.b16 %v2252, %v2251
        %v2477 = vpack.c.b16 %v2254, %v2253
        %v2478 = vpack.c.b16 %v2256, %v2255
        %v2479 = vpack.c.b16 %v2258, %v2257
        %v2480 = vpack.c.b16 %v2260, %v2259
        %v2481 = vpack.c.b16 %v2262, %v2261
        %v2482 = vpack.c.b16 %v2264, %v2263
        %v2483 = vpack.c.b16 %v2266, %v2265
        %v2484 = vpack.c.b16 %v2268, %v2267
        %v2485 = vpack.c.b16 %v2270, %v2269
        %v2486 = vpack.c.b16 %v2272, %v2271
        %v2487 = vpack.c.b16 %v2274, %v2273
        %v2488 = vpack.c.b16 %v2276, %v2275
        %v2489 = vpack.c.b16 %v2278, %v2277
        %v2490 = vpack.c.b16 %v2280, %v2279
        %v2491 = vpack.c.b16 %v2282, %v2281
        %v2492 = vpack.c.b16 %v2284, %v2283
        %v2493 = vpack.c.b16 %v2286, %v2285
        %v2494 = vpack.c.b16 %v2288, %v2287
        %v2495 = vpack.c.b16 %v2290, %v2289
        %v2496 = vpack.c.b16 %v2292, %v2291
        %v2497 = vpack.c.b16 %v2294, %v2293
        %v2498 = vpack.c.b16 %v2296, %v2295
        %v2499 = vpack.c.b16 %v2298, %v2297
        %v2500 = vpack.c.b16 %v2300, %v2299
        %v2501 = vpack.c.b16 %v2302, %v2301
        %v2502 = vpack.c.b16 %v2304, %v2303
        %v2503 = vpack.c.b16 %v2306, %v2305
        %v2504 = vpack.c.b16 %v2308, %v2307
        %v2505 = vpack.c.b16 %v2310, %v2309
        %v2506 = vpack.c.b16 %v2312, %v2311
        %v2507 = vpack.c.b16 %v2314, %v2313
        %v2508 = vpack.c.b16 %v2316, %v2315
        %v2509 = vpack.c.b16 %v2318, %v2317
        %v2510 = vpack.c.b16 %v2320, %v2319
        %v2511 = vpack.c.b16 %v2322, %v2321
        %v2512 = vpack.c.b16 %v2324, %v2323
        %v2513 = vpack.c.b16 %v2326, %v2325
        %v2514 = vpack.c.b16 %v2328, %v2327
        %v2515 = vpack.c.b16 %v2330, %v2329
        %v2516 = vpack.c.b16 %v2332, %v2331
        %v2517 = vpack.c.b16 %v2334, %v2333
        %v2518 = vpack.c.b16 %v2336, %v2335
        %v2519 = vpack.c.b16 %v2338, %v2337
        %v2520 = vpack.c.b16 %v2340, %v2339
        %v2521 = vpack.c.b16 %v2342, %v2341
        %v2522 = vpack.c.b16 %v2344, %v2343
        %v2523 = vpack.c.b16 %v2346, %v2345
        %v2524 = vpack.c.b16 %v2348, %v2347
        %v2525 = vpack.c.b16 %v2350, %v2349
        %v2526 = vpack.c.b16 %v2352, %v2351
        %v2527 = vpack.c.b16 %v2354, %v2353
        %v2528 = vpack.c.b16 %v2356, %v2355
        %v2529 = vpack.c.b16 %v2358, %v2357
        %v2530 = vpack.c.b16 %v2360, %v2359
        %v2531 = vpack.c.b16 %v2362, %v2361
        %v2532 = vpack.c.b16 %v2364, %v2363
        %v2533 = vpack.c.b16 %v2366, %v2365
        %v2534 = vpack.c.b16 %v2368, %v2367
        %v2535 = vpack.c.b16 %v2370, %v2369
        %v2536 = vpack.c.b16 %v2372, %v2371
        %v2537 = vpack.c.b16 %v2374, %v2373
        %v2538 = vpack.c.b16 %v2376, %v2375
        %v2539 = vpack.c.b16 %v2378, %v2377
        %v2540 = vpack.c.b16 %v2380, %v2379
        %v2541 = vpack.c.b16 %v2382, %v2381
        %v2542 = vpack.c.b16 %v2384, %v2383
        %v2543 = vpack.c.b16 %v2386, %v2385
        %v2544 = vpack.c.b16 %v2388, %v2387
        %v2545 = vpack.c.b16 %v2390, %v2389
        %v2546 = vpack.c.b16 %v2392, %v2391
        %v2547 = vpack.c.b16 %v2394, %v2393
        %v2548 = vpack.c.b16 %v2396, %v2395
        %v2549 = vpack.c.b16 %v2398, %v2397
        %v2550 = vpack.c.b16 %v2400, %v2399
        %v2551 = vpack.c.b16 %v2402, %v2401
        %v2552 = vpack.c.b16 %v2404, %v2403
        %v2553 = vpack.c.b16 %v2406, %v2405
        %v2554 = vpack.c.b16 %v2408, %v2407
        %v2555 = vpack.c.b16 %v2410, %v2409
        %v2556 = vpack.c.b16 %v2412, %v2411
        %v2557 = vpack.c.b16 %v2414, %v2413
        %v2558 = vpack.c.b16 %v2416, %v2415
        %v2559 = vpack.c.b16 %v2418, %v2417
        %v2560 = vpack.c.b16 %v2420, %v2419
        %v2561 = vpack.c.b16 %v2422, %v2421
        %v2562 = vpack.c.b16 %v2424, %v2423
        %v2563 = vpack.c.b16 %v2426, %v2425
        %v2564 = vpack.c.b16 %v2428, %v2427
        %v2565 = vpack.c.b16 %v2430, %v2429
        %v2566 = vpack.c.b16 %v2432, %v2431
        %v2567 = vpack.c.b16 %v2434, %v2433
        %v2568 = vpack.c.b16 %v2436, %v2435
        %v2569 = vpack.c.b16 %v2438, %v2437
        %v2570 = vpack.c.b16 %v2440, %v2439
        %v2571 = vpack.c.b16 %v2442, %v2441
        %v2572 = vpack.c.b16 %v2444, %v2443
        %2701 = vmatpush.bf16.msra.mxu0 %v2452
        %2702 = vmatpush.bf16.msra.mxu0 %v2451
        %2703 = vmatpush.bf16.msra.mxu0 %v2450
        %2704 = vmatpush.bf16.msra.mxu0 %v2449
        %2705 = vmatpush.bf16.msra.mxu0 %v2448
        %2706 = vmatpush.bf16.msra.mxu0 %v2447
        %2707 = vmatpush.bf16.msra.mxu0 %v2446
        %2708 = vmatpush.bf16.msra.mxu0 %v2445
        %2709 = vmatmul.bf16.gmra.mxu0 %v1660
        %v2710 = vpop.f32.mrf.mxu0
        %v2711 = vadd.f32 %v1932, %v2710
        %v2712 = vpop.f32.mrf.mxu0
        %2713 = vdwg.mxu0
        %2714 = vmatpush.bf16.msra.mxu0 %v2460
        %2715 = vmatpush.bf16.msra.mxu0 %v2459
        %2716 = vmatpush.bf16.msra.mxu0 %v2458
        %2717 = vmatpush.bf16.msra.mxu0 %v2457
        %2718 = vmatpush.bf16.msra.mxu0 %v2456
        %2719 = vmatpush.bf16.msra.mxu0 %v2455
        %2720 = vmatpush.bf16.msra.mxu0 %v2454
        %2721 = vmatpush.bf16.msra.mxu0 %v2453
        %2722 = vmatmul.bf16.gmra.mxu0 %v1661
        %v2723 = vpop.f32.mrf.mxu0
        %v2724 = vadd.f32 %v2711, %v2723
        %v2725 = vpop.f32.mrf.mxu0
        %2726 = vdwg.mxu0
        %2727 = vmatpush.bf16.msra.mxu0 %v2468
        %2728 = vmatpush.bf16.msra.mxu0 %v2467
        %2729 = vmatpush.bf16.msra.mxu0 %v2466
        %2730 = vmatpush.bf16.msra.mxu0 %v2465
        %2731 = vmatpush.bf16.msra.mxu0 %v2464
        %2732 = vmatpush.bf16.msra.mxu0 %v2463
        %2733 = vmatpush.bf16.msra.mxu0 %v2462
        %2734 = vmatpush.bf16.msra.mxu0 %v2461
        %2735 = vmatmul.bf16.gmra.mxu0 %v1662
        %v2736 = vpop.f32.mrf.mxu0
        %v2737 = vadd.f32 %v2724, %v2736
        %v2738 = vpop.f32.mrf.mxu0
        %2739 = vdwg.mxu0
        %2740 = vmatpush.bf16.msra.mxu0 %v2476
        %2741 = vmatpush.bf16.msra.mxu0 %v2475
        %2742 = vmatpush.bf16.msra.mxu0 %v2474
        %2743 = vmatpush.bf16.msra.mxu0 %v2473
        %2744 = vmatpush.bf16.msra.mxu0 %v2472
        %2745 = vmatpush.bf16.msra.mxu0 %v2471
        %2746 = vmatpush.bf16.msra.mxu0 %v2470
        %2747 = vmatpush.bf16.msra.mxu0 %v2469
        %2748 = vmatmul.bf16.gmra.mxu0 %v1663
        %v2749 = vpop.f32.mrf.mxu0
        %v2750 = vadd.f32 %v2737, %v2749
        %v2751 = vpop.f32.mrf.mxu0
        %2752 = vdwg.mxu0
        %2753 = vmatpush.bf16.msra.mxu0 %v2484
        %2754 = vmatpush.bf16.msra.mxu0 %v2483
        %2755 = vmatpush.bf16.msra.mxu0 %v2482
        %2756 = vmatpush.bf16.msra.mxu0 %v2481
        %2757 = vmatpush.bf16.msra.mxu0 %v2480
        %2758 = vmatpush.bf16.msra.mxu0 %v2479
        %2759 = vmatpush.bf16.msra.mxu0 %v2478
        %2760 = vmatpush.bf16.msra.mxu0 %v2477
        %2761 = vmatmul.bf16.gmra.mxu0 %v1664
        %v2762 = vpop.f32.mrf.mxu0
        %v2763 = vadd.f32 %v2750, %v2762
        %v2764 = vpop.f32.mrf.mxu0
        %2765 = vdwg.mxu0
        %2766 = vmatpush.bf16.msra.mxu0 %v2492
        %2767 = vmatpush.bf16.msra.mxu0 %v2491
        %2768 = vmatpush.bf16.msra.mxu0 %v2490
        %2769 = vmatpush.bf16.msra.mxu0 %v2489
        %2770 = vmatpush.bf16.msra.mxu0 %v2488
        %2771 = vmatpush.bf16.msra.mxu0 %v2487
        %2772 = vmatpush.bf16.msra.mxu0 %v2486
        %2773 = vmatpush.bf16.msra.mxu0 %v2485
        %2774 = vmatmul.bf16.gmra.mxu0 %v1665
        %v2775 = vpop.f32.mrf.mxu0
        %v2776 = vadd.f32 %v2763, %v2775
        %v2777 = vpop.f32.mrf.mxu0
        %2778 = vdwg.mxu0
        %2779 = vmatpush.bf16.msra.mxu0 %v2500
        %2780 = vmatpush.bf16.msra.mxu0 %v2499
        %2781 = vmatpush.bf16.msra.mxu0 %v2498
        %2782 = vmatpush.bf16.msra.mxu0 %v2497
        %2783 = vmatpush.bf16.msra.mxu0 %v2496
        %2784 = vmatpush.bf16.msra.mxu0 %v2495
        %2785 = vmatpush.bf16.msra.mxu0 %v2494
        %2786 = vmatpush.bf16.msra.mxu0 %v2493
        %2787 = vmatmul.bf16.gmra.mxu0 %v1666
        %v2788 = vpop.f32.mrf.mxu0
        %v2789 = vadd.f32 %v2776, %v2788
        %v2790 = vpop.f32.mrf.mxu0
        %2791 = vdwg.mxu0
        %2792 = vmatpush.bf16.msra.mxu0 %v2508
        %2793 = vmatpush.bf16.msra.mxu0 %v2507
        %2794 = vmatpush.bf16.msra.mxu0 %v2506
        %2795 = vmatpush.bf16.msra.mxu0 %v2505
        %2796 = vmatpush.bf16.msra.mxu0 %v2504
        %2797 = vmatpush.bf16.msra.mxu0 %v2503
        %2798 = vmatpush.bf16.msra.mxu0 %v2502
        %2799 = vmatpush.bf16.msra.mxu0 %v2501
        %2800 = vmatmul.bf16.gmra.mxu0 %v1667
        %v2801 = vpop.f32.mrf.mxu0
        %v2802 = vadd.f32 %v2789, %v2801
        %v2803 = vpop.f32.mrf.mxu0
        %2804 = vdwg.mxu0
        %2805 = vmatpush.bf16.msra.mxu0 %v2516
        %2806 = vmatpush.bf16.msra.mxu0 %v2515
        %2807 = vmatpush.bf16.msra.mxu0 %v2514
        %2808 = vmatpush.bf16.msra.mxu0 %v2513
        %2809 = vmatpush.bf16.msra.mxu0 %v2512
        %2810 = vmatpush.bf16.msra.mxu0 %v2511
        %2811 = vmatpush.bf16.msra.mxu0 %v2510
        %2812 = vmatpush.bf16.msra.mxu0 %v2509
        %2813 = vmatmul.bf16.gmra.mxu0 %v1668
        %v2814 = vpop.f32.mrf.mxu0
        %v2815 = vadd.f32 %v2802, %v2814
        %v2816 = vpop.f32.mrf.mxu0
        %2817 = vdwg.mxu0
        %2818 = vmatpush.bf16.msra.mxu0 %v2524
        %2819 = vmatpush.bf16.msra.mxu0 %v2523
        %2820 = vmatpush.bf16.msra.mxu0 %v2522
        %2821 = vmatpush.bf16.msra.mxu0 %v2521
        %2822 = vmatpush.bf16.msra.mxu0 %v2520
        %2823 = vmatpush.bf16.msra.mxu0 %v2519
        %2824 = vmatpush.bf16.msra.mxu0 %v2518
        %2825 = vmatpush.bf16.msra.mxu0 %v2517
        %2826 = vmatmul.bf16.gmra.mxu0 %v1669
        %v2827 = vpop.f32.mrf.mxu0
        %v2828 = vadd.f32 %v2815, %v2827
        %v2829 = vpop.f32.mrf.mxu0
        %2830 = vdwg.mxu0
        %2831 = vmatpush.bf16.msra.mxu0 %v2532
        %2832 = vmatpush.bf16.msra.mxu0 %v2531
        %2833 = vmatpush.bf16.msra.mxu0 %v2530
        %2834 = vmatpush.bf16.msra.mxu0 %v2529
        %2835 = vmatpush.bf16.msra.mxu0 %v2528
        %2836 = vmatpush.bf16.msra.mxu0 %v2527
        %2837 = vmatpush.bf16.msra.mxu0 %v2526
        %2838 = vmatpush.bf16.msra.mxu0 %v2525
        %2839 = vmatmul.bf16.gmra.mxu0 %v1670
        %v2840 = vpop.f32.mrf.mxu0
        %v2841 = vadd.f32 %v2828, %v2840
        %v2842 = vpop.f32.mrf.mxu0
        %2843 = vdwg.mxu0
        %2844 = vmatpush.bf16.msra.mxu0 %v2540
        %2845 = vmatpush.bf16.msra.mxu0 %v2539
        %2846 = vmatpush.bf16.msra.mxu0 %v2538
        %2847 = vmatpush.bf16.msra.mxu0 %v2537
        %2848 = vmatpush.bf16.msra.mxu0 %v2536
        %2849 = vmatpush.bf16.msra.mxu0 %v2535
        %2850 = vmatpush.bf16.msra.mxu0 %v2534
        %2851 = vmatpush.bf16.msra.mxu0 %v2533
        %2852 = vmatmul.bf16.gmra.mxu0 %v1671
        %v2853 = vpop.f32.mrf.mxu0
        %v2854 = vadd.f32 %v2841, %v2853
        %v2855 = vpop.f32.mrf.mxu0
        %2856 = vdwg.mxu0
        %2857 = vmatpush.bf16.msra.mxu0 %v2548
        %2858 = vmatpush.bf16.msra.mxu0 %v2547
        %2859 = vmatpush.bf16.msra.mxu0 %v2546
        %2860 = vmatpush.bf16.msra.mxu0 %v2545
        %2861 = vmatpush.bf16.msra.mxu0 %v2544
        %2862 = vmatpush.bf16.msra.mxu0 %v2543
        %2863 = vmatpush.bf16.msra.mxu0 %v2542
        %2864 = vmatpush.bf16.msra.mxu0 %v2541
        %2865 = vmatmul.bf16.gmra.mxu0 %v1672
        %v2866 = vpop.f32.mrf.mxu0
        %v2867 = vadd.f32 %v2854, %v2866
        %v2868 = vpop.f32.mrf.mxu0
        %2869 = vdwg.mxu0
        %2870 = vmatpush.bf16.msra.mxu0 %v2556
        %2871 = vmatpush.bf16.msra.mxu0 %v2555
        %2872 = vmatpush.bf16.msra.mxu0 %v2554
        %2873 = vmatpush.bf16.msra.mxu0 %v2553
        %2874 = vmatpush.bf16.msra.mxu0 %v2552
        %2875 = vmatpush.bf16.msra.mxu0 %v2551
        %2876 = vmatpush.bf16.msra.mxu0 %v2550
        %2877 = vmatpush.bf16.msra.mxu0 %v2549
        %2878 = vmatmul.bf16.gmra.mxu0 %v1673
        %v2879 = vpop.f32.mrf.mxu0
        %v2880 = vadd.f32 %v2867, %v2879
        %v2881 = vpop.f32.mrf.mxu0
        %2882 = vdwg.mxu0
        %2883 = vmatpush.bf16.msra.mxu0 %v2564
        %2884 = vmatpush.bf16.msra.mxu0 %v2563
        %2885 = vmatpush.bf16.msra.mxu0 %v2562
        %2886 = vmatpush.bf16.msra.mxu0 %v2561
        %2887 = vmatpush.bf16.msra.mxu0 %v2560
        %2888 = vmatpush.bf16.msra.mxu0 %v2559
        %2889 = vmatpush.bf16.msra.mxu0 %v2558
        %2890 = vmatpush.bf16.msra.mxu0 %v2557
        %2891 = vmatmul.bf16.gmra.mxu0 %v1674
        %v2892 = vpop.f32.mrf.mxu0
        %v2893 = vadd.f32 %v2880, %v2892
        %v2894 = vpop.f32.mrf.mxu0
        %2895 = vdwg.mxu0
        %2896 = vmatpush.bf16.msra.mxu0 %v2572
        %2897 = vmatpush.bf16.msra.mxu0 %v2571
        %2898 = vmatpush.bf16.msra.mxu0 %v2570
        %2899 = vmatpush.bf16.msra.mxu0 %v2569
        %2900 = vmatpush.bf16.msra.mxu0 %v2568
        %2901 = vmatpush.bf16.msra.mxu0 %v2567
        %2902 = vmatpush.bf16.msra.mxu0 %v2566
        %2903 = vmatpush.bf16.msra.mxu0 %v2565
        %2904 = vmatmul.bf16.gmra.mxu0 %v1675
        %v2905 = vpop.f32.mrf.mxu0
        %v2906 = vadd.f32 %v2893, %v2905
        %v2907 = vpop.f32.mrf.mxu0
        %2908 = vdwg.mxu0
        %v2909 = vadd.f32 %v1203, %v2906
        %v2910 = vsel %vm449, %v2909, 0.0
        %2911 = vadd.xlane.f32.xlu0 %v2910
        %v2912 = vpop.xlane.xlu0 %2911
        %v2913 = vmul.f32 %v2912, %v788
        %v2914 = vsub.f32 %v2909, %v2913
        %v2915 = vmul.f32 %v2914, %v2914
        %v2916 = vsel %vm449, %v2915, 0.0
        %2917 = vadd.xlane.f32.xlu0 %v2916
        %v2918 = vpop.xlane.xlu0 %2917
        %v2919 = vmul.f32 %v2918, %v788
        %v2920 = vadd.f32 %v2919, 1e-05
        %v2921 = vrsqrt.pop %v2920
        %v2922 = vmul.f32 %v2921, %v2920
        %v2923 = vmul.f32 %v2922, %v2921
        %v2924 = vmul.f32 0.5, %v2923
        %v2925 = vsub.f32 1.5, %v2924
        %v2926 = vmul.f32 %v2921, %v2925
        %vm2927 = vweird.f32 %v2920
        %vm2928 = vweird.f32 %v2921
        %vm2929 = vmor %vm2927, %vm2928
        %v2930 = vsel %vm2929, %v2921, %v2926
        %v2931 = vmul.f32 %v2914, %v2930
        %v2932 = vperm.slane %v443, 2
        %v2933 = vmul.f32 %v2931, %v2932
        %v2934 = vperm.slane %v443, 3
        %v2935 = vadd.f32 %v2933, %v2934
        %2936 = vst.msk [vmem:[#allocation3] sm:$0xff] %vm449, %v2935
        %p2937 = scmp.eq.s32.totalorder %s21, 1
        // Predicated region
        $region69: #{keystroke_transformer_forward.1} parent=55 // pred_check
          %p2938 = pneg %p2937
        $region70: #{keystroke_transformer_forward.1} parent=55 // pred_check_branch
          %2940 = sbr.rel (%p2938) target = $region72
        $region71: #{keystroke_transformer_forward.1} parent=55 // pred_region
          %v2941 = vsel %vm449, %v2935, 0.0
          %2942 = vadd.xlane.f32.xlu0 %v2941
          %v2943 = vpop.xlane.xlu0 %2942
          %v2944 = vmul.f32 %v2943, %v788
          %v2945 = vsub.f32 %v2935, %v2944
          %v2946 = vmul.f32 %v2945, %v2945
          %v2947 = vsel %vm449, %v2946, 0.0
          %2948 = vadd.xlane.f32.xlu0 %v2947
          %v2949 = vpop.xlane.xlu0 %2948
          %v2950 = vmul.f32 %v2949, %v788
          %v2951 = vadd.f32 %v2950, 1e-05
          %v2952 = vrsqrt.pop %v2951
          %v2953 = vmul.f32 %v2952, %v2951
          %v2954 = vmul.f32 %v2953, %v2952
          %v2955 = vmul.f32 0.5, %v2954
          %v2956 = vsub.f32 1.5, %v2955
          %v2957 = vmul.f32 %v2952, %v2956
          %vm2958 = vweird.f32 %v2951
          %vm2959 = vweird.f32 %v2952
          %vm2960 = vmor %vm2958, %vm2959
          %v2961 = vsel %vm2960, %v2952, %v2957
          %v2962 = vmul.f32 %v2945, %v2961
          %v2963 = vperm.slane %v397, 1
          %v2964 = vmul.f32 %v2962, %v2963
          %v2965 = vperm.slane %v397, 2
          %v2966 = vadd.f32 %v2964, %v2965
          %2967 = vst.msk [vmem:[#allocation4] sm:$0xff] %vm449, %v2966
        $region72: #{keystroke_transformer_forward.1} parent=55 // pred_fallthru
          _
        %p2968 = scmp.eq.s32.totalorder %s21, 7
        // Predicated region
        $region73: #{keystroke_transformer_forward.1} parent=55 // pred_check
          %p2969 = pneg %p2968
        $region74: #{keystroke_transformer_forward.1} parent=55 // pred_check_branch
          %2971 = sbr.rel (%p2969) target = $region76
        $region75: #{keystroke_transformer_forward.1} parent=55 // pred_region
          %v2972 = vsel %vm449, %v2935, 0.0
          %2973 = vadd.xlane.f32.xlu0 %v2972
          %v2974 = vpop.xlane.xlu0 %2973
          %v2975 = vmul.f32 %v2974, %v788
          %v2976 = vsub.f32 %v2935, %v2975
          %v2977 = vmul.f32 %v2976, %v2976
          %v2978 = vsel %vm449, %v2977, 0.0
          %2979 = vadd.xlane.f32.xlu0 %v2978
          %v2980 = vpop.xlane.xlu0 %2979
          %v2981 = vmul.f32 %v2980, %v788
          %v2982 = vadd.f32 %v2981, 1e-05
          %v2983 = vrsqrt.pop %v2982
          %v2984 = vmul.f32 %v2983, %v2982
          %v2985 = vmul.f32 %v2984, %v2983
          %v2986 = vmul.f32 0.5, %v2985
          %v2987 = vsub.f32 1.5, %v2986
          %v2988 = vmul.f32 %v2983, %v2987
          %vm2989 = vweird.f32 %v2982
          %vm2990 = vweird.f32 %v2983
          %vm2991 = vmor %vm2989, %vm2990
          %v2992 = vsel %vm2991, %v2983, %v2988
          %v2993 = vmul.f32 %v2976, %v2992
          %v2994 = vperm.slane %v397, 3
          %v2995 = vmul.f32 %v2993, %v2994
          %v2996 = vperm.slane %v397, 4
          %v2997 = vadd.f32 %v2995, %v2996
          %v2998 = vld [vmem:[%s3] sm:$0xff]
          %v2999 = vld [vmem:[%s3 + $0x8] sm:$0xff]
          %v3000 = vld [vmem:[%s3 + $0x10] sm:$0xff]
          %v3001 = vld [vmem:[%s3 + $0x18] sm:$0xff]
          %v3002 = vperm.slane %v397, 5
          %v3004 = vsel %vm449, %v2997, 0
          %3006 = vmatpush.msra.mxu0 0.0
          %3007 = vmatpush.msra.mxu0 0.0
          %3008 = vmatpush.msra.mxu0 0.0
          %3009 = vmatpush.msra.mxu0 0.0
          %3010 = vmatpush.msra.mxu0 0.0
          %3011 = vmatpush.msra.mxu0 0.0
          %3012 = vmatpush.msra.mxu0 0.0
          %3013 = vmatpush.msra.mxu0 0.0
          %3014 = vmatpush.msra.mxu0 0.0
          %3015 = vmatpush.msra.mxu0 0.0
          %3016 = vmatpush.msra.mxu0 0.0
          %3017 = vmatpush.msra.mxu0 0.0
          %3018 = vmatpush.msra.mxu0 %v3001
          %3019 = vmatpush.msra.mxu0 %v3000
          %3020 = vmatpush.msra.mxu0 %v2999
          %3021 = vmatpush.msra.mxu0 %v2998
          %3022 = vmatmul.f32.gmra.mxu0 %v3004
          %v3023 = vpop.f32.mrf.mxu0
          %v3024 = vadd.f32 %v3002, %v3023
          %3025 = vdwg.mxu0
          %vm3026 = vcmask 39936
          %3027 = vst.msk [vmem:[#allocation5] sm:$0xff] %vm3026, %v3024
        $region76: #{keystroke_transformer_forward.1} parent=55 // pred_fallthru
          _
        // Predicated region
        $region77: #{keystroke_transformer_forward.1} parent=55 // pred_check
          %p3028 = pneg %p248
        $region78: #{keystroke_transformer_forward.1} parent=55 // pred_check_branch
          %3030 = sbr.rel (%p3028) target = $region80
        $region79: #{keystroke_transformer_forward.1} parent=55 // pred_region
          %3032 = vsyncadd [#allocation6], 0
          %s3034 = sshll.u32 [#allocation5], 4
          %s3035 = int_to_ptr.vmem [resolvable:$true] %s3034
          %s3036 = sshll.u32 %s9, 4
          %s3037 = int_to_ptr.hbm [resolvable:$true] %s3036
          %3039 = dma.vmem_to_hbm [thread:$0]  %s3035, 128, %s3037, [#allocation6]
        $region80: #{keystroke_transformer_forward.1} parent=55 // pred_fallthru
          _
        // Predicated region
        $region81: #{keystroke_transformer_forward.1} parent=55 // pred_check
          %p3040 = pneg %p248
        $region82: #{keystroke_transformer_forward.1} parent=55 // pred_check_branch
          %3042 = sbr.rel (%p3040) target = $region84
        $region83: #{keystroke_transformer_forward.1} parent=55 // pred_region
          %3044 = dma.done [#allocation6], 128
        $region84: #{keystroke_transformer_forward.1} parent=55 // pred_fallthru
          _
      $region56: #{keystroke_transformer_forward.1} parent=5 // pred_fallthru
        _
      %p3045 = scmp.le.s32.totalorder 2, %s16
      // Predicated region
      $region85: #{keystroke_transformer_forward.1} parent=5 // pred_check
        %p3046 = pneg %p3045
      $region86: #{keystroke_transformer_forward.1} parent=5 // pred_check_branch
        %3048 = sbr.rel (%p3046) target = $region88
      $region87: #{keystroke_transformer_forward.1} parent=5 // pred_region
        %s3049 = ssub.s32 %s16, 2
      $region88: #{keystroke_transformer_forward.1} parent=5 // pred_fallthru
        _
    $region6: #{keystroke_transformer_forward.1} parent=1 // loop_footer
      %s20 = sadd.s32 1, %s16
    $region7: #{keystroke_transformer_forward.1} parent=1 // loop_footer_branch
      %15 = sbr.rel target = $region3
    $region8: #{keystroke_transformer_forward.1} parent=1 // loop_exit
      _
    %3050 = vsyncpa [#allocation6], 1
    %s3051 = scalar_lea.sflag [#allocation6], 1
    %3052 = vsyncpa %s3051, 1

</llo_original>
